<compile_context>
chip_gen: v5e
topology: v5e:2x2
jax: 0.10.0
libtpu: 0.0.40
codegen_flags: <defaults>
</compile_context>

<pallas_src>
import jax
import jax.numpy as jnp
from jax import lax
from jax.experimental import pallas as pl
from jax.experimental.pallas import tpu as pltpu

# ----- model hyper-parameters (small, consistent with the module) -----
N_NODES = 16
N_EDGES = 32
DIM_ENT_NODO = 8      # input node feature dim
DIM_ENT_ARCO = 4      # input edge feature dim
DIM_SAL_NODO = 16     # node hidden/output dim
DIM_SAL_ARCO = 8      # edge hidden dim
NODO_HIDDEN = 32      # nodoMLP hidden layer size
EPS = 1e-12           # F.normalize eps
BATCH = 16            # total graphs

# ----- batch packing (block-diagonal graphs per grid step) -----
GRAPHS_PER_BLOCK = 8
NN_BLK = GRAPHS_PER_BLOCK * N_NODES   # 128 packed nodes per block (one lane width)
NE_BLK = GRAPHS_PER_BLOCK * N_EDGES   # 256 packed edges per block
OUT_PAD = 128                         # lane-dense padded output width

# ----- packed parameter blob: sublane-stacked, 8-aligned rows, lane offset 0 -----
BLOB_COLS = 128
# (piece name, rows used, cols used)
PIECES = (
    ("wm0_x", DIM_ENT_NODO, DIM_SAL_NODO),   # conv0 message_lin, x_j part
    ("wm0_e", DIM_ENT_ARCO, DIM_SAL_NODO),   # conv0 message_lin, edge_attr part
    ("bm0",   1,            DIM_SAL_NODO),
    ("wa0_a", DIM_SAL_NODO, DIM_SAL_NODO),   # conv0 agg_lin, aggr part
    ("wa0_x", DIM_ENT_NODO, DIM_SAL_NODO),   # conv0 agg_lin, x part
    ("ba0",   1,            DIM_SAL_NODO),
    ("we0_i", DIM_SAL_NODO, DIM_SAL_ARCO),   # arcosMLP[0], x[edge_index[0]] part
    ("we0_j", DIM_SAL_NODO, DIM_SAL_ARCO),   # arcosMLP[0], x[edge_index[1]] part
    ("we0_e", DIM_ENT_ARCO, DIM_SAL_ARCO),   # arcosMLP[0], edge_attr part
    ("be0",   1,            DIM_SAL_ARCO),
    ("wm1_x", DIM_SAL_NODO, DIM_SAL_NODO),   # conv1 message_lin, x_j part
    ("wm1_e", DIM_SAL_ARCO, DIM_SAL_NODO),   # conv1 message_lin, edge_attr part
    ("bm1",   1,            DIM_SAL_NODO),
    ("wa1_a", DIM_SAL_NODO, DIM_SAL_NODO),   # conv1 agg_lin, aggr part
    ("wa1_x", DIM_SAL_NODO, DIM_SAL_NODO),   # conv1 agg_lin, x part
    ("ba1",   1,            DIM_SAL_NODO),
    ("w1",    DIM_SAL_NODO, NODO_HIDDEN),    # nodoMLP hidden
    ("b1",    1,            NODO_HIDDEN),
    ("w2",    NODO_HIDDEN,  OUT_PAD),        # nodoMLP out, zero-padded to 128 lanes
    ("b2",    1,            OUT_PAD),
)


def _build_piece_info():
    info, r = {}, 0
    for name, rows, cols in PIECES:
        info[name] = (r, rows, cols)
        r += ((rows + 7) // 8) * 8          # 8-aligned sublane offsets
    return info, r


PIECE_INFO, BLOB_ROWS = _build_piece_info()
assert BLOB_ROWS % 8 == 0


def pack_params(params):
    """Split the concat-form weights and pack them into one (BLOB_ROWS, 128) blob."""
    dsn, den = DIM_SAL_NODO, DIM_ENT_NODO
    pieces = {
        "wm0_x": params["wm0"][:den],  "wm0_e": params["wm0"][den:],  "bm0": params["bm0"],
        "wa0_a": params["wa0"][:dsn],  "wa0_x": params["wa0"][dsn:],  "ba0": params["ba0"],
        "we0_i": params["we0"][:dsn],  "we0_j": params["we0"][dsn:2 * dsn],
        "we0_e": params["we0"][2 * dsn:], "be0": params["be0"],
        "wm1_x": params["wm1"][:dsn],  "wm1_e": params["wm1"][dsn:],  "bm1": params["bm1"],
        "wa1_a": params["wa1"][:dsn],  "wa1_x": params["wa1"][dsn:],  "ba1": params["ba1"],
        "w1": params["w1"], "b1": params["b1"],
        "w2": params["w2"], "b2": params["b2"],   # packed into first 16 of 128 lanes
    }
    blob = jnp.zeros((BLOB_ROWS, BLOB_COLS), jnp.float32)
    for name, val in pieces.items():
        r, _, _ = PIECE_INFO[name]
        v = jnp.asarray(val, jnp.float32)
        blob = blob.at[r:r + v.shape[0], :v.shape[1]].set(v)
    return blob


def gnnstack_kernel(x_ref, ea_ref, gcat_ref, stgt_ref, w_ref, out_ref):
    f32 = jnp.float32
    x = x_ref[...]                                   # (NN_BLK, 8)  f32
    ea = ea_ref[...]                                 # (NE_BLK, 4)  f32
    # One-hot gathers stored bf16 (exact 0/1); cast once and keep math in f32.
    gsrc = gcat_ref[0:NE_BLK, :].astype(f32)         # (NE_BLK, NN_BLK)
    gtgt = gcat_ref[NE_BLK:2 * NE_BLK, :].astype(f32)
    stgt = stgt_ref[...]                             # (NN_BLK, NE_BLK) f32, 1/deg folded

    def p(name):                                     # 8-aligned sublane slice, lane 0
        r, rows, cols = PIECE_INFO[name]
        return w_ref[r:r + rows, 0:cols]

    def dot(a, b):
        return jnp.dot(a, b, preferred_element_type=f32)

    def relu(v):
        return jnp.maximum(v, 0.0)

    def l2norm(v):
        ss = jnp.sum(v * v, axis=-1, keepdims=True)
        return v * lax.rsqrt(jnp.maximum(ss, EPS * EPS))

    # ---- conv0 (EGraphSage) ----
    # message: relu(x_j @ Wx + ea @ We + b); projection before gather.
    m = relu(dot(gsrc, dot(x, p("wm0_x"))) + dot(ea, p("wm0_e")) + p("bm0"))    # (NE,16)
    aggr = dot(stgt, m)                                                          # (NN,16)
    x1 = l2norm(relu(dot(aggr, p("wa0_a")) + dot(x, p("wa0_x")) + p("ba0")))     # (NN,16)

    # ---- arcosMLP[0] edge update ----
    ea1 = relu(dot(gsrc, dot(x1, p("we0_i"))) + dot(gtgt, dot(x1, p("we0_j")))
               + dot(ea, p("we0_e")) + p("be0"))                                 # (NE,8)

    # ---- conv1 (EGraphSage) ----
    m = relu(dot(gsrc, dot(x1, p("wm1_x"))) + dot(ea1, p("wm1_e")) + p("bm1"))   # (NE,16)
    aggr = dot(stgt, m)
    x2 = l2norm(relu(dot(aggr, p("wa1_a")) + dot(x1, p("wa1_x")) + p("ba1")))    # (NN,16)

    # arcosMLP[1] skipped: its output never feeds the returned node embeddings.

    # ---- nodoMLP: Linear -> relu -> (dropout p=0) -> Linear -> identity ----
    h = relu(dot(x2, p("w1")) + p("b1"))                                         # (NN,32)
    # w2/b2 are zero-padded to 128 lanes -> full-width unmasked lane-dense store.
    out_ref[...] = dot(h, p("w2")) + p("b2")                                     # (NN,128)


def make_params(key):
    """Deterministic synthetic parameters. Weights stored as (in_dim, out_dim)."""
    layout = (
        ("wm0", DIM_ENT_NODO + DIM_ENT_ARCO, DIM_SAL_NODO),
        ("wa0", DIM_SAL_NODO + DIM_ENT_NODO, DIM_SAL_NODO),
        ("we0", 2 * DIM_SAL_NODO + DIM_ENT_ARCO, DIM_SAL_ARCO),
        ("wm1", DIM_SAL_NODO + DIM_SAL_ARCO, DIM_SAL_NODO),
        ("wa1", 2 * DIM_SAL_NODO, DIM_SAL_NODO),
        ("w1", DIM_SAL_NODO, NODO_HIDDEN),
        ("w2", NODO_HIDDEN, DIM_SAL_NODO),
    )

    def lin(k, din, dout, scale=0.3):
        kw, kb = jax.random.split(k)
        w = scale * jax.random.normal(kw, (din, dout), jnp.float32)
        b = scale * jax.random.normal(kb, (1, dout), jnp.float32)
        return w, b

    ks = jax.random.split(key, len(layout))
    params = {}
    for k, (name, din, dout) in zip(ks, layout):
        params[name], params["b" + name[1:]] = lin(k, din, dout)
    return params


def gnnstack_forward(x, edge_attr, edge_index, params):
    """x: (B,N,F_node), edge_attr: (B,E,F_edge), edge_index: (B,2,E) int32."""
    B = x.shape[0]
    assert B % GRAPHS_PER_BLOCK == 0
    n_blocks = B // GRAPHS_PER_BLOCK

    # --- block-diagonal packing (plain JAX glue) ---
    src = edge_index[:, 0, :].reshape(n_blocks, GRAPHS_PER_BLOCK, N_EDGES)
    tgt = edge_index[:, 1, :].reshape(n_blocks, GRAPHS_PER_BLOCK, N_EDGES)
    offs = (jnp.arange(GRAPHS_PER_BLOCK, dtype=jnp.int32) * N_NODES)[None, :, None]
    src_bd = (src + offs).reshape(n_blocks, NE_BLK)
    tgt_bd = (tgt + offs).reshape(n_blocks, NE_BLK)

    # One-hot gathers in bf16 (0/1 exact, halves DMA bytes); concatenated along
    # the edge/sublane axis so they travel as a single input.
    gsrc = jax.nn.one_hot(src_bd, NN_BLK, dtype=jnp.bfloat16)        # (nb, NE, NN)
    gtgt = jax.nn.one_hot(tgt_bd, NN_BLK, dtype=jnp.bfloat16)
    gcat = jnp.concatenate([gsrc, gtgt], axis=1)                     # (nb, 2*NE, NN)

    # Scatter-mean matrix in f32 (holds 1/deg; cross-graph blocks exactly zero).
    gtgt_f = jax.nn.one_hot(tgt_bd, NN_BLK, dtype=jnp.float32)
    deg = jnp.sum(gtgt_f, axis=1)                                    # (nb, NN)
    invdeg = 1.0 / jnp.maximum(deg, 1.0)
    stgt = jnp.swapaxes(gtgt_f, 1, 2) * invdeg[:, :, None]           # (nb, NN, NE)

    xb = x.reshape(n_blocks, NN_BLK, DIM_ENT_NODO)
    eab = edge_attr.reshape(n_blocks, NE_BLK, DIM_ENT_ARCO)
    wblob = pack_params(params)                                      # (BLOB_ROWS, 128)

    out = pl.pallas_call(
        gnnstack_kernel,
        out_shape=jax.ShapeDtypeStruct((n_blocks, NN_BLK, OUT_PAD), jnp.float32),
        grid=(n_blocks,),
        in_specs=[
            pl.BlockSpec((None, NN_BLK, DIM_ENT_NODO), lambda b: (b, 0, 0)),
            pl.BlockSpec((None, NE_BLK, DIM_ENT_ARCO), lambda b: (b, 0, 0)),
            pl.BlockSpec((None, 2 * NE_BLK, NN_BLK), lambda b: (b, 0, 0)),
            pl.BlockSpec((None, NN_BLK, NE_BLK), lambda b: (b, 0, 0)),
            pl.BlockSpec((BLOB_ROWS, BLOB_COLS), lambda b: (0, 0)),   # fetched once
        ],
        out_specs=pl.BlockSpec((None, NN_BLK, OUT_PAD), lambda b: (b, 0, 0)),
        compiler_params=pltpu.CompilerParams(
            dimension_semantics=("parallel",),          # 2 blocks -> both TCs on v7x
            vmem_limit_bytes=32 * 1024 * 1024),          # explicit (v5e default 16 MiB)
    )(xb, eab, gcat, stgt, wblob)

    # Drop the lane padding and restore (B, N, D).
    return out[:, :, :DIM_SAL_NODO].reshape(B, N_NODES, DIM_SAL_NODO)


def _reference_single(x, edge_attr, edge_index, params):
    """Pure-JAX reference mirroring the PyTorch forward for one graph."""
    p = params
    src, tgt = edge_index[0], edge_index[1]

    def conv(x, ea, wm, bm, wa, ba):
        m = jax.nn.relu(jnp.concatenate([x[src], ea], -1) @ wm + bm)
        summed = jax.ops.segment_sum(m, tgt, num_segments=N_NODES)
        cnt = jax.ops.segment_sum(jnp.ones((N_EDGES, 1)), tgt, num_segments=N_NODES)
        aggr = summed / jnp.maximum(cnt, 1.0)
        out = jax.nn.relu(jnp.concatenate([aggr, x], -1) @ wa + ba)
        n = jnp.linalg.norm(out, axis=-1, keepdims=True)
        return out / jnp.maximum(n, EPS)

    def edge_mlp(x, ea, we, be):
        return jax.nn.relu(jnp.concatenate([x[src], x[tgt], ea], -1) @ we + be)

    x = conv(x, edge_attr, p["wm0"], p["bm0"], p["wa0"], p["ba0"])
    edge_attr = edge_mlp(x, edge_attr, p["we0"], p["be0"])
    x = conv(x, edge_attr, p["wm1"], p["bm1"], p["wa1"], p["ba1"])
    h = jax.nn.relu(x @ p["w1"] + p["b1"])
    return h @ p["w2"] + p["b2"]


def gnnstack_reference(x, edge_attr, edge_index, params):
    return jnp.stack([
        _reference_single(x[g], edge_attr[g], edge_index[g], params)
        for g in range(x.shape[0])
    ])


if __name__ == "__main__":
    key = jax.random.PRNGKey(0)
    kx, ke, ki, kp = jax.random.split(key, 4)
    x = jax.random.normal(kx, (BATCH, N_NODES, DIM_ENT_NODO), jnp.float32)
    edge_attr = jax.random.normal(ke, (BATCH, N_EDGES, DIM_ENT_ARCO), jnp.float32)
    edge_index = jax.random.randint(ki, (BATCH, 2, N_EDGES), 0, N_NODES, jnp.int32)
    params = make_params(kp)

    fwd = jax.jit(gnnstack_forward)
    out = jax.block_until_ready(fwd(x, edge_attr, edge_index, params))

    ref = gnnstack_reference(x, edge_attr, edge_index, params)
    assert out.shape == (BATCH, N_NODES, DIM_SAL_NODO)
    assert jnp.allclose(out, ref, rtol=1e-4, atol=1e-4), (
        f"max abs err {float(jnp.max(jnp.abs(out - ref)))}")
    print("KERNEL_OK")
</pallas_src>

<mosaic_0001>
module attributes {stable_mosaic.version = 11 : i64} {
  func.func @gnnstack_kernel(%arg0: i32, %arg1: memref<1x128x8xf32, #tpu.memory_space<vmem>>, %arg2: memref<1x256x4xf32, #tpu.memory_space<vmem>>, %arg3: memref<1x512x128xbf16, #tpu.memory_space<vmem>>, %arg4: memref<1x128x256xf32, #tpu.memory_space<vmem>>, %arg5: memref<240x128xf32, #tpu.memory_space<vmem>>, %arg6: memref<1x128x128xf32, #tpu.memory_space<vmem>>) attributes {dimension_semantics = [#tpu.dimension_semantics<parallel>], iteration_bounds = array<i64: 2>, scalar_prefetch = 0 : i64, scratch_operands = 0 : i64, tpu.core_type = #tpu.core_type<tc>, window_params = [{transform_indices = @transform_0, window_bounds = array<i64: 1, 128, 8>}, {transform_indices = @transform_1, window_bounds = array<i64: 1, 256, 4>}, {transform_indices = @transform_2, window_bounds = array<i64: 1, 512, 128>}, {transform_indices = @transform_3, window_bounds = array<i64: 1, 128, 256>}, {pipeline_mode = #tpu.pipeline_mode<synchronous>, transform_indices = @transform_4, window_bounds = array<i64: 240, 128>}, {transform_indices = @transform_5, window_bounds = array<i64: 1, 128, 128>}]} {
    %c0 = arith.constant 0 : index
    %c0_0 = arith.constant 0 : index
    %c0_1 = arith.constant 0 : index
    %0 = vector.load %arg1[%c0, %c0_0, %c0_1] : memref<1x128x8xf32, #tpu.memory_space<vmem>>, vector<1x128x8xf32>
    %1 = vector.shape_cast %0 : vector<1x128x8xf32> to vector<128x8xf32>
    %c0_2 = arith.constant 0 : index
    %c0_3 = arith.constant 0 : index
    %c0_4 = arith.constant 0 : index
    %2 = vector.load %arg2[%c0_2, %c0_3, %c0_4] : memref<1x256x4xf32, #tpu.memory_space<vmem>>, vector<1x256x4xf32>
    %3 = vector.shape_cast %2 : vector<1x256x4xf32> to vector<256x4xf32>
    %c0_5 = arith.constant 0 : index
    %c0_6 = arith.constant 0 : index
    %c0_7 = arith.constant 0 : index
    %4 = vector.load %arg3[%c0_5, %c0_6, %c0_7] : memref<1x512x128xbf16, #tpu.memory_space<vmem>>, vector<1x256x128xbf16>
    %5 = vector.shape_cast %4 : vector<1x256x128xbf16> to vector<256x128xbf16>
    %6 = arith.extf %5 : vector<256x128xbf16> to vector<256x128xf32>
    %c0_8 = arith.constant 0 : index
    %c256 = arith.constant 256 : index
    %c0_9 = arith.constant 0 : index
    %7 = vector.load %arg3[%c0_8, %c256, %c0_9] : memref<1x512x128xbf16, #tpu.memory_space<vmem>>, vector<1x256x128xbf16>
    %8 = vector.shape_cast %7 : vector<1x256x128xbf16> to vector<256x128xbf16>
    %9 = arith.extf %8 : vector<256x128xbf16> to vector<256x128xf32>
    %c0_10 = arith.constant 0 : index
    %c0_11 = arith.constant 0 : index
    %c0_12 = arith.constant 0 : index
    %10 = vector.load %arg4[%c0_10, %c0_11, %c0_12] : memref<1x128x256xf32, #tpu.memory_space<vmem>>, vector<1x128x256xf32>
    %11 = vector.shape_cast %10 : vector<1x128x256xf32> to vector<128x256xf32>
    %c0_13 = arith.constant 0 : index
    %c0_14 = arith.constant 0 : index
    %12 = vector.load %arg5[%c0_13, %c0_14] : memref<240x128xf32, #tpu.memory_space<vmem>>, vector<8x16xf32>
    %cst = arith.constant dense<0.000000e+00> : vector<128x16xf32>
    %13 = tpu.matmul %1, %12, %cst {dimension_numbers = #tpu.dot_dimension_numbers<[1], [0], [0], [1], [0, 0, 1, 1], [], []>} : vector<128x8xf32>, vector<8x16xf32>, vector<128x16xf32> -> vector<128x16xf32>
    %cst_15 = arith.constant dense<0.000000e+00> : vector<256x16xf32>
    %14 = tpu.matmul %6, %13, %cst_15 {dimension_numbers = #tpu.dot_dimension_numbers<[1], [0], [0], [1], [0, 0, 1, 1], [], []>} : vector<256x128xf32>, vector<128x16xf32>, vector<256x16xf32> -> vector<256x16xf32>
    %c8 = arith.constant 8 : index
    %c0_16 = arith.constant 0 : index
    %15 = vector.load %arg5[%c8, %c0_16] : memref<240x128xf32, #tpu.memory_space<vmem>>, vector<4x16xf32>
    %cst_17 = arith.constant dense<0.000000e+00> : vector<256x16xf32>
    %16 = tpu.matmul %3, %15, %cst_17 {dimension_numbers = #tpu.dot_dimension_numbers<[1], [0], [0], [1], [0, 0, 1, 1], [], []>} : vector<256x4xf32>, vector<4x16xf32>, vector<256x16xf32> -> vector<256x16xf32>
    %17 = arith.addf %14, %16 : vector<256x16xf32>
    %c16 = arith.constant 16 : index
    %c0_18 = arith.constant 0 : index
    %18 = vector.load %arg5[%c16, %c0_18] : memref<240x128xf32, #tpu.memory_space<vmem>>, vector<1x16xf32>
    %19 = vector.broadcast %18 : vector<1x16xf32> to vector<256x16xf32>
    %20 = arith.addf %17, %19 : vector<256x16xf32>
    %cst_19 = arith.constant 0.000000e+00 : f32
    %21 = vector.broadcast %cst_19 : f32 to vector<256x16xf32>
    %22 = arith.maximumf %20, %21 : vector<256x16xf32>
    %cst_20 = arith.constant dense<0.000000e+00> : vector<128x16xf32>
    %23 = tpu.matmul %11, %22, %cst_20 {dimension_numbers = #tpu.dot_dimension_numbers<[1], [0], [0], [1], [0, 0, 1, 1], [], []>} : vector<128x256xf32>, vector<256x16xf32>, vector<128x16xf32> -> vector<128x16xf32>
    %c24 = arith.constant 24 : index
    %c0_21 = arith.constant 0 : index
    %24 = vector.load %arg5[%c24, %c0_21] : memref<240x128xf32, #tpu.memory_space<vmem>>, vector<16x16xf32>
    %cst_22 = arith.constant dense<0.000000e+00> : vector<128x16xf32>
    %25 = tpu.matmul %23, %24, %cst_22 {dimension_numbers = #tpu.dot_dimension_numbers<[1], [0], [0], [1], [0, 0, 1, 1], [], []>} : vector<128x16xf32>, vector<16x16xf32>, vector<128x16xf32> -> vector<128x16xf32>
    %c40 = arith.constant 40 : index
    %c0_23 = arith.constant 0 : index
    %26 = vector.load %arg5[%c40, %c0_23] : memref<240x128xf32, #tpu.memory_space<vmem>>, vector<8x16xf32>
    %cst_24 = arith.constant dense<0.000000e+00> : vector<128x16xf32>
    %27 = tpu.matmul %1, %26, %cst_24 {dimension_numbers = #tpu.dot_dimension_numbers<[1], [0], [0], [1], [0, 0, 1, 1], [], []>} : vector<128x8xf32>, vector<8x16xf32>, vector<128x16xf32> -> vector<128x16xf32>
    %28 = arith.addf %25, %27 : vector<128x16xf32>
    %c48 = arith.constant 48 : index
    %c0_25 = arith.constant 0 : index
    %29 = vector.load %arg5[%c48, %c0_25] : memref<240x128xf32, #tpu.memory_space<vmem>>, vector<1x16xf32>
    %30 = vector.broadcast %29 : vector<1x16xf32> to vector<128x16xf32>
    %31 = arith.addf %28, %30 : vector<128x16xf32>
    %cst_26 = arith.constant 0.000000e+00 : f32
    %32 = vector.broadcast %cst_26 : f32 to vector<128x16xf32>
    %33 = arith.maximumf %31, %32 : vector<128x16xf32>
    %34 = arith.mulf %33, %33 : vector<128x16xf32>
    %cst_27 = arith.constant dense<0.000000e+00> : vector<128xf32>
    %35 = vector.multi_reduction <add>, %34, %cst_27 [1] : vector<128x16xf32> to vector<128xf32>
    %36 = vector.shape_cast %35 : vector<128xf32> to vector<128x1xf32>
    %cst_28 = arith.constant 1.000000e-24 : f32
    %37 = vector.broadcast %cst_28 : f32 to vector<128x1xf32>
    %38 = arith.maximumf %36, %37 : vector<128x1xf32>
    %39 = math.rsqrt %38 : vector<128x1xf32>
    %40 = vector.broadcast %39 : vector<128x1xf32> to vector<128x16xf32>
    %41 = arith.mulf %33, %40 : vector<128x16xf32>
    %c56 = arith.constant 56 : index
    %c0_29 = arith.constant 0 : index
    %42 = vector.load %arg5[%c56, %c0_29] : memref<240x128xf32, #tpu.memory_space<vmem>>, vector<16x8xf32>
    %cst_30 = arith.constant dense<0.000000e+00> : vector<128x8xf32>
    %43 = tpu.matmul %41, %42, %cst_30 {dimension_numbers = #tpu.dot_dimension_numbers<[1], [0], [0], [1], [0, 0, 1, 1], [], []>} : vector<128x16xf32>, vector<16x8xf32>, vector<128x8xf32> -> vector<128x8xf32>
    %cst_31 = arith.constant dense<0.000000e+00> : vector<256x8xf32>
    %44 = tpu.matmul %6, %43, %cst_31 {dimension_numbers = #tpu.dot_dimension_numbers<[1], [0], [0], [1], [0, 0, 1, 1], [], []>} : vector<256x128xf32>, vector<128x8xf32>, vector<256x8xf32> -> vector<256x8xf32>
    %c72 = arith.constant 72 : index
    %c0_32 = arith.constant 0 : index
    %45 = vector.load %arg5[%c72, %c0_32] : memref<240x128xf32, #tpu.memory_space<vmem>>, vector<16x8xf32>
    %cst_33 = arith.constant dense<0.000000e+00> : vector<128x8xf32>
    %46 = tpu.matmul %41, %45, %cst_33 {dimension_numbers = #tpu.dot_dimension_numbers<[1], [0], [0], [1], [0, 0, 1, 1], [], []>} : vector<128x16xf32>, vector<16x8xf32>, vector<128x8xf32> -> vector<128x8xf32>
    %cst_34 = arith.constant dense<0.000000e+00> : vector<256x8xf32>
    %47 = tpu.matmul %9, %46, %cst_34 {dimension_numbers = #tpu.dot_dimension_numbers<[1], [0], [0], [1], [0, 0, 1, 1], [], []>} : vector<256x128xf32>, vector<128x8xf32>, vector<256x8xf32> -> vector<256x8xf32>
    %48 = arith.addf %44, %47 : vector<256x8xf32>
    %c88 = arith.constant 88 : index
    %c0_35 = arith.constant 0 : index
    %49 = vector.load %arg5[%c88, %c0_35] : memref<240x128xf32, #tpu.memory_space<vmem>>, vector<4x8xf32>
    %cst_36 = arith.constant dense<0.000000e+00> : vector<256x8xf32>
    %50 = tpu.matmul %3, %49, %cst_36 {dimension_numbers = #tpu.dot_dimension_numbers<[1], [0], [0], [1], [0, 0, 1, 1], [], []>} : vector<256x4xf32>, vector<4x8xf32>, vector<256x8xf32> -> vector<256x8xf32>
    %51 = arith.addf %48, %50 : vector<256x8xf32>
    %c96 = arith.constant 96 : index
    %c0_37 = arith.constant 0 : index
    %52 = vector.load %arg5[%c96, %c0_37] : memref<240x128xf32, #tpu.memory_space<vmem>>, vector<1x8xf32>
    %53 = vector.broadcast %52 : vector<1x8xf32> to vector<256x8xf32>
    %54 = arith.addf %51, %53 : vector<256x8xf32>
    %cst_38 = arith.constant 0.000000e+00 : f32
    %55 = vector.broadcast %cst_38 : f32 to vector<256x8xf32>
    %56 = arith.maximumf %54, %55 : vector<256x8xf32>
    %c104 = arith.constant 104 : index
    %c0_39 = arith.constant 0 : index
    %57 = vector.load %arg5[%c104, %c0_39] : memref<240x128xf32, #tpu.memory_space<vmem>>, vector<16x16xf32>
    %cst_40 = arith.constant dense<0.000000e+00> : vector<128x16xf32>
    %58 = tpu.matmul %41, %57, %cst_40 {dimension_numbers = #tpu.dot_dimension_numbers<[1], [0], [0], [1], [0, 0, 1, 1], [], []>} : vector<128x16xf32>, vector<16x16xf32>, vector<128x16xf32> -> vector<128x16xf32>
    %cst_41 = arith.constant dense<0.000000e+00> : vector<256x16xf32>
    %59 = tpu.matmul %6, %58, %cst_41 {dimension_numbers = #tpu.dot_dimension_numbers<[1], [0], [0], [1], [0, 0, 1, 1], [], []>} : vector<256x128xf32>, vector<128x16xf32>, vector<256x16xf32> -> vector<256x16xf32>
    %c120 = arith.constant 120 : index
    %c0_42 = arith.constant 0 : index
    %60 = vector.load %arg5[%c120, %c0_42] : memref<240x128xf32, #tpu.memory_space<vmem>>, vector<8x16xf32>
    %cst_43 = arith.constant dense<0.000000e+00> : vector<256x16xf32>
    %61 = tpu.matmul %56, %60, %cst_43 {dimension_numbers = #tpu.dot_dimension_numbers<[1], [0], [0], [1], [0, 0, 1, 1], [], []>} : vector<256x8xf32>, vector<8x16xf32>, vector<256x16xf32> -> vector<256x16xf32>
    %62 = arith.addf %59, %61 : vector<256x16xf32>
    %c128 = arith.constant 128 : index
    %c0_44 = arith.constant 0 : index
    %63 = vector.load %arg5[%c128, %c0_44] : memref<240x128xf32, #tpu.memory_space<vmem>>, vector<1x16xf32>
    %64 = vector.broadcast %63 : vector<1x16xf32> to vector<256x16xf32>
    %65 = arith.addf %62, %64 : vector<256x16xf32>
    %cst_45 = arith.constant 0.000000e+00 : f32
    %66 = vector.broadcast %cst_45 : f32 to vector<256x16xf32>
    %67 = arith.maximumf %65, %66 : vector<256x16xf32>
    %cst_46 = arith.constant dense<0.000000e+00> : vector<128x16xf32>
    %68 = tpu.matmul %11, %67, %cst_46 {dimension_numbers = #tpu.dot_dimension_numbers<[1], [0], [0], [1], [0, 0, 1, 1], [], []>} : vector<128x256xf32>, vector<256x16xf32>, vector<128x16xf32> -> vector<128x16xf32>
    %c136 = arith.constant 136 : index
    %c0_47 = arith.constant 0 : index
    %69 = vector.load %arg5[%c136, %c0_47] : memref<240x128xf32, #tpu.memory_space<vmem>>, vector<16x16xf32>
    %cst_48 = arith.constant dense<0.000000e+00> : vector<128x16xf32>
    %70 = tpu.matmul %68, %69, %cst_48 {dimension_numbers = #tpu.dot_dimension_numbers<[1], [0], [0], [1], [0, 0, 1, 1], [], []>} : vector<128x16xf32>, vector<16x16xf32>, vector<128x16xf32> -> vector<128x16xf32>
    %c152 = arith.constant 152 : index
    %c0_49 = arith.constant 0 : index
    %71 = vector.load %arg5[%c152, %c0_49] : memref<240x128xf32, #tpu.memory_space<vmem>>, vector<16x16xf32>
    %cst_50 = arith.constant dense<0.000000e+00> : vector<128x16xf32>
    %72 = tpu.matmul %41, %71, %cst_50 {dimension_numbers = #tpu.dot_dimension_numbers<[1], [0], [0], [1], [0, 0, 1, 1], [], []>} : vector<128x16xf32>, vector<16x16xf32>, vector<128x16xf32> -> vector<128x16xf32>
    %73 = arith.addf %70, %72 : vector<128x16xf32>
    %c168 = arith.constant 168 : index
    %c0_51 = arith.constant 0 : index
    %74 = vector.load %arg5[%c168, %c0_51] : memref<240x128xf32, #tpu.memory_space<vmem>>, vector<1x16xf32>
    %75 = vector.broadcast %74 : vector<1x16xf32> to vector<128x16xf32>
    %76 = arith.addf %73, %75 : vector<128x16xf32>
    %cst_52 = arith.constant 0.000000e+00 : f32
    %77 = vector.broadcast %cst_52 : f32 to vector<128x16xf32>
    %78 = arith.maximumf %76, %77 : vector<128x16xf32>
    %79 = arith.mulf %78, %78 : vector<128x16xf32>
    %cst_53 = arith.constant dense<0.000000e+00> : vector<128xf32>
    %80 = vector.multi_reduction <add>, %79, %cst_53 [1] : vector<128x16xf32> to vector<128xf32>
    %81 = vector.shape_cast %80 : vector<128xf32> to vector<128x1xf32>
    %cst_54 = arith.constant 1.000000e-24 : f32
    %82 = vector.broadcast %cst_54 : f32 to vector<128x1xf32>
    %83 = arith.maximumf %81, %82 : vector<128x1xf32>
    %84 = math.rsqrt %83 : vector<128x1xf32>
    %85 = vector.broadcast %84 : vector<128x1xf32> to vector<128x16xf32>
    %86 = arith.mulf %78, %85 : vector<128x16xf32>
    %c176 = arith.constant 176 : index
    %c0_55 = arith.constant 0 : index
    %87 = vector.load %arg5[%c176, %c0_55] : memref<240x128xf32, #tpu.memory_space<vmem>>, vector<16x32xf32>
    %cst_56 = arith.constant dense<0.000000e+00> : vector<128x32xf32>
    %88 = tpu.matmul %86, %87, %cst_56 {dimension_numbers = #tpu.dot_dimension_numbers<[1], [0], [0], [1], [0, 0, 1, 1], [], []>} : vector<128x16xf32>, vector<16x32xf32>, vector<128x32xf32> -> vector<128x32xf32>
    %c192 = arith.constant 192 : index
    %c0_57 = arith.constant 0 : index
    %89 = vector.load %arg5[%c192, %c0_57] : memref<240x128xf32, #tpu.memory_space<vmem>>, vector<1x32xf32>
    %90 = vector.broadcast %89 : vector<1x32xf32> to vector<128x32xf32>
    %91 = arith.addf %88, %90 : vector<128x32xf32>
    %cst_58 = arith.constant 0.000000e+00 : f32
    %92 = vector.broadcast %cst_58 : f32 to vector<128x32xf32>
    %93 = arith.maximumf %91, %92 : vector<128x32xf32>
    %c200 = arith.constant 200 : index
    %c0_59 = arith.constant 0 : index
    %94 = vector.load %arg5[%c200, %c0_59] : memref<240x128xf32, #tpu.memory_space<vmem>>, vector<32x128xf32>
    %cst_60 = arith.constant dense<0.000000e+00> : vector<128x128xf32>
    %95 = tpu.matmul %93, %94, %cst_60 {dimension_numbers = #tpu.dot_dimension_numbers<[1], [0], [0], [1], [0, 0, 1, 1], [], []>} : vector<128x32xf32>, vector<32x128xf32>, vector<128x128xf32> -> vector<128x128xf32>
    %c232 = arith.constant 232 : index
    %c0_61 = arith.constant 0 : index
    %96 = vector.load %arg5[%c232, %c0_61] : memref<240x128xf32, #tpu.memory_space<vmem>>, vector<1x128xf32>
    %97 = vector.broadcast %96 : vector<1x128xf32> to vector<128x128xf32>
    %98 = arith.addf %95, %97 : vector<128x128xf32>
    %c0_62 = arith.constant 0 : index
    %c0_63 = arith.constant 0 : index
    %c0_64 = arith.constant 0 : index
    %99 = vector.load %arg6[%c0_62, %c0_63, %c0_64] : memref<1x128x128xf32, #tpu.memory_space<vmem>>, vector<1x128x128xf32>
    %100 = vector.shape_cast %99 : vector<1x128x128xf32> to vector<128x128xf32>
    %101 = vector.shape_cast %98 : vector<128x128xf32> to vector<1x128x128xf32>
    tpu.vector_store %arg6[%c0_62, %c0_63, %c0_64], %101 {strides = array<i32>} : memref<1x128x128xf32, #tpu.memory_space<vmem>>, vector<1x128x128xf32>,
    return
  }
  func.func @transform_0(%arg0: i32) -> (i32, i32, i32) {
    %c0_i32 = arith.constant 0 : i32
    %c0_i32_0 = arith.constant 0 : i32
    %c0_i32_1 = arith.constant 0 : i32
    return %arg0, %c0_i32, %c0_i32_0 : i32, i32, i32
  }
  func.func @transform_1(%arg0: i32) -> (i32, i32, i32) {
    %c0_i32 = arith.constant 0 : i32
    %c0_i32_0 = arith.constant 0 : i32
    %c0_i32_1 = arith.constant 0 : i32
    return %arg0, %c0_i32, %c0_i32_0 : i32, i32, i32
  }
  func.func @transform_2(%arg0: i32) -> (i32, i32, i32) {
    %c0_i32 = arith.constant 0 : i32
    %c0_i32_0 = arith.constant 0 : i32
    %c0_i32_1 = arith.constant 0 : i32
    return %arg0, %c0_i32, %c0_i32_0 : i32, i32, i32
  }
  func.func @transform_3(%arg0: i32) -> (i32, i32, i32) {
    %c0_i32 = arith.constant 0 : i32
    %c0_i32_0 = arith.constant 0 : i32
    %c0_i32_1 = arith.constant 0 : i32
    return %arg0, %c0_i32, %c0_i32_0 : i32, i32, i32
  }
  func.func @transform_4(%arg0: i32) -> (i32, i32) {
    %c0_i32 = arith.constant 0 : i32
    %c0_i32_0 = arith.constant 0 : i32
    %c0_i32_1 = arith.constant 0 : i32
    return %c0_i32, %c0_i32_0 : i32, i32
  }
  func.func @transform_5(%arg0: i32) -> (i32, i32, i32) {
    %c0_i32 = arith.constant 0 : i32
    %c0_i32_0 = arith.constant 0 : i32
    %c0_i32_1 = arith.constant 0 : i32
    return %arg0, %c0_i32, %c0_i32_0 : i32, i32, i32
  }
}

</mosaic_0001>

<llo_original>
// kernel: gnnstack_forward.1
$region0: #{gnnstack_forward.1}
  #allocation0 [shape = 'u32[]', space=smem, size = 0x4, offset = 0x4, fixed_abs, tag = 'smem constant byte address 0x4 - core index']
  #allocation1 [shape = 'u32[72,128]{1,0:T(1,128)}', space=vmem, size = 0x9000, scoped, tag = 'internal scratch']
  %s0 = inlined_call_operand.vmem [shape: f32[2,128,8], index: 0, kind: input, shape index: {}]
  %s1 = inlined_call_operand.vmem [shape: f32[2,256,4], index: 1, kind: input, shape index: {}]
  %s2 = inlined_call_operand.vmem [shape: bf16[2,512,128], index: 2, kind: input, shape index: {}]
  %s3 = inlined_call_operand.vmem [shape: f32[2,128,256], index: 3, kind: input, shape index: {}]
  %s4 = inlined_call_operand.vmem [shape: f32[240,128], index: 4, kind: input, shape index: {}]
  %s5 = inlined_call_operand.hbm [shape: f32[2,128,128], index: 5, kind: output, shape index: {}]
  %s6 = sld [smem:[#allocation0]]
  $region53: #{gnnstack_forward.1} parent=0
    _
  %s8 = ssub.s32 1, %s6
  %s9 = scalar_select 0, %s8, %s6
  $region1: #{gnnstack_forward.1} parent=0
    #allocation2 [shape = 'u8[131072]{0}', space=vmem, size = 0x20000, scoped, tag = 'output window, operand 0']
    #allocation3 [shape = 's32[2]{0}', space=sflag, size = 0x8, scoped, tag = 'scoped memory for gnnstack_forward.1']
    %10 = vsyncpa [#allocation3], 0
    %s11 = scalar_lea.sflag [#allocation3], 1
    %12 = vsyncpa %s11, 0
    loop: start=0, step=1, limit=4
    $region2: #{gnnstack_forward.1} parent=1 // loop_pre_header
      _
    $region3: #{gnnstack_forward.1} parent=1 // loop_header
      %s14 = sphi 0, %s18
      %p15 = scmp.ge.s32.totalorder %s14, 4
      %s24 = sphi 0, %s26
      %s27 = sphi 0, %s24
      %s28 = sphi 0, %s27
      %s44 = sphi 0, %s28
      %s50 = sphi 0, %s52
      %s53 = sphi 0, %s50
      %s54 = sphi 0, %s53
      %s70 = sphi 0, %s54
      %s76 = sphi 0, %s78
      %s79 = sphi 0, %s76
      %s80 = sphi 0, %s79
      %s96 = sphi 0, %s80
      %s102 = sphi 0, %s104
      %s105 = sphi 0, %s102
      %s106 = sphi 0, %s105
      %s122 = sphi 0, %s106
      %s126 = sphi 0, %s126
      %s128 = sphi 0, %s126
      %s129 = sphi 0, %s128
      %s143 = sphi 0, %s129
      %s149 = sphi 0, %s151
      %s152 = sphi 0, %s149
      %s153 = sphi 0, %s152
      %s169 = sphi 0, %s153
    $region4: #{gnnstack_forward.1} parent=1 // loop_header_branch
      %17 = sbr.rel (%p15) target = $region8
    $region5: #{gnnstack_forward.1} parent=1 // loop_body
      %s19 = ssub.s32 %s14, 1
      %s20 = ssub.s32 %s14, 2
      %s21 = sadd.s32 %s14, 1
      %s22 = ssub.s32 %s14, %s21
      %p23 = scmp.eq.s32.totalorder %s22, 0
      %s25 = sadd.s32 %s24, 1
      %s26 = scalar_select %p23, %s24, %s25
      %p29 = pneg %p23
      %p30 = scmp.eq.s32.totalorder %s14, 1
      %p31 = por %p29, %p30
      %p32 = scmp.ne.s32.totalorder %s24, %s27
      %p33 = scmp.eq.s32.totalorder %s14, 0
      %p34 = por %p32, %p33
      %p35 = scmp.ne.s32.totalorder %s24, %s27
      %p36 = scmp.eq.s32.totalorder %s19, 1
      %p37 = por %p35, %p36
      %p38 = scmp.ne.s32.totalorder %s27, %s28
      %p39 = scmp.eq.s32.totalorder %s19, 0
      %p40 = por %p38, %p39
      %p41 = scmp.ne.s32.totalorder %s27, %s28
      %p42 = scmp.eq.s32.totalorder %s20, 1
      %p43 = por %p41, %p42
      %p45 = scmp.ne.s32.totalorder %s28, %s44
      %p46 = scmp.eq.s32.totalorder %s20, 0
      %p47 = por %p45, %p46
      %s48 = ssub.s32 %s14, %s21
      %p49 = scmp.eq.s32.totalorder %s48, 0
      %s51 = sadd.s32 %s50, 1
      %s52 = scalar_select %p49, %s50, %s51
      %p55 = pneg %p49
      %p56 = scmp.eq.s32.totalorder %s14, 1
      %p57 = por %p55, %p56
      %p58 = scmp.ne.s32.totalorder %s50, %s53
      %p59 = scmp.eq.s32.totalorder %s14, 0
      %p60 = por %p58, %p59
      %p61 = scmp.ne.s32.totalorder %s50, %s53
      %p62 = scmp.eq.s32.totalorder %s19, 1
      %p63 = por %p61, %p62
      %p64 = scmp.ne.s32.totalorder %s53, %s54
      %p65 = scmp.eq.s32.totalorder %s19, 0
      %p66 = por %p64, %p65
      %p67 = scmp.ne.s32.totalorder %s53, %s54
      %p68 = scmp.eq.s32.totalorder %s20, 1
      %p69 = por %p67, %p68
      %p71 = scmp.ne.s32.totalorder %s54, %s70
      %p72 = scmp.eq.s32.totalorder %s20, 0
      %p73 = por %p71, %p72
      %s74 = ssub.s32 %s14, %s21
      %p75 = scmp.eq.s32.totalorder %s74, 0
      %s77 = sadd.s32 %s76, 1
      %s78 = scalar_select %p75, %s76, %s77
      %p81 = pneg %p75
      %p82 = scmp.eq.s32.totalorder %s14, 1
      %p83 = por %p81, %p82
      %p84 = scmp.ne.s32.totalorder %s76, %s79
      %p85 = scmp.eq.s32.totalorder %s14, 0
      %p86 = por %p84, %p85
      %p87 = scmp.ne.s32.totalorder %s76, %s79
      %p88 = scmp.eq.s32.totalorder %s19, 1
      %p89 = por %p87, %p88
      %p90 = scmp.ne.s32.totalorder %s79, %s80
      %p91 = scmp.eq.s32.totalorder %s19, 0
      %p92 = por %p90, %p91
      %p93 = scmp.ne.s32.totalorder %s79, %s80
      %p94 = scmp.eq.s32.totalorder %s20, 1
      %p95 = por %p93, %p94
      %p97 = scmp.ne.s32.totalorder %s80, %s96
      %p98 = scmp.eq.s32.totalorder %s20, 0
      %p99 = por %p97, %p98
      %s100 = ssub.s32 %s14, %s21
      %p101 = scmp.eq.s32.totalorder %s100, 0
      %s103 = sadd.s32 %s102, 1
      %s104 = scalar_select %p101, %s102, %s103
      %p107 = pneg %p101
      %p108 = scmp.eq.s32.totalorder %s14, 1
      %p109 = por %p107, %p108
      %p110 = scmp.ne.s32.totalorder %s102, %s105
      %p111 = scmp.eq.s32.totalorder %s14, 0
      %p112 = por %p110, %p111
      %p113 = scmp.ne.s32.totalorder %s102, %s105
      %p114 = scmp.eq.s32.totalorder %s19, 1
      %p115 = por %p113, %p114
      %p116 = scmp.ne.s32.totalorder %s105, %s106
      %p117 = scmp.eq.s32.totalorder %s19, 0
      %p118 = por %p116, %p117
      %p119 = scmp.ne.s32.totalorder %s105, %s106
      %p120 = scmp.eq.s32.totalorder %s20, 1
      %p121 = por %p119, %p120
      %p123 = scmp.ne.s32.totalorder %s106, %s122
      %p124 = scmp.eq.s32.totalorder %s20, 0
      %p125 = por %p123, %p124
      %s127 = sadd.s32 %s126, 1
      %p130 = scmp.eq.s32.totalorder %s14, 1
      %p131 = scmp.ne.s32.totalorder %s126, %s128
      %p132 = scmp.eq.s32.totalorder %s14, 0
      %p133 = por %p131, %p132
      %p134 = scmp.ne.s32.totalorder %s126, %s128
      %p135 = scmp.eq.s32.totalorder %s19, 1
      %p136 = por %p134, %p135
      %p137 = scmp.ne.s32.totalorder %s128, %s129
      %p138 = scmp.eq.s32.totalorder %s19, 0
      %p139 = por %p137, %p138
      %p140 = scmp.ne.s32.totalorder %s128, %s129
      %p141 = scmp.eq.s32.totalorder %s20, 1
      %p142 = por %p140, %p141
      %p144 = scmp.ne.s32.totalorder %s129, %s143
      %p145 = scmp.eq.s32.totalorder %s20, 0
      %p146 = por %p144, %p145
      %s147 = ssub.s32 %s14, %s21
      %p148 = scmp.eq.s32.totalorder %s147, 0
      %s150 = sadd.s32 %s149, 1
      %s151 = scalar_select %p148, %s149, %s150
      %p154 = pneg %p148
      %p155 = scmp.eq.s32.totalorder %s14, 1
      %p156 = por %p154, %p155
      %p157 = scmp.ne.s32.totalorder %s149, %s152
      %p158 = scmp.eq.s32.totalorder %s14, 0
      %p159 = por %p157, %p158
      %p160 = scmp.ne.s32.totalorder %s149, %s152
      %p161 = scmp.eq.s32.totalorder %s19, 1
      %p162 = por %p160, %p161
      %p163 = scmp.ne.s32.totalorder %s152, %s153
      %p164 = scmp.eq.s32.totalorder %s19, 0
      %p165 = por %p163, %p164
      %p166 = scmp.ne.s32.totalorder %s152, %s153
      %p167 = scmp.eq.s32.totalorder %s20, 1
      %p168 = por %p166, %p167
      %p170 = scmp.ne.s32.totalorder %s153, %s169
      %p171 = scmp.eq.s32.totalorder %s20, 0
      %p172 = por %p170, %p171
      %p173 = scmp.le.s32.totalorder 1, %s14
      %p174 = scmp.lt.s32.totalorder %s14, 3
      %p175 = pnand %p173, %p174
      %p176 = pneg %p175
      // Predicated region
      $region9: #{gnnstack_forward.1} parent=5 // pred_check
        _
      $region10: #{gnnstack_forward.1} parent=5 // pred_check_branch
        %178 = sbr.rel (%p175) target = $region12
      $region11: #{gnnstack_forward.1} parent=5 // pred_region
        %s179 = ssub.s32 %s14, 1
        // Predicated region
        $region13: #{gnnstack_forward.1} parent=11 // pred_check
          %p180 = pneg %p139
        $region14: #{gnnstack_forward.1} parent=11 // pred_check_branch
          %182 = sbr.rel (%p180) target = $region16
        $region15: #{gnnstack_forward.1} parent=11 // pred_region
          _
        $region16: #{gnnstack_forward.1} parent=11 // pred_fallthru
          _
      $region12: #{gnnstack_forward.1} parent=5 // pred_fallthru
        _
      %p183 = scmp.lt.s32.totalorder %s14, 2
      // Predicated region
      $region17: #{gnnstack_forward.1} parent=5 // pred_check
        %p184 = pneg %p183
      $region18: #{gnnstack_forward.1} parent=5 // pred_check_branch
        %186 = sbr.rel (%p184) target = $region20
      $region19: #{gnnstack_forward.1} parent=5 // pred_region
        // Predicated region
        $region21: #{gnnstack_forward.1} parent=19 // pred_check
          %p187 = pneg %p34
        $region22: #{gnnstack_forward.1} parent=19 // pred_check_branch
          %189 = sbr.rel (%p187) target = $region24
        $region23: #{gnnstack_forward.1} parent=19 // pred_region
          %p190 = scmp.lt.s32.totalorder %s14, 1
          %s191 = scalar_select %p190, %s14, 1
          %s192 = smul.addr %s191, 16
          %s193 = smul.addr %s192, 8
          %s194 = scalar_lea.vmem %s0, %s193
        $region24: #{gnnstack_forward.1} parent=19 // pred_fallthru
          _
        // Predicated region
        $region25: #{gnnstack_forward.1} parent=19 // pred_check
          %p195 = pneg %p60
        $region26: #{gnnstack_forward.1} parent=19 // pred_check_branch
          %197 = sbr.rel (%p195) target = $region28
        $region27: #{gnnstack_forward.1} parent=19 // pred_region
          %p198 = scmp.lt.s32.totalorder %s14, 1
          %s199 = scalar_select %p198, %s14, 1
          %s200 = smul.addr %s199, 32
          %s201 = smul.addr %s200, 8
          %s202 = scalar_lea.vmem %s1, %s201
        $region28: #{gnnstack_forward.1} parent=19 // pred_fallthru
          _
        // Predicated region
        $region29: #{gnnstack_forward.1} parent=19 // pred_check
          %p203 = pneg %p86
        $region30: #{gnnstack_forward.1} parent=19 // pred_check_branch
          %205 = sbr.rel (%p203) target = $region32
        $region31: #{gnnstack_forward.1} parent=19 // pred_region
          %p206 = scmp.lt.s32.totalorder %s14, 1
          %s207 = scalar_select %p206, %s14, 1
          %s208 = smul.addr %s207, 64
          %s209 = smul.addr %s208, 4
          %s210 = scalar_lea.vmem %s2, %s209
        $region32: #{gnnstack_forward.1} parent=19 // pred_fallthru
          _
        // Predicated region
        $region33: #{gnnstack_forward.1} parent=19 // pred_check
          %p211 = pneg %p112
        $region34: #{gnnstack_forward.1} parent=19 // pred_check_branch
          %213 = sbr.rel (%p211) target = $region36
        $region35: #{gnnstack_forward.1} parent=19 // pred_region
          %p214 = scmp.lt.s32.totalorder %s14, 1
          %s215 = scalar_select %p214, %s14, 1
          %s216 = smul.addr %s215, 32
          %s217 = smul.addr %s216, 8
          %s218 = scalar_lea.vmem %s3, %s217
        $region36: #{gnnstack_forward.1} parent=19 // pred_fallthru
          _
      $region20: #{gnnstack_forward.1} parent=5 // pred_fallthru
        _
      %p219 = scmp.le.s32.totalorder 1, %s14
      %p220 = scmp.lt.s32.totalorder %s14, 3
      %p221 = pnand %p219, %p220
      %p222 = pneg %p221
      // Predicated region
      $region37: #{gnnstack_forward.1} parent=5 // pred_check
        _
      $region38: #{gnnstack_forward.1} parent=5 // pred_check_branch
        %224 = sbr.rel (%p221) target = $region40
      $region39: #{gnnstack_forward.1} parent=5 // pred_region
        %s225 = ssub.s32 %s14, 1
        %p226 = scmp.lt.s32.totalorder %s19, 1
        %s227 = scalar_select %p226, %s19, 1
        %s228 = smul.addr %s227, 16
        %s229 = smul.addr %s228, 8
        %s230 = scalar_lea.vmem %s0, %s229
        %p231 = pneg %p40
        %p232 = pneg %p37
        %p233 = scmp.lt.s32.totalorder %s19, 1
        %s234 = scalar_select %p233, %s19, 1
        %s235 = smul.addr %s234, 32
        %s236 = smul.addr %s235, 8
        %s237 = scalar_lea.vmem %s1, %s236
        %p238 = pneg %p66
        %p239 = pneg %p63
        %p240 = scmp.lt.s32.totalorder %s19, 1
        %s241 = scalar_select %p240, %s19, 1
        %s242 = smul.addr %s241, 64
        %s243 = smul.addr %s242, 4
        %s244 = scalar_lea.vmem %s2, %s243
        %p245 = pneg %p92
        %p246 = pneg %p89
        %p247 = scmp.lt.s32.totalorder %s19, 1
        %s248 = scalar_select %p247, %s19, 1
        %s249 = smul.addr %s248, 32
        %s250 = smul.addr %s249, 8
        %s251 = scalar_lea.vmem %s3, %s250
        %p252 = pneg %p118
        %p253 = pneg %p115
        %p254 = pneg %p139
        %p255 = pneg %p136
        %p256 = pneg %p165
        %p257 = pneg %p162
        %s258 = sand.u32 %s152, 1
        %s259 = scalar_lea.sflag [#allocation3], %s258
        %s260 = sand.u32 %s152, 1
        %s261 = smul.addr %s260, 128
        %s262 = scalar_lea.vmem [#allocation2], %s261
        %p263 = scmp.lt.s32.totalorder %s19, 1
        %s264 = scalar_select %p263, %s19, 1
        %s265 = smul.addr %s264, 16
        %s266 = smul.addr %s265, 8
        %s267 = scalar_lea.vmem %s0, %s266
        %p268 = scmp.lt.s32.totalorder %s19, 1
        %s269 = scalar_select %p268, %s19, 1
        %s270 = smul.addr %s269, 32
        %s271 = smul.addr %s270, 8
        %s272 = scalar_lea.vmem %s1, %s271
        %p273 = scmp.lt.s32.totalorder %s19, 1
        %s274 = scalar_select %p273, %s19, 1
        %s275 = smul.addr %s274, 64
        %s276 = smul.addr %s275, 4
        %s277 = scalar_lea.vmem %s2, %s276
        %p278 = scmp.lt.s32.totalorder %s19, 1
        %s279 = scalar_select %p278, %s19, 1
        %s280 = smul.addr %s279, 32
        %s281 = smul.addr %s280, 8
        %s282 = scalar_lea.vmem %s3, %s281
        %v283 = vld [vmem:[%s267] sm:$0xff]
        %v284 = vld [vmem:[%s267 + $0x8] sm:$0xff]
        %v285 = vld [vmem:[%s267 + $0x10] sm:$0xff]
        %v286 = vld [vmem:[%s267 + $0x18] sm:$0xff]
        %v287 = vld [vmem:[%s267 + $0x20] sm:$0xff]
        %v288 = vld [vmem:[%s267 + $0x28] sm:$0xff]
        %v289 = vld [vmem:[%s267 + $0x30] sm:$0xff]
        %v290 = vld [vmem:[%s267 + $0x38] sm:$0xff]
        %v291 = vld [vmem:[%s267 + $0x40] sm:$0xff]
        %v292 = vld [vmem:[%s267 + $0x48] sm:$0xff]
        %v293 = vld [vmem:[%s267 + $0x50] sm:$0xff]
        %v294 = vld [vmem:[%s267 + $0x58] sm:$0xff]
        %v295 = vld [vmem:[%s267 + $0x60] sm:$0xff]
        %v296 = vld [vmem:[%s267 + $0x68] sm:$0xff]
        %v297 = vld [vmem:[%s267 + $0x70] sm:$0xff]
        %v298 = vld [vmem:[%s267 + $0x78] sm:$0xff]
        %v299 = vld [vmem:[%s272] sm:$0xff]
        %v300 = vld [vmem:[%s272 + $0x8] sm:$0xff]
        %v301 = vld [vmem:[%s272 + $0x10] sm:$0xff]
        %v302 = vld [vmem:[%s272 + $0x18] sm:$0xff]
        %v303 = vld [vmem:[%s272 + $0x20] sm:$0xff]
        %v304 = vld [vmem:[%s272 + $0x28] sm:$0xff]
        %v305 = vld [vmem:[%s272 + $0x30] sm:$0xff]
        %v306 = vld [vmem:[%s272 + $0x38] sm:$0xff]
        %v307 = vld [vmem:[%s272 + $0x40] sm:$0xff]
        %v308 = vld [vmem:[%s272 + $0x48] sm:$0xff]
        %v309 = vld [vmem:[%s272 + $0x50] sm:$0xff]
        %v310 = vld [vmem:[%s272 + $0x58] sm:$0xff]
        %v311 = vld [vmem:[%s272 + $0x60] sm:$0xff]
        %v312 = vld [vmem:[%s272 + $0x68] sm:$0xff]
        %v313 = vld [vmem:[%s272 + $0x70] sm:$0xff]
        %v314 = vld [vmem:[%s272 + $0x78] sm:$0xff]
        %v315 = vld [vmem:[%s272 + $0x80] sm:$0xff]
        %v316 = vld [vmem:[%s272 + $0x88] sm:$0xff]
        %v317 = vld [vmem:[%s272 + $0x90] sm:$0xff]
        %v318 = vld [vmem:[%s272 + $0x98] sm:$0xff]
        %v319 = vld [vmem:[%s272 + $0xa0] sm:$0xff]
        %v320 = vld [vmem:[%s272 + $0xa8] sm:$0xff]
        %v321 = vld [vmem:[%s272 + $0xb0] sm:$0xff]
        %v322 = vld [vmem:[%s272 + $0xb8] sm:$0xff]
        %v323 = vld [vmem:[%s272 + $0xc0] sm:$0xff]
        %v324 = vld [vmem:[%s272 + $0xc8] sm:$0xff]
        %v325 = vld [vmem:[%s272 + $0xd0] sm:$0xff]
        %v326 = vld [vmem:[%s272 + $0xd8] sm:$0xff]
        %v327 = vld [vmem:[%s272 + $0xe0] sm:$0xff]
        %v328 = vld [vmem:[%s272 + $0xe8] sm:$0xff]
        %v329 = vld [vmem:[%s272 + $0xf0] sm:$0xff]
        %v330 = vld [vmem:[%s272 + $0xf8] sm:$0xff]
        %v331 = vld [vmem:[%s277] sm:$0xf]
        %v332 = vld [vmem:[%s277 + $0x4] sm:$0xf]
        %v333 = vld [vmem:[%s277 + $0x8] sm:$0xf]
        %v334 = vld [vmem:[%s277 + $0xc] sm:$0xf]
        %v335 = vld [vmem:[%s277 + $0x10] sm:$0xf]
        %v336 = vld [vmem:[%s277 + $0x14] sm:$0xf]
        %v337 = vld [vmem:[%s277 + $0x18] sm:$0xf]
        %v338 = vld [vmem:[%s277 + $0x1c] sm:$0xf]
        %v339 = vld [vmem:[%s277 + $0x20] sm:$0xf]
        %v340 = vld [vmem:[%s277 + $0x24] sm:$0xf]
        %v341 = vld [vmem:[%s277 + $0x28] sm:$0xf]
        %v342 = vld [vmem:[%s277 + $0x2c] sm:$0xf]
        %v343 = vld [vmem:[%s277 + $0x30] sm:$0xf]
        %v344 = vld [vmem:[%s277 + $0x34] sm:$0xf]
        %v345 = vld [vmem:[%s277 + $0x38] sm:$0xf]
        %v346 = vld [vmem:[%s277 + $0x3c] sm:$0xf]
        %v347 = vld [vmem:[%s277 + $0x40] sm:$0xf]
        %v348 = vld [vmem:[%s277 + $0x44] sm:$0xf]
        %v349 = vld [vmem:[%s277 + $0x48] sm:$0xf]
        %v350 = vld [vmem:[%s277 + $0x4c] sm:$0xf]
        %v351 = vld [vmem:[%s277 + $0x50] sm:$0xf]
        %v352 = vld [vmem:[%s277 + $0x54] sm:$0xf]
        %v353 = vld [vmem:[%s277 + $0x58] sm:$0xf]
        %v354 = vld [vmem:[%s277 + $0x5c] sm:$0xf]
        %v355 = vld [vmem:[%s277 + $0x60] sm:$0xf]
        %v356 = vld [vmem:[%s277 + $0x64] sm:$0xf]
        %v357 = vld [vmem:[%s277 + $0x68] sm:$0xf]
        %v358 = vld [vmem:[%s277 + $0x6c] sm:$0xf]
        %v359 = vld [vmem:[%s277 + $0x70] sm:$0xf]
        %v360 = vld [vmem:[%s277 + $0x74] sm:$0xf]
        %v361 = vld [vmem:[%s277 + $0x78] sm:$0xf]
        %v362 = vld [vmem:[%s277 + $0x7c] sm:$0xf]
        %v363 = vunpack.c.l.bf16 %v331
        %v364 = vunpack.c.l.bf16 %v332
        %v365 = vunpack.c.l.bf16 %v333
        %v366 = vunpack.c.l.bf16 %v334
        %v367 = vunpack.c.l.bf16 %v335
        %v368 = vunpack.c.l.bf16 %v336
        %v369 = vunpack.c.l.bf16 %v337
        %v370 = vunpack.c.l.bf16 %v338
        %v371 = vunpack.c.l.bf16 %v339
        %v372 = vunpack.c.l.bf16 %v340
        %v373 = vunpack.c.l.bf16 %v341
        %v374 = vunpack.c.l.bf16 %v342
        %v375 = vunpack.c.l.bf16 %v343
        %v376 = vunpack.c.l.bf16 %v344
        %v377 = vunpack.c.l.bf16 %v345
        %v378 = vunpack.c.l.bf16 %v346
        %v379 = vunpack.c.l.bf16 %v347
        %v380 = vunpack.c.l.bf16 %v348
        %v381 = vunpack.c.l.bf16 %v349
        %v382 = vunpack.c.l.bf16 %v350
        %v383 = vunpack.c.l.bf16 %v351
        %v384 = vunpack.c.l.bf16 %v352
        %v385 = vunpack.c.l.bf16 %v353
        %v386 = vunpack.c.l.bf16 %v354
        %v387 = vunpack.c.l.bf16 %v355
        %v388 = vunpack.c.l.bf16 %v356
        %v389 = vunpack.c.l.bf16 %v357
        %v390 = vunpack.c.l.bf16 %v358
        %v391 = vunpack.c.l.bf16 %v359
        %v392 = vunpack.c.l.bf16 %v360
        %v393 = vunpack.c.l.bf16 %v361
        %v394 = vunpack.c.l.bf16 %v362
        %v395 = vld [vmem:[%s277 + $0x80] sm:$0xf]
        %v396 = vld [vmem:[%s277 + $0x84] sm:$0xf]
        %v397 = vld [vmem:[%s277 + $0x88] sm:$0xf]
        %v398 = vld [vmem:[%s277 + $0x8c] sm:$0xf]
        %v399 = vld [vmem:[%s277 + $0x90] sm:$0xf]
        %v400 = vld [vmem:[%s277 + $0x94] sm:$0xf]
        %v401 = vld [vmem:[%s277 + $0x98] sm:$0xf]
        %v402 = vld [vmem:[%s277 + $0x9c] sm:$0xf]
        %v403 = vld [vmem:[%s277 + $0xa0] sm:$0xf]
        %v404 = vld [vmem:[%s277 + $0xa4] sm:$0xf]
        %v405 = vld [vmem:[%s277 + $0xa8] sm:$0xf]
        %v406 = vld [vmem:[%s277 + $0xac] sm:$0xf]
        %v407 = vld [vmem:[%s277 + $0xb0] sm:$0xf]
        %v408 = vld [vmem:[%s277 + $0xb4] sm:$0xf]
        %v409 = vld [vmem:[%s277 + $0xb8] sm:$0xf]
        %v410 = vld [vmem:[%s277 + $0xbc] sm:$0xf]
        %v411 = vld [vmem:[%s277 + $0xc0] sm:$0xf]
        %v412 = vld [vmem:[%s277 + $0xc4] sm:$0xf]
        %v413 = vld [vmem:[%s277 + $0xc8] sm:$0xf]
        %v414 = vld [vmem:[%s277 + $0xcc] sm:$0xf]
        %v415 = vld [vmem:[%s277 + $0xd0] sm:$0xf]
        %v416 = vld [vmem:[%s277 + $0xd4] sm:$0xf]
        %v417 = vld [vmem:[%s277 + $0xd8] sm:$0xf]
        %v418 = vld [vmem:[%s277 + $0xdc] sm:$0xf]
        %v419 = vld [vmem:[%s277 + $0xe0] sm:$0xf]
        %v420 = vld [vmem:[%s277 + $0xe4] sm:$0xf]
        %v421 = vld [vmem:[%s277 + $0xe8] sm:$0xf]
        %v422 = vld [vmem:[%s277 + $0xec] sm:$0xf]
        %v423 = vld [vmem:[%s277 + $0xf0] sm:$0xf]
        %v424 = vld [vmem:[%s277 + $0xf4] sm:$0xf]
        %v425 = vld [vmem:[%s277 + $0xf8] sm:$0xf]
        %v426 = vld [vmem:[%s277 + $0xfc] sm:$0xf]
        %v427 = vunpack.c.l.bf16 %v395
        %v428 = vunpack.c.l.bf16 %v396
        %v429 = vunpack.c.l.bf16 %v397
        %v430 = vunpack.c.l.bf16 %v398
        %v431 = vunpack.c.l.bf16 %v399
        %v432 = vunpack.c.l.bf16 %v400
        %v433 = vunpack.c.l.bf16 %v401
        %v434 = vunpack.c.l.bf16 %v402
        %v435 = vunpack.c.l.bf16 %v403
        %v436 = vunpack.c.l.bf16 %v404
        %v437 = vunpack.c.l.bf16 %v405
        %v438 = vunpack.c.l.bf16 %v406
        %v439 = vunpack.c.l.bf16 %v407
        %v440 = vunpack.c.l.bf16 %v408
        %v441 = vunpack.c.l.bf16 %v409
        %v442 = vunpack.c.l.bf16 %v410
        %v443 = vunpack.c.l.bf16 %v411
        %v444 = vunpack.c.l.bf16 %v412
        %v445 = vunpack.c.l.bf16 %v413
        %v446 = vunpack.c.l.bf16 %v414
        %v447 = vunpack.c.l.bf16 %v415
        %v448 = vunpack.c.l.bf16 %v416
        %v449 = vunpack.c.l.bf16 %v417
        %v450 = vunpack.c.l.bf16 %v418
        %v451 = vunpack.c.l.bf16 %v419
        %v452 = vunpack.c.l.bf16 %v420
        %v453 = vunpack.c.l.bf16 %v421
        %v454 = vunpack.c.l.bf16 %v422
        %v455 = vunpack.c.l.bf16 %v423
        %v456 = vunpack.c.l.bf16 %v424
        %v457 = vunpack.c.l.bf16 %v425
        %v458 = vunpack.c.l.bf16 %v426
        %v459 = vld [vmem:[%s282] sm:$0xff]
        %v460 = vld [vmem:[%s282 + $0x8] sm:$0xff]
        %v461 = vld [vmem:[%s282 + $0x10] sm:$0xff]
        %v462 = vld [vmem:[%s282 + $0x18] sm:$0xff]
        %v463 = vld [vmem:[%s282 + $0x20] sm:$0xff]
        %v464 = vld [vmem:[%s282 + $0x28] sm:$0xff]
        %v465 = vld [vmem:[%s282 + $0x30] sm:$0xff]
        %v466 = vld [vmem:[%s282 + $0x38] sm:$0xff]
        %v467 = vld [vmem:[%s282 + $0x40] sm:$0xff]
        %v468 = vld [vmem:[%s282 + $0x48] sm:$0xff]
        %v469 = vld [vmem:[%s282 + $0x50] sm:$0xff]
        %v470 = vld [vmem:[%s282 + $0x58] sm:$0xff]
        %v471 = vld [vmem:[%s282 + $0x60] sm:$0xff]
        %v472 = vld [vmem:[%s282 + $0x68] sm:$0xff]
        %v473 = vld [vmem:[%s282 + $0x70] sm:$0xff]
        %v474 = vld [vmem:[%s282 + $0x78] sm:$0xff]
        %v475 = vld [vmem:[%s282 + $0x80] sm:$0xff]
        %v476 = vld [vmem:[%s282 + $0x88] sm:$0xff]
        %v477 = vld [vmem:[%s282 + $0x90] sm:$0xff]
        %v478 = vld [vmem:[%s282 + $0x98] sm:$0xff]
        %v479 = vld [vmem:[%s282 + $0xa0] sm:$0xff]
        %v480 = vld [vmem:[%s282 + $0xa8] sm:$0xff]
        %v481 = vld [vmem:[%s282 + $0xb0] sm:$0xff]
        %v482 = vld [vmem:[%s282 + $0xb8] sm:$0xff]
        %v483 = vld [vmem:[%s282 + $0xc0] sm:$0xff]
        %v484 = vld [vmem:[%s282 + $0xc8] sm:$0xff]
        %v485 = vld [vmem:[%s282 + $0xd0] sm:$0xff]
        %v486 = vld [vmem:[%s282 + $0xd8] sm:$0xff]
        %v487 = vld [vmem:[%s282 + $0xe0] sm:$0xff]
        %v488 = vld [vmem:[%s282 + $0xe8] sm:$0xff]
        %v489 = vld [vmem:[%s282 + $0xf0] sm:$0xff]
        %v490 = vld [vmem:[%s282 + $0xf8] sm:$0xff]
        %v491 = vld [vmem:[%s4] sm:$0xff]
        %vm492 = vcmask 64512
        %v494 = vsel %vm492, %v283, 0
        %v497 = vsel %vm492, %v284, 0
        %v500 = vsel %vm492, %v285, 0
        %v503 = vsel %vm492, %v286, 0
        %v506 = vsel %vm492, %v287, 0
        %v509 = vsel %vm492, %v288, 0
        %v512 = vsel %vm492, %v289, 0
        %v515 = vsel %vm492, %v290, 0
        %v518 = vsel %vm492, %v291, 0
        %v521 = vsel %vm492, %v292, 0
        %v524 = vsel %vm492, %v293, 0
        %v527 = vsel %vm492, %v294, 0
        %v530 = vsel %vm492, %v295, 0
        %v533 = vsel %vm492, %v296, 0
        %v536 = vsel %vm492, %v297, 0
        %v539 = vsel %vm492, %v298, 0
        %541 = vmatpush.msra.mxu0 0.0
        %542 = vmatpush.msra.mxu0 0.0
        %543 = vmatpush.msra.mxu0 0.0
        %544 = vmatpush.msra.mxu0 0.0
        %545 = vmatpush.msra.mxu0 0.0
        %546 = vmatpush.msra.mxu0 0.0
        %547 = vmatpush.msra.mxu0 0.0
        %548 = vmatpush.msra.mxu0 0.0
        %549 = vmatpush.msra.mxu0 0.0
        %550 = vmatpush.msra.mxu0 0.0
        %551 = vmatpush.msra.mxu0 0.0
        %552 = vmatpush.msra.mxu0 0.0
        %553 = vmatpush.msra.mxu0 0.0
        %554 = vmatpush.msra.mxu0 0.0
        %555 = vmatpush.msra.mxu0 0.0
        %556 = vmatpush.msra.mxu0 %v491
        %557 = vmatmul.f32.gmra.mxu0 %v494
        %v558 = vpop.f32.mrf.mxu0
        %v559 = vadd.f32 0.0, %v558
        %560 = vmatmul.f32.gmra.mxu0 %v497
        %v561 = vpop.f32.mrf.mxu0
        %v562 = vadd.f32 0.0, %v561
        %563 = vmatmul.f32.gmra.mxu0 %v500
        %v564 = vpop.f32.mrf.mxu0
        %v565 = vadd.f32 0.0, %v564
        %566 = vmatmul.f32.gmra.mxu0 %v503
        %v567 = vpop.f32.mrf.mxu0
        %v568 = vadd.f32 0.0, %v567
        %569 = vmatmul.f32.gmra.mxu0 %v506
        %v570 = vpop.f32.mrf.mxu0
        %v571 = vadd.f32 0.0, %v570
        %572 = vmatmul.f32.gmra.mxu0 %v509
        %v573 = vpop.f32.mrf.mxu0
        %v574 = vadd.f32 0.0, %v573
        %575 = vmatmul.f32.gmra.mxu0 %v512
        %v576 = vpop.f32.mrf.mxu0
        %v577 = vadd.f32 0.0, %v576
        %578 = vmatmul.f32.gmra.mxu0 %v515
        %v579 = vpop.f32.mrf.mxu0
        %v580 = vadd.f32 0.0, %v579
        %581 = vmatmul.f32.gmra.mxu0 %v518
        %v582 = vpop.f32.mrf.mxu0
        %v583 = vadd.f32 0.0, %v582
        %584 = vmatmul.f32.gmra.mxu0 %v521
        %v585 = vpop.f32.mrf.mxu0
        %v586 = vadd.f32 0.0, %v585
        %587 = vmatmul.f32.gmra.mxu0 %v524
        %v588 = vpop.f32.mrf.mxu0
        %v589 = vadd.f32 0.0, %v588
        %590 = vmatmul.f32.gmra.mxu0 %v527
        %v591 = vpop.f32.mrf.mxu0
        %v592 = vadd.f32 0.0, %v591
        %593 = vmatmul.f32.gmra.mxu0 %v530
        %v594 = vpop.f32.mrf.mxu0
        %v595 = vadd.f32 0.0, %v594
        %596 = vmatmul.f32.gmra.mxu0 %v533
        %v597 = vpop.f32.mrf.mxu0
        %v598 = vadd.f32 0.0, %v597
        %599 = vmatmul.f32.gmra.mxu0 %v536
        %v600 = vpop.f32.mrf.mxu0
        %v601 = vadd.f32 0.0, %v600
        %602 = vmatmul.f32.gmra.mxu0 %v539
        %v603 = vpop.f32.mrf.mxu0
        %v604 = vadd.f32 0.0, %v603
        %605 = vdwg.mxu0
        %v606 = vld [vmem:[%s4 + $0x8] sm:$0xf]
        %vm607 = vcmask 31744
        %v609 = vsel %vm607, %v299, 0
        %v612 = vsel %vm607, %v300, 0
        %v615 = vsel %vm607, %v301, 0
        %v618 = vsel %vm607, %v302, 0
        %v621 = vsel %vm607, %v303, 0
        %v624 = vsel %vm607, %v304, 0
        %v627 = vsel %vm607, %v305, 0
        %v630 = vsel %vm607, %v306, 0
        %v633 = vsel %vm607, %v307, 0
        %v636 = vsel %vm607, %v308, 0
        %v639 = vsel %vm607, %v309, 0
        %v642 = vsel %vm607, %v310, 0
        %v645 = vsel %vm607, %v311, 0
        %v648 = vsel %vm607, %v312, 0
        %v651 = vsel %vm607, %v313, 0
        %v654 = vsel %vm607, %v314, 0
        %v657 = vsel %vm607, %v315, 0
        %v660 = vsel %vm607, %v316, 0
        %v663 = vsel %vm607, %v317, 0
        %v666 = vsel %vm607, %v318, 0
        %v669 = vsel %vm607, %v319, 0
        %v672 = vsel %vm607, %v320, 0
        %v675 = vsel %vm607, %v321, 0
        %v678 = vsel %vm607, %v322, 0
        %v681 = vsel %vm607, %v323, 0
        %v684 = vsel %vm607, %v324, 0
        %v687 = vsel %vm607, %v325, 0
        %v690 = vsel %vm607, %v326, 0
        %v693 = vsel %vm607, %v327, 0
        %v696 = vsel %vm607, %v328, 0
        %v699 = vsel %vm607, %v329, 0
        %v702 = vsel %vm607, %v330, 0
        %vm704 = vcmask 1043456
        %v706 = vsel %vm704, %v606, 0
        %708 = vmatpush.msra.mxu0 0.0
        %709 = vmatpush.msra.mxu0 0.0
        %710 = vmatpush.msra.mxu0 0.0
        %711 = vmatpush.msra.mxu0 0.0
        %712 = vmatpush.msra.mxu0 0.0
        %713 = vmatpush.msra.mxu0 0.0
        %714 = vmatpush.msra.mxu0 0.0
        %715 = vmatpush.msra.mxu0 0.0
        %716 = vmatpush.msra.mxu0 0.0
        %717 = vmatpush.msra.mxu0 0.0
        %718 = vmatpush.msra.mxu0 0.0
        %719 = vmatpush.msra.mxu0 0.0
        %720 = vmatpush.msra.mxu0 0.0
        %721 = vmatpush.msra.mxu0 0.0
        %722 = vmatpush.msra.mxu0 0.0
        %723 = vmatpush.msra.mxu0 %v706
        %724 = vmatmul.f32.gmra.mxu0 %v609
        %v725 = vpop.f32.mrf.mxu0
        %v726 = vadd.f32 0.0, %v725
        %727 = vmatmul.f32.gmra.mxu0 %v612
        %v728 = vpop.f32.mrf.mxu0
        %v729 = vadd.f32 0.0, %v728
        %730 = vmatmul.f32.gmra.mxu0 %v615
        %v731 = vpop.f32.mrf.mxu0
        %v732 = vadd.f32 0.0, %v731
        %733 = vmatmul.f32.gmra.mxu0 %v618
        %v734 = vpop.f32.mrf.mxu0
        %v735 = vadd.f32 0.0, %v734
        %736 = vmatmul.f32.gmra.mxu0 %v621
        %v737 = vpop.f32.mrf.mxu0
        %v738 = vadd.f32 0.0, %v737
        %739 = vmatmul.f32.gmra.mxu0 %v624
        %v740 = vpop.f32.mrf.mxu0
        %v741 = vadd.f32 0.0, %v740
        %742 = vmatmul.f32.gmra.mxu0 %v627
        %v743 = vpop.f32.mrf.mxu0
        %v744 = vadd.f32 0.0, %v743
        %745 = vmatmul.f32.gmra.mxu0 %v630
        %v746 = vpop.f32.mrf.mxu0
        %v747 = vadd.f32 0.0, %v746
        %748 = vmatmul.f32.gmra.mxu0 %v633
        %v749 = vpop.f32.mrf.mxu0
        %v750 = vadd.f32 0.0, %v749
        %751 = vmatmul.f32.gmra.mxu0 %v636
        %v752 = vpop.f32.mrf.mxu0
        %v753 = vadd.f32 0.0, %v752
        %754 = vmatmul.f32.gmra.mxu0 %v639
        %v755 = vpop.f32.mrf.mxu0
        %v756 = vadd.f32 0.0, %v755
        %757 = vmatmul.f32.gmra.mxu0 %v642
        %v758 = vpop.f32.mrf.mxu0
        %v759 = vadd.f32 0.0, %v758
        %760 = vmatmul.f32.gmra.mxu0 %v645
        %v761 = vpop.f32.mrf.mxu0
        %v762 = vadd.f32 0.0, %v761
        %763 = vmatmul.f32.gmra.mxu0 %v648
        %v764 = vpop.f32.mrf.mxu0
        %v765 = vadd.f32 0.0, %v764
        %766 = vmatmul.f32.gmra.mxu0 %v651
        %v767 = vpop.f32.mrf.mxu0
        %v768 = vadd.f32 0.0, %v767
        %769 = vmatmul.f32.gmra.mxu0 %v654
        %v770 = vpop.f32.mrf.mxu0
        %v771 = vadd.f32 0.0, %v770
        %772 = vmatmul.f32.gmra.mxu0 %v657
        %v773 = vpop.f32.mrf.mxu0
        %v774 = vadd.f32 0.0, %v773
        %775 = vmatmul.f32.gmra.mxu0 %v660
        %v776 = vpop.f32.mrf.mxu0
        %v777 = vadd.f32 0.0, %v776
        %778 = vmatmul.f32.gmra.mxu0 %v663
        %v779 = vpop.f32.mrf.mxu0
        %v780 = vadd.f32 0.0, %v779
        %781 = vmatmul.f32.gmra.mxu0 %v666
        %v782 = vpop.f32.mrf.mxu0
        %v783 = vadd.f32 0.0, %v782
        %784 = vmatmul.f32.gmra.mxu0 %v669
        %v785 = vpop.f32.mrf.mxu0
        %v786 = vadd.f32 0.0, %v785
        %787 = vmatmul.f32.gmra.mxu0 %v672
        %v788 = vpop.f32.mrf.mxu0
        %v789 = vadd.f32 0.0, %v788
        %790 = vmatmul.f32.gmra.mxu0 %v675
        %v791 = vpop.f32.mrf.mxu0
        %v792 = vadd.f32 0.0, %v791
        %793 = vmatmul.f32.gmra.mxu0 %v678
        %v794 = vpop.f32.mrf.mxu0
        %v795 = vadd.f32 0.0, %v794
        %796 = vmatmul.f32.gmra.mxu0 %v681
        %v797 = vpop.f32.mrf.mxu0
        %v798 = vadd.f32 0.0, %v797
        %799 = vmatmul.f32.gmra.mxu0 %v684
        %v800 = vpop.f32.mrf.mxu0
        %v801 = vadd.f32 0.0, %v800
        %802 = vmatmul.f32.gmra.mxu0 %v687
        %v803 = vpop.f32.mrf.mxu0
        %v804 = vadd.f32 0.0, %v803
        %805 = vmatmul.f32.gmra.mxu0 %v690
        %v806 = vpop.f32.mrf.mxu0
        %v807 = vadd.f32 0.0, %v806
        %808 = vmatmul.f32.gmra.mxu0 %v693
        %v809 = vpop.f32.mrf.mxu0
        %v810 = vadd.f32 0.0, %v809
        %811 = vmatmul.f32.gmra.mxu0 %v696
        %v812 = vpop.f32.mrf.mxu0
        %v813 = vadd.f32 0.0, %v812
        %814 = vmatmul.f32.gmra.mxu0 %v699
        %v815 = vpop.f32.mrf.mxu0
        %v816 = vadd.f32 0.0, %v815
        %817 = vmatmul.f32.gmra.mxu0 %v702
        %v818 = vpop.f32.mrf.mxu0
        %v819 = vadd.f32 0.0, %v818
        %820 = vdwg.mxu0
        %821 = vmatpush.msra.mxu0 %v604
        %822 = vmatpush.msra.mxu0 %v601
        %823 = vmatpush.msra.mxu0 %v598
        %824 = vmatpush.msra.mxu0 %v595
        %825 = vmatpush.msra.mxu0 %v592
        %826 = vmatpush.msra.mxu0 %v589
        %827 = vmatpush.msra.mxu0 %v586
        %828 = vmatpush.msra.mxu0 %v583
        %829 = vmatpush.msra.mxu0 %v580
        %830 = vmatpush.msra.mxu0 %v577
        %831 = vmatpush.msra.mxu0 %v574
        %832 = vmatpush.msra.mxu0 %v571
        %833 = vmatpush.msra.mxu0 %v568
        %834 = vmatpush.msra.mxu0 %v565
        %835 = vmatpush.msra.mxu0 %v562
        %836 = vmatpush.msra.mxu0 %v559
        %837 = vmatmul.f32.gmra.mxu0 %v363
        %v838 = vpop.f32.mrf.mxu0
        %v839 = vadd.f32 %v726, %v838
        %840 = vmatmul.f32.gmra.mxu0 %v364
        %v841 = vpop.f32.mrf.mxu0
        %v842 = vadd.f32 %v729, %v841
        %843 = vmatmul.f32.gmra.mxu0 %v365
        %v844 = vpop.f32.mrf.mxu0
        %v845 = vadd.f32 %v732, %v844
        %846 = vmatmul.f32.gmra.mxu0 %v366
        %v847 = vpop.f32.mrf.mxu0
        %v848 = vadd.f32 %v735, %v847
        %849 = vmatmul.f32.gmra.mxu0 %v367
        %v850 = vpop.f32.mrf.mxu0
        %v851 = vadd.f32 %v738, %v850
        %852 = vmatmul.f32.gmra.mxu0 %v368
        %v853 = vpop.f32.mrf.mxu0
        %v854 = vadd.f32 %v741, %v853
        %855 = vmatmul.f32.gmra.mxu0 %v369
        %v856 = vpop.f32.mrf.mxu0
        %v857 = vadd.f32 %v744, %v856
        %858 = vmatmul.f32.gmra.mxu0 %v370
        %v859 = vpop.f32.mrf.mxu0
        %v860 = vadd.f32 %v747, %v859
        %861 = vmatmul.f32.gmra.mxu0 %v371
        %v862 = vpop.f32.mrf.mxu0
        %v863 = vadd.f32 %v750, %v862
        %864 = vmatmul.f32.gmra.mxu0 %v372
        %v865 = vpop.f32.mrf.mxu0
        %v866 = vadd.f32 %v753, %v865
        %867 = vmatmul.f32.gmra.mxu0 %v373
        %v868 = vpop.f32.mrf.mxu0
        %v869 = vadd.f32 %v756, %v868
        %870 = vmatmul.f32.gmra.mxu0 %v374
        %v871 = vpop.f32.mrf.mxu0
        %v872 = vadd.f32 %v759, %v871
        %873 = vmatmul.f32.gmra.mxu0 %v375
        %v874 = vpop.f32.mrf.mxu0
        %v875 = vadd.f32 %v762, %v874
        %876 = vmatmul.f32.gmra.mxu0 %v376
        %v877 = vpop.f32.mrf.mxu0
        %v878 = vadd.f32 %v765, %v877
        %879 = vmatmul.f32.gmra.mxu0 %v377
        %v880 = vpop.f32.mrf.mxu0
        %v881 = vadd.f32 %v768, %v880
        %882 = vmatmul.f32.gmra.mxu0 %v378
        %v883 = vpop.f32.mrf.mxu0
        %v884 = vadd.f32 %v771, %v883
        %885 = vmatmul.f32.gmra.mxu0 %v379
        %v886 = vpop.f32.mrf.mxu0
        %v887 = vadd.f32 %v774, %v886
        %888 = vmatmul.f32.gmra.mxu0 %v380
        %v889 = vpop.f32.mrf.mxu0
        %v890 = vadd.f32 %v777, %v889
        %891 = vmatmul.f32.gmra.mxu0 %v381
        %v892 = vpop.f32.mrf.mxu0
        %v893 = vadd.f32 %v780, %v892
        %894 = vmatmul.f32.gmra.mxu0 %v382
        %v895 = vpop.f32.mrf.mxu0
        %v896 = vadd.f32 %v783, %v895
        %897 = vmatmul.f32.gmra.mxu0 %v383
        %v898 = vpop.f32.mrf.mxu0
        %v899 = vadd.f32 %v786, %v898
        %900 = vmatmul.f32.gmra.mxu0 %v384
        %v901 = vpop.f32.mrf.mxu0
        %v902 = vadd.f32 %v789, %v901
        %903 = vmatmul.f32.gmra.mxu0 %v385
        %v904 = vpop.f32.mrf.mxu0
        %v905 = vadd.f32 %v792, %v904
        %906 = vmatmul.f32.gmra.mxu0 %v386
        %v907 = vpop.f32.mrf.mxu0
        %v908 = vadd.f32 %v795, %v907
        %909 = vmatmul.f32.gmra.mxu0 %v387
        %v910 = vpop.f32.mrf.mxu0
        %v911 = vadd.f32 %v798, %v910
        %912 = vmatmul.f32.gmra.mxu0 %v388
        %v913 = vpop.f32.mrf.mxu0
        %v914 = vadd.f32 %v801, %v913
        %915 = vmatmul.f32.gmra.mxu0 %v389
        %v916 = vpop.f32.mrf.mxu0
        %v917 = vadd.f32 %v804, %v916
        %918 = vmatmul.f32.gmra.mxu0 %v390
        %v919 = vpop.f32.mrf.mxu0
        %v920 = vadd.f32 %v807, %v919
        %921 = vmatmul.f32.gmra.mxu0 %v391
        %v922 = vpop.f32.mrf.mxu0
        %v923 = vadd.f32 %v810, %v922
        %924 = vmatmul.f32.gmra.mxu0 %v392
        %v925 = vpop.f32.mrf.mxu0
        %v926 = vadd.f32 %v813, %v925
        %927 = vmatmul.f32.gmra.mxu0 %v393
        %v928 = vpop.f32.mrf.mxu0
        %v929 = vadd.f32 %v816, %v928
        %930 = vmatmul.f32.gmra.mxu0 %v394
        %v931 = vpop.f32.mrf.mxu0
        %v932 = vadd.f32 %v819, %v931
        %933 = vdwg.mxu0
        %v934 = vld [vmem:[%s4 + $0x10] sm:$0x1]
        %v935 = vperm.slane %v934, 0
        %v936 = vadd.f32 %v839, %v935
        %v937 = vadd.f32 %v842, %v935
        %v938 = vadd.f32 %v845, %v935
        %v939 = vadd.f32 %v848, %v935
        %v940 = vadd.f32 %v851, %v935
        %v941 = vadd.f32 %v854, %v935
        %v942 = vadd.f32 %v857, %v935
        %v943 = vadd.f32 %v860, %v935
        %v944 = vadd.f32 %v863, %v935
        %v945 = vadd.f32 %v866, %v935
        %v946 = vadd.f32 %v869, %v935
        %v947 = vadd.f32 %v872, %v935
        %v948 = vadd.f32 %v875, %v935
        %v949 = vadd.f32 %v878, %v935
        %v950 = vadd.f32 %v881, %v935
        %v951 = vadd.f32 %v884, %v935
        %v952 = vadd.f32 %v887, %v935
        %v953 = vadd.f32 %v890, %v935
        %v954 = vadd.f32 %v893, %v935
        %v955 = vadd.f32 %v896, %v935
        %v956 = vadd.f32 %v899, %v935
        %v957 = vadd.f32 %v902, %v935
        %v958 = vadd.f32 %v905, %v935
        %v959 = vadd.f32 %v908, %v935
        %v960 = vadd.f32 %v911, %v935
        %v961 = vadd.f32 %v914, %v935
        %v962 = vadd.f32 %v917, %v935
        %v963 = vadd.f32 %v920, %v935
        %v964 = vadd.f32 %v923, %v935
        %v965 = vadd.f32 %v926, %v935
        %v966 = vadd.f32 %v929, %v935
        %v967 = vadd.f32 %v932, %v935
        %v968 = vmax.f32 %v936, 0.0
        %v969 = vmax.f32 %v937, 0.0
        %v970 = vmax.f32 %v938, 0.0
        %v971 = vmax.f32 %v939, 0.0
        %v972 = vmax.f32 %v940, 0.0
        %v973 = vmax.f32 %v941, 0.0
        %v974 = vmax.f32 %v942, 0.0
        %v975 = vmax.f32 %v943, 0.0
        %v976 = vmax.f32 %v944, 0.0
        %v977 = vmax.f32 %v945, 0.0
        %v978 = vmax.f32 %v946, 0.0
        %v979 = vmax.f32 %v947, 0.0
        %v980 = vmax.f32 %v948, 0.0
        %v981 = vmax.f32 %v949, 0.0
        %v982 = vmax.f32 %v950, 0.0
        %v983 = vmax.f32 %v951, 0.0
        %v984 = vmax.f32 %v952, 0.0
        %v985 = vmax.f32 %v953, 0.0
        %v986 = vmax.f32 %v954, 0.0
        %v987 = vmax.f32 %v955, 0.0
        %v988 = vmax.f32 %v956, 0.0
        %v989 = vmax.f32 %v957, 0.0
        %v990 = vmax.f32 %v958, 0.0
        %v991 = vmax.f32 %v959, 0.0
        %v992 = vmax.f32 %v960, 0.0
        %v993 = vmax.f32 %v961, 0.0
        %v994 = vmax.f32 %v962, 0.0
        %v995 = vmax.f32 %v963, 0.0
        %v996 = vmax.f32 %v964, 0.0
        %v997 = vmax.f32 %v965, 0.0
        %v998 = vmax.f32 %v966, 0.0
        %v999 = vmax.f32 %v967, 0.0
        %1000 = vmatpush.msra.mxu0 %v983
        %1001 = vmatpush.msra.mxu0 %v982
        %1002 = vmatpush.msra.mxu0 %v981
        %1003 = vmatpush.msra.mxu0 %v980
        %1004 = vmatpush.msra.mxu0 %v979
        %1005 = vmatpush.msra.mxu0 %v978
        %1006 = vmatpush.msra.mxu0 %v977
        %1007 = vmatpush.msra.mxu0 %v976
        %1008 = vmatpush.msra.mxu0 %v975
        %1009 = vmatpush.msra.mxu0 %v974
        %1010 = vmatpush.msra.mxu0 %v973
        %1011 = vmatpush.msra.mxu0 %v972
        %1012 = vmatpush.msra.mxu0 %v971
        %1013 = vmatpush.msra.mxu0 %v970
        %1014 = vmatpush.msra.mxu0 %v969
        %1015 = vmatpush.msra.mxu0 %v968
        %1016 = vmatmul.f32.gmra.mxu0 %v459
        %v1017 = vpop.f32.mrf.mxu0
        %v1018 = vadd.f32 0.0, %v1017
        %1019 = vmatmul.f32.gmra.mxu0 %v461
        %v1020 = vpop.f32.mrf.mxu0
        %v1021 = vadd.f32 0.0, %v1020
        %1022 = vmatmul.f32.gmra.mxu0 %v463
        %v1023 = vpop.f32.mrf.mxu0
        %v1024 = vadd.f32 0.0, %v1023
        %1025 = vmatmul.f32.gmra.mxu0 %v465
        %v1026 = vpop.f32.mrf.mxu0
        %v1027 = vadd.f32 0.0, %v1026
        %1028 = vmatmul.f32.gmra.mxu0 %v467
        %v1029 = vpop.f32.mrf.mxu0
        %v1030 = vadd.f32 0.0, %v1029
        %1031 = vmatmul.f32.gmra.mxu0 %v469
        %v1032 = vpop.f32.mrf.mxu0
        %v1033 = vadd.f32 0.0, %v1032
        %1034 = vmatmul.f32.gmra.mxu0 %v471
        %v1035 = vpop.f32.mrf.mxu0
        %v1036 = vadd.f32 0.0, %v1035
        %1037 = vmatmul.f32.gmra.mxu0 %v473
        %v1038 = vpop.f32.mrf.mxu0
        %v1039 = vadd.f32 0.0, %v1038
        %1040 = vmatmul.f32.gmra.mxu0 %v475
        %v1041 = vpop.f32.mrf.mxu0
        %v1042 = vadd.f32 0.0, %v1041
        %1043 = vmatmul.f32.gmra.mxu0 %v477
        %v1044 = vpop.f32.mrf.mxu0
        %v1045 = vadd.f32 0.0, %v1044
        %1046 = vmatmul.f32.gmra.mxu0 %v479
        %v1047 = vpop.f32.mrf.mxu0
        %v1048 = vadd.f32 0.0, %v1047
        %1049 = vmatmul.f32.gmra.mxu0 %v481
        %v1050 = vpop.f32.mrf.mxu0
        %v1051 = vadd.f32 0.0, %v1050
        %1052 = vmatmul.f32.gmra.mxu0 %v483
        %v1053 = vpop.f32.mrf.mxu0
        %v1054 = vadd.f32 0.0, %v1053
        %1055 = vmatmul.f32.gmra.mxu0 %v485
        %v1056 = vpop.f32.mrf.mxu0
        %v1057 = vadd.f32 0.0, %v1056
        %1058 = vmatmul.f32.gmra.mxu0 %v487
        %v1059 = vpop.f32.mrf.mxu0
        %v1060 = vadd.f32 0.0, %v1059
        %1061 = vmatmul.f32.gmra.mxu0 %v489
        %v1062 = vpop.f32.mrf.mxu0
        %v1063 = vadd.f32 0.0, %v1062
        %1064 = vdwg.mxu0
        %1065 = vmatpush.msra.mxu0 %v999
        %1066 = vmatpush.msra.mxu0 %v998
        %1067 = vmatpush.msra.mxu0 %v997
        %1068 = vmatpush.msra.mxu0 %v996
        %1069 = vmatpush.msra.mxu0 %v995
        %1070 = vmatpush.msra.mxu0 %v994
        %1071 = vmatpush.msra.mxu0 %v993
        %1072 = vmatpush.msra.mxu0 %v992
        %1073 = vmatpush.msra.mxu0 %v991
        %1074 = vmatpush.msra.mxu0 %v990
        %1075 = vmatpush.msra.mxu0 %v989
        %1076 = vmatpush.msra.mxu0 %v988
        %1077 = vmatpush.msra.mxu0 %v987
        %1078 = vmatpush.msra.mxu0 %v986
        %1079 = vmatpush.msra.mxu0 %v985
        %1080 = vmatpush.msra.mxu0 %v984
        %1081 = vmatmul.f32.gmra.mxu0 %v460
        %v1082 = vpop.f32.mrf.mxu0
        %v1083 = vadd.f32 %v1018, %v1082
        %1084 = vmatmul.f32.gmra.mxu0 %v462
        %v1085 = vpop.f32.mrf.mxu0
        %v1086 = vadd.f32 %v1021, %v1085
        %1087 = vmatmul.f32.gmra.mxu0 %v464
        %v1088 = vpop.f32.mrf.mxu0
        %v1089 = vadd.f32 %v1024, %v1088
        %1090 = vmatmul.f32.gmra.mxu0 %v466
        %v1091 = vpop.f32.mrf.mxu0
        %v1092 = vadd.f32 %v1027, %v1091
        %1093 = vmatmul.f32.gmra.mxu0 %v468
        %v1094 = vpop.f32.mrf.mxu0
        %v1095 = vadd.f32 %v1030, %v1094
        %1096 = vmatmul.f32.gmra.mxu0 %v470
        %v1097 = vpop.f32.mrf.mxu0
        %v1098 = vadd.f32 %v1033, %v1097
        %1099 = vmatmul.f32.gmra.mxu0 %v472
        %v1100 = vpop.f32.mrf.mxu0
        %v1101 = vadd.f32 %v1036, %v1100
        %1102 = vmatmul.f32.gmra.mxu0 %v474
        %v1103 = vpop.f32.mrf.mxu0
        %v1104 = vadd.f32 %v1039, %v1103
        %1105 = vmatmul.f32.gmra.mxu0 %v476
        %v1106 = vpop.f32.mrf.mxu0
        %v1107 = vadd.f32 %v1042, %v1106
        %1108 = vmatmul.f32.gmra.mxu0 %v478
        %v1109 = vpop.f32.mrf.mxu0
        %v1110 = vadd.f32 %v1045, %v1109
        %1111 = vmatmul.f32.gmra.mxu0 %v480
        %v1112 = vpop.f32.mrf.mxu0
        %v1113 = vadd.f32 %v1048, %v1112
        %1114 = vmatmul.f32.gmra.mxu0 %v482
        %v1115 = vpop.f32.mrf.mxu0
        %v1116 = vadd.f32 %v1051, %v1115
        %1117 = vmatmul.f32.gmra.mxu0 %v484
        %v1118 = vpop.f32.mrf.mxu0
        %v1119 = vadd.f32 %v1054, %v1118
        %1120 = vmatmul.f32.gmra.mxu0 %v486
        %v1121 = vpop.f32.mrf.mxu0
        %v1122 = vadd.f32 %v1057, %v1121
        %1123 = vmatmul.f32.gmra.mxu0 %v488
        %v1124 = vpop.f32.mrf.mxu0
        %v1125 = vadd.f32 %v1060, %v1124
        %1126 = vmatmul.f32.gmra.mxu0 %v490
        %v1127 = vpop.f32.mrf.mxu0
        %v1128 = vadd.f32 %v1063, %v1127
        %1129 = vdwg.mxu0
        %v1130 = vld [vmem:[%s4 + $0x18] sm:$0xff]
        %v1131 = vld [vmem:[%s4 + $0x20] sm:$0xff]
        %v1132 = vld [vmem:[%s4 + $0x28] sm:$0xff]
        %1133 = vmatpush.msra.mxu0 0.0
        %1134 = vmatpush.msra.mxu0 0.0
        %1135 = vmatpush.msra.mxu0 0.0
        %1136 = vmatpush.msra.mxu0 0.0
        %1137 = vmatpush.msra.mxu0 0.0
        %1138 = vmatpush.msra.mxu0 0.0
        %1139 = vmatpush.msra.mxu0 0.0
        %1140 = vmatpush.msra.mxu0 0.0
        %1141 = vmatpush.msra.mxu0 0.0
        %1142 = vmatpush.msra.mxu0 0.0
        %1143 = vmatpush.msra.mxu0 0.0
        %1144 = vmatpush.msra.mxu0 0.0
        %1145 = vmatpush.msra.mxu0 0.0
        %1146 = vmatpush.msra.mxu0 0.0
        %1147 = vmatpush.msra.mxu0 0.0
        %1148 = vmatpush.msra.mxu0 %v1132
        %1149 = vmatmul.f32.gmra.mxu0 %v494
        %v1150 = vpop.f32.mrf.mxu0
        %v1151 = vadd.f32 0.0, %v1150
        %1152 = vmatmul.f32.gmra.mxu0 %v497
        %v1153 = vpop.f32.mrf.mxu0
        %v1154 = vadd.f32 0.0, %v1153
        %1155 = vmatmul.f32.gmra.mxu0 %v500
        %v1156 = vpop.f32.mrf.mxu0
        %v1157 = vadd.f32 0.0, %v1156
        %1158 = vmatmul.f32.gmra.mxu0 %v503
        %v1159 = vpop.f32.mrf.mxu0
        %v1160 = vadd.f32 0.0, %v1159
        %1161 = vmatmul.f32.gmra.mxu0 %v506
        %v1162 = vpop.f32.mrf.mxu0
        %v1163 = vadd.f32 0.0, %v1162
        %1164 = vmatmul.f32.gmra.mxu0 %v509
        %v1165 = vpop.f32.mrf.mxu0
        %v1166 = vadd.f32 0.0, %v1165
        %1167 = vmatmul.f32.gmra.mxu0 %v512
        %v1168 = vpop.f32.mrf.mxu0
        %v1169 = vadd.f32 0.0, %v1168
        %1170 = vmatmul.f32.gmra.mxu0 %v515
        %v1171 = vpop.f32.mrf.mxu0
        %v1172 = vadd.f32 0.0, %v1171
        %1173 = vmatmul.f32.gmra.mxu0 %v518
        %v1174 = vpop.f32.mrf.mxu0
        %v1175 = vadd.f32 0.0, %v1174
        %1176 = vmatmul.f32.gmra.mxu0 %v521
        %v1177 = vpop.f32.mrf.mxu0
        %v1178 = vadd.f32 0.0, %v1177
        %1179 = vmatmul.f32.gmra.mxu0 %v524
        %v1180 = vpop.f32.mrf.mxu0
        %v1181 = vadd.f32 0.0, %v1180
        %1182 = vmatmul.f32.gmra.mxu0 %v527
        %v1183 = vpop.f32.mrf.mxu0
        %v1184 = vadd.f32 0.0, %v1183
        %1185 = vmatmul.f32.gmra.mxu0 %v530
        %v1186 = vpop.f32.mrf.mxu0
        %v1187 = vadd.f32 0.0, %v1186
        %1188 = vmatmul.f32.gmra.mxu0 %v533
        %v1189 = vpop.f32.mrf.mxu0
        %v1190 = vadd.f32 0.0, %v1189
        %1191 = vmatmul.f32.gmra.mxu0 %v536
        %v1192 = vpop.f32.mrf.mxu0
        %v1193 = vadd.f32 0.0, %v1192
        %1194 = vmatmul.f32.gmra.mxu0 %v539
        %v1195 = vpop.f32.mrf.mxu0
        %v1196 = vadd.f32 0.0, %v1195
        %1197 = vdwg.mxu0
        %vm1198 = vcmask 130048
        %v1200 = vsel %vm1198, %v1083, 0
        %v1203 = vsel %vm1198, %v1086, 0
        %v1206 = vsel %vm1198, %v1089, 0
        %v1209 = vsel %vm1198, %v1092, 0
        %v1212 = vsel %vm1198, %v1095, 0
        %v1215 = vsel %vm1198, %v1098, 0
        %v1218 = vsel %vm1198, %v1101, 0
        %v1221 = vsel %vm1198, %v1104, 0
        %v1224 = vsel %vm1198, %v1107, 0
        %v1227 = vsel %vm1198, %v1110, 0
        %v1230 = vsel %vm1198, %v1113, 0
        %v1233 = vsel %vm1198, %v1116, 0
        %v1236 = vsel %vm1198, %v1119, 0
        %v1239 = vsel %vm1198, %v1122, 0
        %v1242 = vsel %vm1198, %v1125, 0
        %v1245 = vsel %vm1198, %v1128, 0
        %1247 = vmatpush.msra.mxu0 0.0
        %1248 = vmatpush.msra.mxu0 0.0
        %1249 = vmatpush.msra.mxu0 0.0
        %1250 = vmatpush.msra.mxu0 0.0
        %1251 = vmatpush.msra.mxu0 0.0
        %1252 = vmatpush.msra.mxu0 0.0
        %1253 = vmatpush.msra.mxu0 0.0
        %1254 = vmatpush.msra.mxu0 0.0
        %1255 = vmatpush.msra.mxu0 0.0
        %1256 = vmatpush.msra.mxu0 0.0
        %1257 = vmatpush.msra.mxu0 0.0
        %1258 = vmatpush.msra.mxu0 0.0
        %1259 = vmatpush.msra.mxu0 0.0
        %1260 = vmatpush.msra.mxu0 0.0
        %1261 = vmatpush.msra.mxu0 %v1131
        %1262 = vmatpush.msra.mxu0 %v1130
        %1263 = vmatmul.f32.gmra.mxu0 %v1200
        %v1264 = vpop.f32.mrf.mxu0
        %v1265 = vadd.f32 %v1151, %v1264
        %1266 = vmatmul.f32.gmra.mxu0 %v1203
        %v1267 = vpop.f32.mrf.mxu0
        %v1268 = vadd.f32 %v1154, %v1267
        %1269 = vmatmul.f32.gmra.mxu0 %v1206
        %v1270 = vpop.f32.mrf.mxu0
        %v1271 = vadd.f32 %v1157, %v1270
        %1272 = vmatmul.f32.gmra.mxu0 %v1209
        %v1273 = vpop.f32.mrf.mxu0
        %v1274 = vadd.f32 %v1160, %v1273
        %1275 = vmatmul.f32.gmra.mxu0 %v1212
        %v1276 = vpop.f32.mrf.mxu0
        %v1277 = vadd.f32 %v1163, %v1276
        %1278 = vmatmul.f32.gmra.mxu0 %v1215
        %v1279 = vpop.f32.mrf.mxu0
        %v1280 = vadd.f32 %v1166, %v1279
        %1281 = vmatmul.f32.gmra.mxu0 %v1218
        %v1282 = vpop.f32.mrf.mxu0
        %v1283 = vadd.f32 %v1169, %v1282
        %1284 = vmatmul.f32.gmra.mxu0 %v1221
        %v1285 = vpop.f32.mrf.mxu0
        %v1286 = vadd.f32 %v1172, %v1285
        %1287 = vmatmul.f32.gmra.mxu0 %v1224
        %v1288 = vpop.f32.mrf.mxu0
        %v1289 = vadd.f32 %v1175, %v1288
        %1290 = vmatmul.f32.gmra.mxu0 %v1227
        %v1291 = vpop.f32.mrf.mxu0
        %v1292 = vadd.f32 %v1178, %v1291
        %1293 = vmatmul.f32.gmra.mxu0 %v1230
        %v1294 = vpop.f32.mrf.mxu0
        %v1295 = vadd.f32 %v1181, %v1294
        %1296 = vmatmul.f32.gmra.mxu0 %v1233
        %v1297 = vpop.f32.mrf.mxu0
        %v1298 = vadd.f32 %v1184, %v1297
        %1299 = vmatmul.f32.gmra.mxu0 %v1236
        %v1300 = vpop.f32.mrf.mxu0
        %v1301 = vadd.f32 %v1187, %v1300
        %1302 = vmatmul.f32.gmra.mxu0 %v1239
        %v1303 = vpop.f32.mrf.mxu0
        %v1304 = vadd.f32 %v1190, %v1303
        %1305 = vmatmul.f32.gmra.mxu0 %v1242
        %v1306 = vpop.f32.mrf.mxu0
        %v1307 = vadd.f32 %v1193, %v1306
        %1308 = vmatmul.f32.gmra.mxu0 %v1245
        %v1309 = vpop.f32.mrf.mxu0
        %v1310 = vadd.f32 %v1196, %v1309
        %1311 = vdwg.mxu0
        %v1312 = vld [vmem:[%s4 + $0x30] sm:$0x1]
        %v1313 = vperm.slane %v1312, 0
        %v1314 = vadd.f32 %v1265, %v1313
        %v1315 = vadd.f32 %v1268, %v1313
        %v1316 = vadd.f32 %v1271, %v1313
        %v1317 = vadd.f32 %v1274, %v1313
        %v1318 = vadd.f32 %v1277, %v1313
        %v1319 = vadd.f32 %v1280, %v1313
        %v1320 = vadd.f32 %v1283, %v1313
        %v1321 = vadd.f32 %v1286, %v1313
        %v1322 = vadd.f32 %v1289, %v1313
        %v1323 = vadd.f32 %v1292, %v1313
        %v1324 = vadd.f32 %v1295, %v1313
        %v1325 = vadd.f32 %v1298, %v1313
        %v1326 = vadd.f32 %v1301, %v1313
        %v1327 = vadd.f32 %v1304, %v1313
        %v1328 = vadd.f32 %v1307, %v1313
        %v1329 = vadd.f32 %v1310, %v1313
        %v1330 = vmax.f32 %v1314, 0.0
        %v1331 = vmax.f32 %v1315, 0.0
        %v1332 = vmax.f32 %v1316, 0.0
        %v1333 = vmax.f32 %v1317, 0.0
        %v1334 = vmax.f32 %v1318, 0.0
        %v1335 = vmax.f32 %v1319, 0.0
        %v1336 = vmax.f32 %v1320, 0.0
        %v1337 = vmax.f32 %v1321, 0.0
        %v1338 = vmax.f32 %v1322, 0.0
        %v1339 = vmax.f32 %v1323, 0.0
        %v1340 = vmax.f32 %v1324, 0.0
        %v1341 = vmax.f32 %v1325, 0.0
        %v1342 = vmax.f32 %v1326, 0.0
        %v1343 = vmax.f32 %v1327, 0.0
        %v1344 = vmax.f32 %v1328, 0.0
        %v1345 = vmax.f32 %v1329, 0.0
        %v1346 = vmul.f32 %v1330, %v1330
        %v1347 = vmul.f32 %v1331, %v1331
        %v1348 = vmul.f32 %v1332, %v1332
        %v1349 = vmul.f32 %v1333, %v1333
        %v1350 = vmul.f32 %v1334, %v1334
        %v1351 = vmul.f32 %v1335, %v1335
        %v1352 = vmul.f32 %v1336, %v1336
        %v1353 = vmul.f32 %v1337, %v1337
        %v1354 = vmul.f32 %v1338, %v1338
        %v1355 = vmul.f32 %v1339, %v1339
        %v1356 = vmul.f32 %v1340, %v1340
        %v1357 = vmul.f32 %v1341, %v1341
        %v1358 = vmul.f32 %v1342, %v1342
        %v1359 = vmul.f32 %v1343, %v1343
        %v1360 = vmul.f32 %v1344, %v1344
        %v1361 = vmul.f32 %v1345, %v1345
        %v1362 = vsel %vm1198, %v1346, 0.0
        %1363 = vadd.xlane.f32.xlu0 %v1362
        %v1364 = vpop.xlane.xlu0 %1363
        %v1365 = vsel %vm1198, %v1347, 0.0
        %1366 = vadd.xlane.f32.xlu0 %v1365
        %v1367 = vpop.xlane.xlu0 %1366
        %v1368 = vsel %vm1198, %v1348, 0.0
        %1369 = vadd.xlane.f32.xlu0 %v1368
        %v1370 = vpop.xlane.xlu0 %1369
        %v1371 = vsel %vm1198, %v1349, 0.0
        %1372 = vadd.xlane.f32.xlu0 %v1371
        %v1373 = vpop.xlane.xlu0 %1372
        %v1374 = vsel %vm1198, %v1350, 0.0
        %1375 = vadd.xlane.f32.xlu0 %v1374
        %v1376 = vpop.xlane.xlu0 %1375
        %v1377 = vsel %vm1198, %v1351, 0.0
        %1378 = vadd.xlane.f32.xlu0 %v1377
        %v1379 = vpop.xlane.xlu0 %1378
        %v1380 = vsel %vm1198, %v1352, 0.0
        %1381 = vadd.xlane.f32.xlu0 %v1380
        %v1382 = vpop.xlane.xlu0 %1381
        %v1383 = vsel %vm1198, %v1353, 0.0
        %1384 = vadd.xlane.f32.xlu0 %v1383
        %v1385 = vpop.xlane.xlu0 %1384
        %v1386 = vsel %vm1198, %v1354, 0.0
        %1387 = vadd.xlane.f32.xlu0 %v1386
        %v1388 = vpop.xlane.xlu0 %1387
        %v1389 = vsel %vm1198, %v1355, 0.0
        %1390 = vadd.xlane.f32.xlu0 %v1389
        %v1391 = vpop.xlane.xlu0 %1390
        %v1392 = vsel %vm1198, %v1356, 0.0
        %1393 = vadd.xlane.f32.xlu0 %v1392
        %v1394 = vpop.xlane.xlu0 %1393
        %v1395 = vsel %vm1198, %v1357, 0.0
        %1396 = vadd.xlane.f32.xlu0 %v1395
        %v1397 = vpop.xlane.xlu0 %1396
        %v1398 = vsel %vm1198, %v1358, 0.0
        %1399 = vadd.xlane.f32.xlu0 %v1398
        %v1400 = vpop.xlane.xlu0 %1399
        %v1401 = vsel %vm1198, %v1359, 0.0
        %1402 = vadd.xlane.f32.xlu0 %v1401
        %v1403 = vpop.xlane.xlu0 %1402
        %v1404 = vsel %vm1198, %v1360, 0.0
        %1405 = vadd.xlane.f32.xlu0 %v1404
        %v1406 = vpop.xlane.xlu0 %1405
        %v1407 = vsel %vm1198, %v1361, 0.0
        %1408 = vadd.xlane.f32.xlu0 %v1407
        %v1409 = vpop.xlane.xlu0 %1408
        %v1410 = vmax.f32 %v1364, 1e-24
        %v1411 = vmax.f32 %v1367, 1e-24
        %v1412 = vmax.f32 %v1370, 1e-24
        %v1413 = vmax.f32 %v1373, 1e-24
        %v1414 = vmax.f32 %v1376, 1e-24
        %v1415 = vmax.f32 %v1379, 1e-24
        %v1416 = vmax.f32 %v1382, 1e-24
        %v1417 = vmax.f32 %v1385, 1e-24
        %v1418 = vmax.f32 %v1388, 1e-24
        %v1419 = vmax.f32 %v1391, 1e-24
        %v1420 = vmax.f32 %v1394, 1e-24
        %v1421 = vmax.f32 %v1397, 1e-24
        %v1422 = vmax.f32 %v1400, 1e-24
        %v1423 = vmax.f32 %v1403, 1e-24
        %v1424 = vmax.f32 %v1406, 1e-24
        %v1425 = vmax.f32 %v1409, 1e-24
        %v1426 = vrsqrt.pop %v1410
        %v1427 = vmul.f32 %v1426, %v1410
        %v1428 = vmul.f32 %v1427, %v1426
        %v1429 = vmul.f32 0.5, %v1428
        %v1430 = vsub.f32 1.5, %v1429
        %v1431 = vmul.f32 %v1426, %v1430
        %vm1432 = vweird.f32 %v1410
        %vm1433 = vweird.f32 %v1426
        %vm1434 = vmor %vm1432, %vm1433
        %v1435 = vsel %vm1434, %v1426, %v1431
        %v1436 = vrsqrt.pop %v1411
        %v1437 = vmul.f32 %v1436, %v1411
        %v1438 = vmul.f32 %v1437, %v1436
        %v1439 = vmul.f32 0.5, %v1438
        %v1440 = vsub.f32 1.5, %v1439
        %v1441 = vmul.f32 %v1436, %v1440
        %vm1442 = vweird.f32 %v1411
        %vm1443 = vweird.f32 %v1436
        %vm1444 = vmor %vm1442, %vm1443
        %v1445 = vsel %vm1444, %v1436, %v1441
        %v1446 = vrsqrt.pop %v1412
        %v1447 = vmul.f32 %v1446, %v1412
        %v1448 = vmul.f32 %v1447, %v1446
        %v1449 = vmul.f32 0.5, %v1448
        %v1450 = vsub.f32 1.5, %v1449
        %v1451 = vmul.f32 %v1446, %v1450
        %vm1452 = vweird.f32 %v1412
        %vm1453 = vweird.f32 %v1446
        %vm1454 = vmor %vm1452, %vm1453
        %v1455 = vsel %vm1454, %v1446, %v1451
        %v1456 = vrsqrt.pop %v1413
        %v1457 = vmul.f32 %v1456, %v1413
        %v1458 = vmul.f32 %v1457, %v1456
        %v1459 = vmul.f32 0.5, %v1458
        %v1460 = vsub.f32 1.5, %v1459
        %v1461 = vmul.f32 %v1456, %v1460
        %vm1462 = vweird.f32 %v1413
        %vm1463 = vweird.f32 %v1456
        %vm1464 = vmor %vm1462, %vm1463
        %v1465 = vsel %vm1464, %v1456, %v1461
        %v1466 = vrsqrt.pop %v1414
        %v1467 = vmul.f32 %v1466, %v1414
        %v1468 = vmul.f32 %v1467, %v1466
        %v1469 = vmul.f32 0.5, %v1468
        %v1470 = vsub.f32 1.5, %v1469
        %v1471 = vmul.f32 %v1466, %v1470
        %vm1472 = vweird.f32 %v1414
        %vm1473 = vweird.f32 %v1466
        %vm1474 = vmor %vm1472, %vm1473
        %v1475 = vsel %vm1474, %v1466, %v1471
        %v1476 = vrsqrt.pop %v1415
        %v1477 = vmul.f32 %v1476, %v1415
        %v1478 = vmul.f32 %v1477, %v1476
        %v1479 = vmul.f32 0.5, %v1478
        %v1480 = vsub.f32 1.5, %v1479
        %v1481 = vmul.f32 %v1476, %v1480
        %vm1482 = vweird.f32 %v1415
        %vm1483 = vweird.f32 %v1476
        %vm1484 = vmor %vm1482, %vm1483
        %v1485 = vsel %vm1484, %v1476, %v1481
        %v1486 = vrsqrt.pop %v1416
        %v1487 = vmul.f32 %v1486, %v1416
        %v1488 = vmul.f32 %v1487, %v1486
        %v1489 = vmul.f32 0.5, %v1488
        %v1490 = vsub.f32 1.5, %v1489
        %v1491 = vmul.f32 %v1486, %v1490
        %vm1492 = vweird.f32 %v1416
        %vm1493 = vweird.f32 %v1486
        %vm1494 = vmor %vm1492, %vm1493
        %v1495 = vsel %vm1494, %v1486, %v1491
        %v1496 = vrsqrt.pop %v1417
        %v1497 = vmul.f32 %v1496, %v1417
        %v1498 = vmul.f32 %v1497, %v1496
        %v1499 = vmul.f32 0.5, %v1498
        %v1500 = vsub.f32 1.5, %v1499
        %v1501 = vmul.f32 %v1496, %v1500
        %vm1502 = vweird.f32 %v1417
        %vm1503 = vweird.f32 %v1496
        %vm1504 = vmor %vm1502, %vm1503
        %v1505 = vsel %vm1504, %v1496, %v1501
        %v1506 = vrsqrt.pop %v1418
        %v1507 = vmul.f32 %v1506, %v1418
        %v1508 = vmul.f32 %v1507, %v1506
        %v1509 = vmul.f32 0.5, %v1508
        %v1510 = vsub.f32 1.5, %v1509
        %v1511 = vmul.f32 %v1506, %v1510
        %vm1512 = vweird.f32 %v1418
        %vm1513 = vweird.f32 %v1506
        %vm1514 = vmor %vm1512, %vm1513
        %v1515 = vsel %vm1514, %v1506, %v1511
        %v1516 = vrsqrt.pop %v1419
        %v1517 = vmul.f32 %v1516, %v1419
        %v1518 = vmul.f32 %v1517, %v1516
        %v1519 = vmul.f32 0.5, %v1518
        %v1520 = vsub.f32 1.5, %v1519
        %v1521 = vmul.f32 %v1516, %v1520
        %vm1522 = vweird.f32 %v1419
        %vm1523 = vweird.f32 %v1516
        %vm1524 = vmor %vm1522, %vm1523
        %v1525 = vsel %vm1524, %v1516, %v1521
        %v1526 = vrsqrt.pop %v1420
        %v1527 = vmul.f32 %v1526, %v1420
        %v1528 = vmul.f32 %v1527, %v1526
        %v1529 = vmul.f32 0.5, %v1528
        %v1530 = vsub.f32 1.5, %v1529
        %v1531 = vmul.f32 %v1526, %v1530
        %vm1532 = vweird.f32 %v1420
        %vm1533 = vweird.f32 %v1526
        %vm1534 = vmor %vm1532, %vm1533
        %v1535 = vsel %vm1534, %v1526, %v1531
        %v1536 = vrsqrt.pop %v1421
        %v1537 = vmul.f32 %v1536, %v1421
        %v1538 = vmul.f32 %v1537, %v1536
        %v1539 = vmul.f32 0.5, %v1538
        %v1540 = vsub.f32 1.5, %v1539
        %v1541 = vmul.f32 %v1536, %v1540
        %vm1542 = vweird.f32 %v1421
        %vm1543 = vweird.f32 %v1536
        %vm1544 = vmor %vm1542, %vm1543
        %v1545 = vsel %vm1544, %v1536, %v1541
        %v1546 = vrsqrt.pop %v1422
        %v1547 = vmul.f32 %v1546, %v1422
        %v1548 = vmul.f32 %v1547, %v1546
        %v1549 = vmul.f32 0.5, %v1548
        %v1550 = vsub.f32 1.5, %v1549
        %v1551 = vmul.f32 %v1546, %v1550
        %vm1552 = vweird.f32 %v1422
        %vm1553 = vweird.f32 %v1546
        %vm1554 = vmor %vm1552, %vm1553
        %v1555 = vsel %vm1554, %v1546, %v1551
        %v1556 = vrsqrt.pop %v1423
        %v1557 = vmul.f32 %v1556, %v1423
        %v1558 = vmul.f32 %v1557, %v1556
        %v1559 = vmul.f32 0.5, %v1558
        %v1560 = vsub.f32 1.5, %v1559
        %v1561 = vmul.f32 %v1556, %v1560
        %vm1562 = vweird.f32 %v1423
        %vm1563 = vweird.f32 %v1556
        %vm1564 = vmor %vm1562, %vm1563
        %v1565 = vsel %vm1564, %v1556, %v1561
        %v1566 = vrsqrt.pop %v1424
        %v1567 = vmul.f32 %v1566, %v1424
        %v1568 = vmul.f32 %v1567, %v1566
        %v1569 = vmul.f32 0.5, %v1568
        %v1570 = vsub.f32 1.5, %v1569
        %v1571 = vmul.f32 %v1566, %v1570
        %vm1572 = vweird.f32 %v1424
        %vm1573 = vweird.f32 %v1566
        %vm1574 = vmor %vm1572, %vm1573
        %v1575 = vsel %vm1574, %v1566, %v1571
        %v1576 = vrsqrt.pop %v1425
        %v1577 = vmul.f32 %v1576, %v1425
        %v1578 = vmul.f32 %v1577, %v1576
        %v1579 = vmul.f32 0.5, %v1578
        %v1580 = vsub.f32 1.5, %v1579
        %v1581 = vmul.f32 %v1576, %v1580
        %vm1582 = vweird.f32 %v1425
        %vm1583 = vweird.f32 %v1576
        %vm1584 = vmor %vm1582, %vm1583
        %v1585 = vsel %vm1584, %v1576, %v1581
        %v1586 = vmul.f32 %v1330, %v1435
        %v1587 = vmul.f32 %v1331, %v1445
        %v1588 = vmul.f32 %v1332, %v1455
        %v1589 = vmul.f32 %v1333, %v1465
        %v1590 = vmul.f32 %v1334, %v1475
        %v1591 = vmul.f32 %v1335, %v1485
        %v1592 = vmul.f32 %v1336, %v1495
        %v1593 = vmul.f32 %v1337, %v1505
        %v1594 = vmul.f32 %v1338, %v1515
        %v1595 = vmul.f32 %v1339, %v1525
        %v1596 = vmul.f32 %v1340, %v1535
        %v1597 = vmul.f32 %v1341, %v1545
        %v1598 = vmul.f32 %v1342, %v1555
        %v1599 = vmul.f32 %v1343, %v1565
        %v1600 = vmul.f32 %v1344, %v1575
        %v1601 = vmul.f32 %v1345, %v1585
        %v1602 = vld [vmem:[%s4 + $0x38] sm:$0xff]
        %v1603 = vld [vmem:[%s4 + $0x40] sm:$0xff]
        %v1605 = vsel %vm1198, %v1586, 0
        %v1608 = vsel %vm1198, %v1587, 0
        %v1611 = vsel %vm1198, %v1588, 0
        %v1614 = vsel %vm1198, %v1589, 0
        %v1617 = vsel %vm1198, %v1590, 0
        %v1620 = vsel %vm1198, %v1591, 0
        %v1623 = vsel %vm1198, %v1592, 0
        %v1626 = vsel %vm1198, %v1593, 0
        %v1629 = vsel %vm1198, %v1594, 0
        %v1632 = vsel %vm1198, %v1595, 0
        %v1635 = vsel %vm1198, %v1596, 0
        %v1638 = vsel %vm1198, %v1597, 0
        %v1641 = vsel %vm1198, %v1598, 0
        %v1644 = vsel %vm1198, %v1599, 0
        %v1647 = vsel %vm1198, %v1600, 0
        %v1650 = vsel %vm1198, %v1601, 0
        %1652 = vmatpush.msra.mxu0 0.0
        %1653 = vmatpush.msra.mxu0 0.0
        %1654 = vmatpush.msra.mxu0 0.0
        %1655 = vmatpush.msra.mxu0 0.0
        %1656 = vmatpush.msra.mxu0 0.0
        %1657 = vmatpush.msra.mxu0 0.0
        %1658 = vmatpush.msra.mxu0 0.0
        %1659 = vmatpush.msra.mxu0 0.0
        %1660 = vmatpush.msra.mxu0 0.0
        %1661 = vmatpush.msra.mxu0 0.0
        %1662 = vmatpush.msra.mxu0 0.0
        %1663 = vmatpush.msra.mxu0 0.0
        %1664 = vmatpush.msra.mxu0 0.0
        %1665 = vmatpush.msra.mxu0 0.0
        %1666 = vmatpush.msra.mxu0 %v1603
        %1667 = vmatpush.msra.mxu0 %v1602
        %1668 = vmatmul.f32.gmra.mxu0 %v1605
        %v1669 = vpop.f32.mrf.mxu0
        %v1670 = vadd.f32 0.0, %v1669
        %1671 = vmatmul.f32.gmra.mxu0 %v1608
        %v1672 = vpop.f32.mrf.mxu0
        %v1673 = vadd.f32 0.0, %v1672
        %1674 = vmatmul.f32.gmra.mxu0 %v1611
        %v1675 = vpop.f32.mrf.mxu0
        %v1676 = vadd.f32 0.0, %v1675
        %1677 = vmatmul.f32.gmra.mxu0 %v1614
        %v1678 = vpop.f32.mrf.mxu0
        %v1679 = vadd.f32 0.0, %v1678
        %1680 = vmatmul.f32.gmra.mxu0 %v1617
        %v1681 = vpop.f32.mrf.mxu0
        %v1682 = vadd.f32 0.0, %v1681
        %1683 = vmatmul.f32.gmra.mxu0 %v1620
        %v1684 = vpop.f32.mrf.mxu0
        %v1685 = vadd.f32 0.0, %v1684
        %1686 = vmatmul.f32.gmra.mxu0 %v1623
        %v1687 = vpop.f32.mrf.mxu0
        %v1688 = vadd.f32 0.0, %v1687
        %1689 = vmatmul.f32.gmra.mxu0 %v1626
        %v1690 = vpop.f32.mrf.mxu0
        %v1691 = vadd.f32 0.0, %v1690
        %1692 = vmatmul.f32.gmra.mxu0 %v1629
        %v1693 = vpop.f32.mrf.mxu0
        %v1694 = vadd.f32 0.0, %v1693
        %1695 = vmatmul.f32.gmra.mxu0 %v1632
        %v1696 = vpop.f32.mrf.mxu0
        %v1697 = vadd.f32 0.0, %v1696
        %1698 = vmatmul.f32.gmra.mxu0 %v1635
        %v1699 = vpop.f32.mrf.mxu0
        %v1700 = vadd.f32 0.0, %v1699
        %1701 = vmatmul.f32.gmra.mxu0 %v1638
        %v1702 = vpop.f32.mrf.mxu0
        %v1703 = vadd.f32 0.0, %v1702
        %1704 = vmatmul.f32.gmra.mxu0 %v1641
        %v1705 = vpop.f32.mrf.mxu0
        %v1706 = vadd.f32 0.0, %v1705
        %1707 = vmatmul.f32.gmra.mxu0 %v1644
        %v1708 = vpop.f32.mrf.mxu0
        %v1709 = vadd.f32 0.0, %v1708
        %1710 = vmatmul.f32.gmra.mxu0 %v1647
        %v1711 = vpop.f32.mrf.mxu0
        %v1712 = vadd.f32 0.0, %v1711
        %1713 = vmatmul.f32.gmra.mxu0 %v1650
        %v1714 = vpop.f32.mrf.mxu0
        %v1715 = vadd.f32 0.0, %v1714
        %1716 = vdwg.mxu0
        %v1717 = vld [vmem:[%s4 + $0x48] sm:$0xff]
        %v1718 = vld [vmem:[%s4 + $0x50] sm:$0xff]
        %1719 = vmatpush.msra.mxu0 0.0
        %1720 = vmatpush.msra.mxu0 0.0
        %1721 = vmatpush.msra.mxu0 0.0
        %1722 = vmatpush.msra.mxu0 0.0
        %1723 = vmatpush.msra.mxu0 0.0
        %1724 = vmatpush.msra.mxu0 0.0
        %1725 = vmatpush.msra.mxu0 0.0
        %1726 = vmatpush.msra.mxu0 0.0
        %1727 = vmatpush.msra.mxu0 0.0
        %1728 = vmatpush.msra.mxu0 0.0
        %1729 = vmatpush.msra.mxu0 0.0
        %1730 = vmatpush.msra.mxu0 0.0
        %1731 = vmatpush.msra.mxu0 0.0
        %1732 = vmatpush.msra.mxu0 0.0
        %1733 = vmatpush.msra.mxu0 %v1718
        %1734 = vmatpush.msra.mxu0 %v1717
        %1735 = vmatmul.f32.gmra.mxu0 %v1605
        %v1736 = vpop.f32.mrf.mxu0
        %v1737 = vadd.f32 0.0, %v1736
        %1738 = vmatmul.f32.gmra.mxu0 %v1608
        %v1739 = vpop.f32.mrf.mxu0
        %v1740 = vadd.f32 0.0, %v1739
        %1741 = vmatmul.f32.gmra.mxu0 %v1611
        %v1742 = vpop.f32.mrf.mxu0
        %v1743 = vadd.f32 0.0, %v1742
        %1744 = vmatmul.f32.gmra.mxu0 %v1614
        %v1745 = vpop.f32.mrf.mxu0
        %v1746 = vadd.f32 0.0, %v1745
        %1747 = vmatmul.f32.gmra.mxu0 %v1617
        %v1748 = vpop.f32.mrf.mxu0
        %v1749 = vadd.f32 0.0, %v1748
        %1750 = vmatmul.f32.gmra.mxu0 %v1620
        %v1751 = vpop.f32.mrf.mxu0
        %v1752 = vadd.f32 0.0, %v1751
        %1753 = vmatmul.f32.gmra.mxu0 %v1623
        %v1754 = vpop.f32.mrf.mxu0
        %v1755 = vadd.f32 0.0, %v1754
        %1756 = vmatmul.f32.gmra.mxu0 %v1626
        %v1757 = vpop.f32.mrf.mxu0
        %v1758 = vadd.f32 0.0, %v1757
        %1759 = vmatmul.f32.gmra.mxu0 %v1629
        %v1760 = vpop.f32.mrf.mxu0
        %v1761 = vadd.f32 0.0, %v1760
        %1762 = vmatmul.f32.gmra.mxu0 %v1632
        %v1763 = vpop.f32.mrf.mxu0
        %v1764 = vadd.f32 0.0, %v1763
        %1765 = vmatmul.f32.gmra.mxu0 %v1635
        %v1766 = vpop.f32.mrf.mxu0
        %v1767 = vadd.f32 0.0, %v1766
        %1768 = vmatmul.f32.gmra.mxu0 %v1638
        %v1769 = vpop.f32.mrf.mxu0
        %v1770 = vadd.f32 0.0, %v1769
        %1771 = vmatmul.f32.gmra.mxu0 %v1641
        %v1772 = vpop.f32.mrf.mxu0
        %v1773 = vadd.f32 0.0, %v1772
        %1774 = vmatmul.f32.gmra.mxu0 %v1644
        %v1775 = vpop.f32.mrf.mxu0
        %v1776 = vadd.f32 0.0, %v1775
        %1777 = vmatmul.f32.gmra.mxu0 %v1647
        %v1778 = vpop.f32.mrf.mxu0
        %v1779 = vadd.f32 0.0, %v1778
        %1780 = vmatmul.f32.gmra.mxu0 %v1650
        %v1781 = vpop.f32.mrf.mxu0
        %v1782 = vadd.f32 0.0, %v1781
        %1783 = vdwg.mxu0
        %1784 = vmatpush.msra.mxu0 %v1782
        %1785 = vmatpush.msra.mxu0 %v1779
        %1786 = vmatpush.msra.mxu0 %v1776
        %1787 = vmatpush.msra.mxu0 %v1773
        %1788 = vmatpush.msra.mxu0 %v1770
        %1789 = vmatpush.msra.mxu0 %v1767
        %1790 = vmatpush.msra.mxu0 %v1764
        %1791 = vmatpush.msra.mxu0 %v1761
        %1792 = vmatpush.msra.mxu0 %v1758
        %1793 = vmatpush.msra.mxu0 %v1755
        %1794 = vmatpush.msra.mxu0 %v1752
        %1795 = vmatpush.msra.mxu0 %v1749
        %1796 = vmatpush.msra.mxu0 %v1746
        %1797 = vmatpush.msra.mxu0 %v1743
        %1798 = vmatpush.msra.mxu0 %v1740
        %1799 = vmatpush.msra.mxu0 %v1737
        %1800 = vmatmul.f32.gmra.mxu0 %v427
        %v1801 = vpop.f32.mrf.mxu0
        %v1802 = vadd.f32 0.0, %v1801
        %1803 = vmatmul.f32.gmra.mxu0 %v428
        %v1804 = vpop.f32.mrf.mxu0
        %v1805 = vadd.f32 0.0, %v1804
        %1806 = vmatmul.f32.gmra.mxu0 %v429
        %v1807 = vpop.f32.mrf.mxu0
        %v1808 = vadd.f32 0.0, %v1807
        %1809 = vmatmul.f32.gmra.mxu0 %v430
        %v1810 = vpop.f32.mrf.mxu0
        %v1811 = vadd.f32 0.0, %v1810
        %1812 = vmatmul.f32.gmra.mxu0 %v431
        %v1813 = vpop.f32.mrf.mxu0
        %v1814 = vadd.f32 0.0, %v1813
        %1815 = vmatmul.f32.gmra.mxu0 %v432
        %v1816 = vpop.f32.mrf.mxu0
        %v1817 = vadd.f32 0.0, %v1816
        %1818 = vmatmul.f32.gmra.mxu0 %v433
        %v1819 = vpop.f32.mrf.mxu0
        %v1820 = vadd.f32 0.0, %v1819
        %1821 = vmatmul.f32.gmra.mxu0 %v434
        %v1822 = vpop.f32.mrf.mxu0
        %v1823 = vadd.f32 0.0, %v1822
        %1824 = vmatmul.f32.gmra.mxu0 %v435
        %v1825 = vpop.f32.mrf.mxu0
        %v1826 = vadd.f32 0.0, %v1825
        %1827 = vmatmul.f32.gmra.mxu0 %v436
        %v1828 = vpop.f32.mrf.mxu0
        %v1829 = vadd.f32 0.0, %v1828
        %1830 = vmatmul.f32.gmra.mxu0 %v437
        %v1831 = vpop.f32.mrf.mxu0
        %v1832 = vadd.f32 0.0, %v1831
        %1833 = vmatmul.f32.gmra.mxu0 %v438
        %v1834 = vpop.f32.mrf.mxu0
        %v1835 = vadd.f32 0.0, %v1834
        %1836 = vmatmul.f32.gmra.mxu0 %v439
        %v1837 = vpop.f32.mrf.mxu0
        %v1838 = vadd.f32 0.0, %v1837
        %1839 = vmatmul.f32.gmra.mxu0 %v440
        %v1840 = vpop.f32.mrf.mxu0
        %v1841 = vadd.f32 0.0, %v1840
        %1842 = vmatmul.f32.gmra.mxu0 %v441
        %v1843 = vpop.f32.mrf.mxu0
        %v1844 = vadd.f32 0.0, %v1843
        %1845 = vmatmul.f32.gmra.mxu0 %v442
        %v1846 = vpop.f32.mrf.mxu0
        %v1847 = vadd.f32 0.0, %v1846
        %1848 = vmatmul.f32.gmra.mxu0 %v443
        %v1849 = vpop.f32.mrf.mxu0
        %v1850 = vadd.f32 0.0, %v1849
        %1851 = vmatmul.f32.gmra.mxu0 %v444
        %v1852 = vpop.f32.mrf.mxu0
        %v1853 = vadd.f32 0.0, %v1852
        %1854 = vmatmul.f32.gmra.mxu0 %v445
        %v1855 = vpop.f32.mrf.mxu0
        %v1856 = vadd.f32 0.0, %v1855
        %1857 = vmatmul.f32.gmra.mxu0 %v446
        %v1858 = vpop.f32.mrf.mxu0
        %v1859 = vadd.f32 0.0, %v1858
        %1860 = vmatmul.f32.gmra.mxu0 %v447
        %v1861 = vpop.f32.mrf.mxu0
        %v1862 = vadd.f32 0.0, %v1861
        %1863 = vmatmul.f32.gmra.mxu0 %v448
        %v1864 = vpop.f32.mrf.mxu0
        %v1865 = vadd.f32 0.0, %v1864
        %1866 = vmatmul.f32.gmra.mxu0 %v449
        %v1867 = vpop.f32.mrf.mxu0
        %v1868 = vadd.f32 0.0, %v1867
        %1869 = vmatmul.f32.gmra.mxu0 %v450
        %v1870 = vpop.f32.mrf.mxu0
        %v1871 = vadd.f32 0.0, %v1870
        %1872 = vmatmul.f32.gmra.mxu0 %v451
        %v1873 = vpop.f32.mrf.mxu0
        %v1874 = vadd.f32 0.0, %v1873
        %1875 = vmatmul.f32.gmra.mxu0 %v452
        %v1876 = vpop.f32.mrf.mxu0
        %v1877 = vadd.f32 0.0, %v1876
        %1878 = vmatmul.f32.gmra.mxu0 %v453
        %v1879 = vpop.f32.mrf.mxu0
        %v1880 = vadd.f32 0.0, %v1879
        %1881 = vmatmul.f32.gmra.mxu0 %v454
        %v1882 = vpop.f32.mrf.mxu0
        %v1883 = vadd.f32 0.0, %v1882
        %1884 = vmatmul.f32.gmra.mxu0 %v455
        %v1885 = vpop.f32.mrf.mxu0
        %v1886 = vadd.f32 0.0, %v1885
        %1887 = vmatmul.f32.gmra.mxu0 %v456
        %v1888 = vpop.f32.mrf.mxu0
        %v1889 = vadd.f32 0.0, %v1888
        %1890 = vmatmul.f32.gmra.mxu0 %v457
        %v1891 = vpop.f32.mrf.mxu0
        %v1892 = vadd.f32 0.0, %v1891
        %1893 = vmatmul.f32.gmra.mxu0 %v458
        %v1894 = vpop.f32.mrf.mxu0
        %v1895 = vadd.f32 0.0, %v1894
        %1896 = vdwg.mxu0
        %1897 = vmatpush.msra.mxu0 %v1715
        %1898 = vmatpush.msra.mxu0 %v1712
        %1899 = vmatpush.msra.mxu0 %v1709
        %1900 = vmatpush.msra.mxu0 %v1706
        %1901 = vmatpush.msra.mxu0 %v1703
        %1902 = vmatpush.msra.mxu0 %v1700
        %1903 = vmatpush.msra.mxu0 %v1697
        %1904 = vmatpush.msra.mxu0 %v1694
        %1905 = vmatpush.msra.mxu0 %v1691
        %1906 = vmatpush.msra.mxu0 %v1688
        %1907 = vmatpush.msra.mxu0 %v1685
        %1908 = vmatpush.msra.mxu0 %v1682
        %1909 = vmatpush.msra.mxu0 %v1679
        %1910 = vmatpush.msra.mxu0 %v1676
        %1911 = vmatpush.msra.mxu0 %v1673
        %1912 = vmatpush.msra.mxu0 %v1670
        %1913 = vmatmul.f32.gmra.mxu0 %v363
        %v1914 = vpop.f32.mrf.mxu0
        %v1915 = vadd.f32 %v1802, %v1914
        %1916 = vmatmul.f32.gmra.mxu0 %v364
        %v1917 = vpop.f32.mrf.mxu0
        %v1918 = vadd.f32 %v1805, %v1917
        %1919 = vmatmul.f32.gmra.mxu0 %v365
        %v1920 = vpop.f32.mrf.mxu0
        %v1921 = vadd.f32 %v1808, %v1920
        %1922 = vmatmul.f32.gmra.mxu0 %v366
        %v1923 = vpop.f32.mrf.mxu0
        %v1924 = vadd.f32 %v1811, %v1923
        %1925 = vmatmul.f32.gmra.mxu0 %v367
        %v1926 = vpop.f32.mrf.mxu0
        %v1927 = vadd.f32 %v1814, %v1926
        %1928 = vmatmul.f32.gmra.mxu0 %v368
        %v1929 = vpop.f32.mrf.mxu0
        %v1930 = vadd.f32 %v1817, %v1929
        %1931 = vmatmul.f32.gmra.mxu0 %v369
        %v1932 = vpop.f32.mrf.mxu0
        %v1933 = vadd.f32 %v1820, %v1932
        %1934 = vmatmul.f32.gmra.mxu0 %v370
        %v1935 = vpop.f32.mrf.mxu0
        %v1936 = vadd.f32 %v1823, %v1935
        %1937 = vmatmul.f32.gmra.mxu0 %v371
        %v1938 = vpop.f32.mrf.mxu0
        %v1939 = vadd.f32 %v1826, %v1938
        %1940 = vmatmul.f32.gmra.mxu0 %v372
        %v1941 = vpop.f32.mrf.mxu0
        %v1942 = vadd.f32 %v1829, %v1941
        %1943 = vmatmul.f32.gmra.mxu0 %v373
        %v1944 = vpop.f32.mrf.mxu0
        %v1945 = vadd.f32 %v1832, %v1944
        %1946 = vmatmul.f32.gmra.mxu0 %v374
        %v1947 = vpop.f32.mrf.mxu0
        %v1948 = vadd.f32 %v1835, %v1947
        %1949 = vmatmul.f32.gmra.mxu0 %v375
        %v1950 = vpop.f32.mrf.mxu0
        %v1951 = vadd.f32 %v1838, %v1950
        %1952 = vmatmul.f32.gmra.mxu0 %v376
        %v1953 = vpop.f32.mrf.mxu0
        %v1954 = vadd.f32 %v1841, %v1953
        %1955 = vmatmul.f32.gmra.mxu0 %v377
        %v1956 = vpop.f32.mrf.mxu0
        %v1957 = vadd.f32 %v1844, %v1956
        %1958 = vmatmul.f32.gmra.mxu0 %v378
        %v1959 = vpop.f32.mrf.mxu0
        %v1960 = vadd.f32 %v1847, %v1959
        %1961 = vmatmul.f32.gmra.mxu0 %v379
        %v1962 = vpop.f32.mrf.mxu0
        %v1963 = vadd.f32 %v1850, %v1962
        %1964 = vmatmul.f32.gmra.mxu0 %v380
        %v1965 = vpop.f32.mrf.mxu0
        %v1966 = vadd.f32 %v1853, %v1965
        %1967 = vmatmul.f32.gmra.mxu0 %v381
        %v1968 = vpop.f32.mrf.mxu0
        %v1969 = vadd.f32 %v1856, %v1968
        %1970 = vmatmul.f32.gmra.mxu0 %v382
        %v1971 = vpop.f32.mrf.mxu0
        %v1972 = vadd.f32 %v1859, %v1971
        %1973 = vmatmul.f32.gmra.mxu0 %v383
        %v1974 = vpop.f32.mrf.mxu0
        %v1975 = vadd.f32 %v1862, %v1974
        %1976 = vmatmul.f32.gmra.mxu0 %v384
        %v1977 = vpop.f32.mrf.mxu0
        %v1978 = vadd.f32 %v1865, %v1977
        %1979 = vmatmul.f32.gmra.mxu0 %v385
        %v1980 = vpop.f32.mrf.mxu0
        %v1981 = vadd.f32 %v1868, %v1980
        %1982 = vmatmul.f32.gmra.mxu0 %v386
        %v1983 = vpop.f32.mrf.mxu0
        %v1984 = vadd.f32 %v1871, %v1983
        %1985 = vmatmul.f32.gmra.mxu0 %v387
        %v1986 = vpop.f32.mrf.mxu0
        %v1987 = vadd.f32 %v1874, %v1986
        %1988 = vmatmul.f32.gmra.mxu0 %v388
        %v1989 = vpop.f32.mrf.mxu0
        %v1990 = vadd.f32 %v1877, %v1989
        %1991 = vmatmul.f32.gmra.mxu0 %v389
        %v1992 = vpop.f32.mrf.mxu0
        %v1993 = vadd.f32 %v1880, %v1992
        %1994 = vmatmul.f32.gmra.mxu0 %v390
        %v1995 = vpop.f32.mrf.mxu0
        %v1996 = vadd.f32 %v1883, %v1995
        %1997 = vmatmul.f32.gmra.mxu0 %v391
        %v1998 = vpop.f32.mrf.mxu0
        %v1999 = vadd.f32 %v1886, %v1998
        %2000 = vmatmul.f32.gmra.mxu0 %v392
        %v2001 = vpop.f32.mrf.mxu0
        %v2002 = vadd.f32 %v1889, %v2001
        %2003 = vmatmul.f32.gmra.mxu0 %v393
        %v2004 = vpop.f32.mrf.mxu0
        %v2005 = vadd.f32 %v1892, %v2004
        %2006 = vmatmul.f32.gmra.mxu0 %v394
        %v2007 = vpop.f32.mrf.mxu0
        %v2008 = vadd.f32 %v1895, %v2007
        %2009 = vdwg.mxu0
        %v2010 = vld [vmem:[%s4 + $0x58] sm:$0xf]
        %v2012 = vsel %vm704, %v2010, 0
        %2014 = vmatpush.msra.mxu0 0.0
        %2015 = vmatpush.msra.mxu0 0.0
        %2016 = vmatpush.msra.mxu0 0.0
        %2017 = vmatpush.msra.mxu0 0.0
        %2018 = vmatpush.msra.mxu0 0.0
        %2019 = vmatpush.msra.mxu0 0.0
        %2020 = vmatpush.msra.mxu0 0.0
        %2021 = vmatpush.msra.mxu0 0.0
        %2022 = vmatpush.msra.mxu0 0.0
        %2023 = vmatpush.msra.mxu0 0.0
        %2024 = vmatpush.msra.mxu0 0.0
        %2025 = vmatpush.msra.mxu0 0.0
        %2026 = vmatpush.msra.mxu0 0.0
        %2027 = vmatpush.msra.mxu0 0.0
        %2028 = vmatpush.msra.mxu0 0.0
        %2029 = vmatpush.msra.mxu0 %v2012
        %2030 = vmatmul.f32.gmra.mxu0 %v609
        %v2031 = vpop.f32.mrf.mxu0
        %v2032 = vadd.f32 0.0, %v2031
        %2033 = vmatmul.f32.gmra.mxu0 %v612
        %v2034 = vpop.f32.mrf.mxu0
        %v2035 = vadd.f32 0.0, %v2034
        %2036 = vmatmul.f32.gmra.mxu0 %v615
        %v2037 = vpop.f32.mrf.mxu0
        %v2038 = vadd.f32 0.0, %v2037
        %2039 = vmatmul.f32.gmra.mxu0 %v618
        %v2040 = vpop.f32.mrf.mxu0
        %v2041 = vadd.f32 0.0, %v2040
        %2042 = vmatmul.f32.gmra.mxu0 %v621
        %v2043 = vpop.f32.mrf.mxu0
        %v2044 = vadd.f32 0.0, %v2043
        %2045 = vmatmul.f32.gmra.mxu0 %v624
        %v2046 = vpop.f32.mrf.mxu0
        %v2047 = vadd.f32 0.0, %v2046
        %2048 = vmatmul.f32.gmra.mxu0 %v627
        %v2049 = vpop.f32.mrf.mxu0
        %v2050 = vadd.f32 0.0, %v2049
        %2051 = vmatmul.f32.gmra.mxu0 %v630
        %v2052 = vpop.f32.mrf.mxu0
        %v2053 = vadd.f32 0.0, %v2052
        %2054 = vmatmul.f32.gmra.mxu0 %v633
        %v2055 = vpop.f32.mrf.mxu0
        %v2056 = vadd.f32 0.0, %v2055
        %2057 = vmatmul.f32.gmra.mxu0 %v636
        %v2058 = vpop.f32.mrf.mxu0
        %v2059 = vadd.f32 0.0, %v2058
        %2060 = vmatmul.f32.gmra.mxu0 %v639
        %v2061 = vpop.f32.mrf.mxu0
        %v2062 = vadd.f32 0.0, %v2061
        %2063 = vmatmul.f32.gmra.mxu0 %v642
        %v2064 = vpop.f32.mrf.mxu0
        %v2065 = vadd.f32 0.0, %v2064
        %2066 = vmatmul.f32.gmra.mxu0 %v645
        %v2067 = vpop.f32.mrf.mxu0
        %v2068 = vadd.f32 0.0, %v2067
        %2069 = vmatmul.f32.gmra.mxu0 %v648
        %v2070 = vpop.f32.mrf.mxu0
        %v2071 = vadd.f32 0.0, %v2070
        %2072 = vmatmul.f32.gmra.mxu0 %v651
        %v2073 = vpop.f32.mrf.mxu0
        %v2074 = vadd.f32 0.0, %v2073
        %2075 = vmatmul.f32.gmra.mxu0 %v654
        %v2076 = vpop.f32.mrf.mxu0
        %v2077 = vadd.f32 0.0, %v2076
        %2078 = vmatmul.f32.gmra.mxu0 %v657
        %v2079 = vpop.f32.mrf.mxu0
        %v2080 = vadd.f32 0.0, %v2079
        %2081 = vmatmul.f32.gmra.mxu0 %v660
        %v2082 = vpop.f32.mrf.mxu0
        %v2083 = vadd.f32 0.0, %v2082
        %2084 = vmatmul.f32.gmra.mxu0 %v663
        %v2085 = vpop.f32.mrf.mxu0
        %v2086 = vadd.f32 0.0, %v2085
        %2087 = vmatmul.f32.gmra.mxu0 %v666
        %v2088 = vpop.f32.mrf.mxu0
        %v2089 = vadd.f32 0.0, %v2088
        %2090 = vmatmul.f32.gmra.mxu0 %v669
        %v2091 = vpop.f32.mrf.mxu0
        %v2092 = vadd.f32 0.0, %v2091
        %2093 = vmatmul.f32.gmra.mxu0 %v672
        %v2094 = vpop.f32.mrf.mxu0
        %v2095 = vadd.f32 0.0, %v2094
        %2096 = vmatmul.f32.gmra.mxu0 %v675
        %v2097 = vpop.f32.mrf.mxu0
        %v2098 = vadd.f32 0.0, %v2097
        %2099 = vmatmul.f32.gmra.mxu0 %v678
        %v2100 = vpop.f32.mrf.mxu0
        %v2101 = vadd.f32 0.0, %v2100
        %2102 = vmatmul.f32.gmra.mxu0 %v681
        %v2103 = vpop.f32.mrf.mxu0
        %v2104 = vadd.f32 0.0, %v2103
        %2105 = vmatmul.f32.gmra.mxu0 %v684
        %v2106 = vpop.f32.mrf.mxu0
        %v2107 = vadd.f32 0.0, %v2106
        %2108 = vmatmul.f32.gmra.mxu0 %v687
        %v2109 = vpop.f32.mrf.mxu0
        %v2110 = vadd.f32 0.0, %v2109
        %2111 = vmatmul.f32.gmra.mxu0 %v690
        %v2112 = vpop.f32.mrf.mxu0
        %v2113 = vadd.f32 0.0, %v2112
        %2114 = vmatmul.f32.gmra.mxu0 %v693
        %v2115 = vpop.f32.mrf.mxu0
        %v2116 = vadd.f32 0.0, %v2115
        %2117 = vmatmul.f32.gmra.mxu0 %v696
        %v2118 = vpop.f32.mrf.mxu0
        %v2119 = vadd.f32 0.0, %v2118
        %2120 = vmatmul.f32.gmra.mxu0 %v699
        %v2121 = vpop.f32.mrf.mxu0
        %v2122 = vadd.f32 0.0, %v2121
        %2123 = vmatmul.f32.gmra.mxu0 %v702
        %v2124 = vpop.f32.mrf.mxu0
        %v2125 = vadd.f32 0.0, %v2124
        %2126 = vdwg.mxu0
        %v2127 = vadd.f32 %v1915, %v2032
        %v2128 = vadd.f32 %v1918, %v2035
        %v2129 = vadd.f32 %v1921, %v2038
        %v2130 = vadd.f32 %v1924, %v2041
        %v2131 = vadd.f32 %v1927, %v2044
        %v2132 = vadd.f32 %v1930, %v2047
        %v2133 = vadd.f32 %v1933, %v2050
        %v2134 = vadd.f32 %v1936, %v2053
        %v2135 = vadd.f32 %v1939, %v2056
        %v2136 = vadd.f32 %v1942, %v2059
        %v2137 = vadd.f32 %v1945, %v2062
        %v2138 = vadd.f32 %v1948, %v2065
        %v2139 = vadd.f32 %v1951, %v2068
        %v2140 = vadd.f32 %v1954, %v2071
        %v2141 = vadd.f32 %v1957, %v2074
        %v2142 = vadd.f32 %v1960, %v2077
        %v2143 = vadd.f32 %v1963, %v2080
        %v2144 = vadd.f32 %v1966, %v2083
        %v2145 = vadd.f32 %v1969, %v2086
        %v2146 = vadd.f32 %v1972, %v2089
        %v2147 = vadd.f32 %v1975, %v2092
        %v2148 = vadd.f32 %v1978, %v2095
        %v2149 = vadd.f32 %v1981, %v2098
        %v2150 = vadd.f32 %v1984, %v2101
        %v2151 = vadd.f32 %v1987, %v2104
        %v2152 = vadd.f32 %v1990, %v2107
        %v2153 = vadd.f32 %v1993, %v2110
        %v2154 = vadd.f32 %v1996, %v2113
        %v2155 = vadd.f32 %v1999, %v2116
        %v2156 = vadd.f32 %v2002, %v2119
        %v2157 = vadd.f32 %v2005, %v2122
        %v2158 = vadd.f32 %v2008, %v2125
        %v2159 = vld [vmem:[%s4 + $0x60] sm:$0x1]
        %v2160 = vperm.slane %v2159, 0
        %v2161 = vadd.f32 %v2127, %v2160
        %v2162 = vadd.f32 %v2128, %v2160
        %v2163 = vadd.f32 %v2129, %v2160
        %v2164 = vadd.f32 %v2130, %v2160
        %v2165 = vadd.f32 %v2131, %v2160
        %v2166 = vadd.f32 %v2132, %v2160
        %v2167 = vadd.f32 %v2133, %v2160
        %v2168 = vadd.f32 %v2134, %v2160
        %v2169 = vadd.f32 %v2135, %v2160
        %v2170 = vadd.f32 %v2136, %v2160
        %v2171 = vadd.f32 %v2137, %v2160
        %v2172 = vadd.f32 %v2138, %v2160
        %v2173 = vadd.f32 %v2139, %v2160
        %v2174 = vadd.f32 %v2140, %v2160
        %v2175 = vadd.f32 %v2141, %v2160
        %v2176 = vadd.f32 %v2142, %v2160
        %v2177 = vadd.f32 %v2143, %v2160
        %v2178 = vadd.f32 %v2144, %v2160
        %v2179 = vadd.f32 %v2145, %v2160
        %v2180 = vadd.f32 %v2146, %v2160
        %v2181 = vadd.f32 %v2147, %v2160
        %v2182 = vadd.f32 %v2148, %v2160
        %v2183 = vadd.f32 %v2149, %v2160
        %v2184 = vadd.f32 %v2150, %v2160
        %v2185 = vadd.f32 %v2151, %v2160
        %v2186 = vadd.f32 %v2152, %v2160
        %v2187 = vadd.f32 %v2153, %v2160
        %v2188 = vadd.f32 %v2154, %v2160
        %v2189 = vadd.f32 %v2155, %v2160
        %v2190 = vadd.f32 %v2156, %v2160
        %v2191 = vadd.f32 %v2157, %v2160
        %v2192 = vadd.f32 %v2158, %v2160
        %v2193 = vmax.f32 %v2161, 0.0
        %v2194 = vmax.f32 %v2162, 0.0
        %v2195 = vmax.f32 %v2163, 0.0
        %v2196 = vmax.f32 %v2164, 0.0
        %v2197 = vmax.f32 %v2165, 0.0
        %v2198 = vmax.f32 %v2166, 0.0
        %v2199 = vmax.f32 %v2167, 0.0
        %v2200 = vmax.f32 %v2168, 0.0
        %v2201 = vmax.f32 %v2169, 0.0
        %v2202 = vmax.f32 %v2170, 0.0
        %v2203 = vmax.f32 %v2171, 0.0
        %v2204 = vmax.f32 %v2172, 0.0
        %v2205 = vmax.f32 %v2173, 0.0
        %v2206 = vmax.f32 %v2174, 0.0
        %v2207 = vmax.f32 %v2175, 0.0
        %v2208 = vmax.f32 %v2176, 0.0
        %v2209 = vmax.f32 %v2177, 0.0
        %v2210 = vmax.f32 %v2178, 0.0
        %v2211 = vmax.f32 %v2179, 0.0
        %v2212 = vmax.f32 %v2180, 0.0
        %v2213 = vmax.f32 %v2181, 0.0
        %v2214 = vmax.f32 %v2182, 0.0
        %v2215 = vmax.f32 %v2183, 0.0
        %v2216 = vmax.f32 %v2184, 0.0
        %v2217 = vmax.f32 %v2185, 0.0
        %v2218 = vmax.f32 %v2186, 0.0
        %v2219 = vmax.f32 %v2187, 0.0
        %v2220 = vmax.f32 %v2188, 0.0
        %v2221 = vmax.f32 %v2189, 0.0
        %v2222 = vmax.f32 %v2190, 0.0
        %v2223 = vmax.f32 %v2191, 0.0
        %v2224 = vmax.f32 %v2192, 0.0
        %v2225 = vld [vmem:[%s4 + $0x68] sm:$0xff]
        %v2226 = vld [vmem:[%s4 + $0x70] sm:$0xff]
        %2227 = vmatpush.msra.mxu0 0.0
        %2228 = vmatpush.msra.mxu0 0.0
        %2229 = vmatpush.msra.mxu0 0.0
        %2230 = vmatpush.msra.mxu0 0.0
        %2231 = vmatpush.msra.mxu0 0.0
        %2232 = vmatpush.msra.mxu0 0.0
        %2233 = vmatpush.msra.mxu0 0.0
        %2234 = vmatpush.msra.mxu0 0.0
        %2235 = vmatpush.msra.mxu0 0.0
        %2236 = vmatpush.msra.mxu0 0.0
        %2237 = vmatpush.msra.mxu0 0.0
        %2238 = vmatpush.msra.mxu0 0.0
        %2239 = vmatpush.msra.mxu0 0.0
        %2240 = vmatpush.msra.mxu0 0.0
        %2241 = vmatpush.msra.mxu0 %v2226
        %2242 = vmatpush.msra.mxu0 %v2225
        %2243 = vmatmul.f32.gmra.mxu0 %v1605
        %v2244 = vpop.f32.mrf.mxu0
        %v2245 = vadd.f32 0.0, %v2244
        %2246 = vmatmul.f32.gmra.mxu0 %v1608
        %v2247 = vpop.f32.mrf.mxu0
        %v2248 = vadd.f32 0.0, %v2247
        %2249 = vmatmul.f32.gmra.mxu0 %v1611
        %v2250 = vpop.f32.mrf.mxu0
        %v2251 = vadd.f32 0.0, %v2250
        %2252 = vmatmul.f32.gmra.mxu0 %v1614
        %v2253 = vpop.f32.mrf.mxu0
        %v2254 = vadd.f32 0.0, %v2253
        %2255 = vmatmul.f32.gmra.mxu0 %v1617
        %v2256 = vpop.f32.mrf.mxu0
        %v2257 = vadd.f32 0.0, %v2256
        %2258 = vmatmul.f32.gmra.mxu0 %v1620
        %v2259 = vpop.f32.mrf.mxu0
        %v2260 = vadd.f32 0.0, %v2259
        %2261 = vmatmul.f32.gmra.mxu0 %v1623
        %v2262 = vpop.f32.mrf.mxu0
        %v2263 = vadd.f32 0.0, %v2262
        %2264 = vmatmul.f32.gmra.mxu0 %v1626
        %v2265 = vpop.f32.mrf.mxu0
        %v2266 = vadd.f32 0.0, %v2265
        %2267 = vmatmul.f32.gmra.mxu0 %v1629
        %v2268 = vpop.f32.mrf.mxu0
        %v2269 = vadd.f32 0.0, %v2268
        %2270 = vmatmul.f32.gmra.mxu0 %v1632
        %v2271 = vpop.f32.mrf.mxu0
        %v2272 = vadd.f32 0.0, %v2271
        %2273 = vmatmul.f32.gmra.mxu0 %v1635
        %v2274 = vpop.f32.mrf.mxu0
        %v2275 = vadd.f32 0.0, %v2274
        %2276 = vmatmul.f32.gmra.mxu0 %v1638
        %v2277 = vpop.f32.mrf.mxu0
        %v2278 = vadd.f32 0.0, %v2277
        %2279 = vmatmul.f32.gmra.mxu0 %v1641
        %v2280 = vpop.f32.mrf.mxu0
        %v2281 = vadd.f32 0.0, %v2280
        %2282 = vmatmul.f32.gmra.mxu0 %v1644
        %v2283 = vpop.f32.mrf.mxu0
        %v2284 = vadd.f32 0.0, %v2283
        %2285 = vmatmul.f32.gmra.mxu0 %v1647
        %v2286 = vpop.f32.mrf.mxu0
        %v2287 = vadd.f32 0.0, %v2286
        %2288 = vmatmul.f32.gmra.mxu0 %v1650
        %v2289 = vpop.f32.mrf.mxu0
        %v2290 = vadd.f32 0.0, %v2289
        %2291 = vdwg.mxu0
        %v2292 = vld [vmem:[%s4 + $0x78] sm:$0xff]
        %v2294 = vsel %vm492, %v2193, 0
        %v2297 = vsel %vm492, %v2194, 0
        %v2300 = vsel %vm492, %v2195, 0
        %v2303 = vsel %vm492, %v2196, 0
        %v2306 = vsel %vm492, %v2197, 0
        %v2309 = vsel %vm492, %v2198, 0
        %v2312 = vsel %vm492, %v2199, 0
        %v2315 = vsel %vm492, %v2200, 0
        %v2318 = vsel %vm492, %v2201, 0
        %v2321 = vsel %vm492, %v2202, 0
        %v2324 = vsel %vm492, %v2203, 0
        %v2327 = vsel %vm492, %v2204, 0
        %v2330 = vsel %vm492, %v2205, 0
        %v2333 = vsel %vm492, %v2206, 0
        %v2336 = vsel %vm492, %v2207, 0
        %v2339 = vsel %vm492, %v2208, 0
        %v2342 = vsel %vm492, %v2209, 0
        %v2345 = vsel %vm492, %v2210, 0
        %v2348 = vsel %vm492, %v2211, 0
        %v2351 = vsel %vm492, %v2212, 0
        %v2354 = vsel %vm492, %v2213, 0
        %v2357 = vsel %vm492, %v2214, 0
        %v2360 = vsel %vm492, %v2215, 0
        %v2363 = vsel %vm492, %v2216, 0
        %v2366 = vsel %vm492, %v2217, 0
        %v2369 = vsel %vm492, %v2218, 0
        %v2372 = vsel %vm492, %v2219, 0
        %v2375 = vsel %vm492, %v2220, 0
        %v2378 = vsel %vm492, %v2221, 0
        %v2381 = vsel %vm492, %v2222, 0
        %v2384 = vsel %vm492, %v2223, 0
        %v2387 = vsel %vm492, %v2224, 0
        %2389 = vmatpush.msra.mxu0 0.0
        %2390 = vmatpush.msra.mxu0 0.0
        %2391 = vmatpush.msra.mxu0 0.0
        %2392 = vmatpush.msra.mxu0 0.0
        %2393 = vmatpush.msra.mxu0 0.0
        %2394 = vmatpush.msra.mxu0 0.0
        %2395 = vmatpush.msra.mxu0 0.0
        %2396 = vmatpush.msra.mxu0 0.0
        %2397 = vmatpush.msra.mxu0 0.0
        %2398 = vmatpush.msra.mxu0 0.0
        %2399 = vmatpush.msra.mxu0 0.0
        %2400 = vmatpush.msra.mxu0 0.0
        %2401 = vmatpush.msra.mxu0 0.0
        %2402 = vmatpush.msra.mxu0 0.0
        %2403 = vmatpush.msra.mxu0 0.0
        %2404 = vmatpush.msra.mxu0 %v2292
        %2405 = vmatmul.f32.gmra.mxu0 %v2294
        %v2406 = vpop.f32.mrf.mxu0
        %v2407 = vadd.f32 0.0, %v2406
        %2408 = vmatmul.f32.gmra.mxu0 %v2297
        %v2409 = vpop.f32.mrf.mxu0
        %v2410 = vadd.f32 0.0, %v2409
        %2411 = vmatmul.f32.gmra.mxu0 %v2300
        %v2412 = vpop.f32.mrf.mxu0
        %v2413 = vadd.f32 0.0, %v2412
        %2414 = vmatmul.f32.gmra.mxu0 %v2303
        %v2415 = vpop.f32.mrf.mxu0
        %v2416 = vadd.f32 0.0, %v2415
        %2417 = vmatmul.f32.gmra.mxu0 %v2306
        %v2418 = vpop.f32.mrf.mxu0
        %v2419 = vadd.f32 0.0, %v2418
        %2420 = vmatmul.f32.gmra.mxu0 %v2309
        %v2421 = vpop.f32.mrf.mxu0
        %v2422 = vadd.f32 0.0, %v2421
        %2423 = vmatmul.f32.gmra.mxu0 %v2312
        %v2424 = vpop.f32.mrf.mxu0
        %v2425 = vadd.f32 0.0, %v2424
        %2426 = vmatmul.f32.gmra.mxu0 %v2315
        %v2427 = vpop.f32.mrf.mxu0
        %v2428 = vadd.f32 0.0, %v2427
        %2429 = vmatmul.f32.gmra.mxu0 %v2318
        %v2430 = vpop.f32.mrf.mxu0
        %v2431 = vadd.f32 0.0, %v2430
        %2432 = vmatmul.f32.gmra.mxu0 %v2321
        %v2433 = vpop.f32.mrf.mxu0
        %v2434 = vadd.f32 0.0, %v2433
        %2435 = vmatmul.f32.gmra.mxu0 %v2324
        %v2436 = vpop.f32.mrf.mxu0
        %v2437 = vadd.f32 0.0, %v2436
        %2438 = vmatmul.f32.gmra.mxu0 %v2327
        %v2439 = vpop.f32.mrf.mxu0
        %v2440 = vadd.f32 0.0, %v2439
        %2441 = vmatmul.f32.gmra.mxu0 %v2330
        %v2442 = vpop.f32.mrf.mxu0
        %v2443 = vadd.f32 0.0, %v2442
        %2444 = vmatmul.f32.gmra.mxu0 %v2333
        %v2445 = vpop.f32.mrf.mxu0
        %v2446 = vadd.f32 0.0, %v2445
        %2447 = vmatmul.f32.gmra.mxu0 %v2336
        %v2448 = vpop.f32.mrf.mxu0
        %v2449 = vadd.f32 0.0, %v2448
        %2450 = vmatmul.f32.gmra.mxu0 %v2339
        %v2451 = vpop.f32.mrf.mxu0
        %v2452 = vadd.f32 0.0, %v2451
        %2453 = vmatmul.f32.gmra.mxu0 %v2342
        %v2454 = vpop.f32.mrf.mxu0
        %v2455 = vadd.f32 0.0, %v2454
        %2456 = vmatmul.f32.gmra.mxu0 %v2345
        %v2457 = vpop.f32.mrf.mxu0
        %v2458 = vadd.f32 0.0, %v2457
        %2459 = vmatmul.f32.gmra.mxu0 %v2348
        %v2460 = vpop.f32.mrf.mxu0
        %v2461 = vadd.f32 0.0, %v2460
        %2462 = vmatmul.f32.gmra.mxu0 %v2351
        %v2463 = vpop.f32.mrf.mxu0
        %v2464 = vadd.f32 0.0, %v2463
        %2465 = vmatmul.f32.gmra.mxu0 %v2354
        %v2466 = vpop.f32.mrf.mxu0
        %v2467 = vadd.f32 0.0, %v2466
        %2468 = vmatmul.f32.gmra.mxu0 %v2357
        %v2469 = vpop.f32.mrf.mxu0
        %v2470 = vadd.f32 0.0, %v2469
        %2471 = vmatmul.f32.gmra.mxu0 %v2360
        %v2472 = vpop.f32.mrf.mxu0
        %v2473 = vadd.f32 0.0, %v2472
        %2474 = vmatmul.f32.gmra.mxu0 %v2363
        %v2475 = vpop.f32.mrf.mxu0
        %v2476 = vadd.f32 0.0, %v2475
        %2477 = vmatmul.f32.gmra.mxu0 %v2366
        %v2478 = vpop.f32.mrf.mxu0
        %v2479 = vadd.f32 0.0, %v2478
        %2480 = vmatmul.f32.gmra.mxu0 %v2369
        %v2481 = vpop.f32.mrf.mxu0
        %v2482 = vadd.f32 0.0, %v2481
        %2483 = vmatmul.f32.gmra.mxu0 %v2372
        %v2484 = vpop.f32.mrf.mxu0
        %v2485 = vadd.f32 0.0, %v2484
        %2486 = vmatmul.f32.gmra.mxu0 %v2375
        %v2487 = vpop.f32.mrf.mxu0
        %v2488 = vadd.f32 0.0, %v2487
        %2489 = vmatmul.f32.gmra.mxu0 %v2378
        %v2490 = vpop.f32.mrf.mxu0
        %v2491 = vadd.f32 0.0, %v2490
        %2492 = vmatmul.f32.gmra.mxu0 %v2381
        %v2493 = vpop.f32.mrf.mxu0
        %v2494 = vadd.f32 0.0, %v2493
        %2495 = vmatmul.f32.gmra.mxu0 %v2384
        %v2496 = vpop.f32.mrf.mxu0
        %v2497 = vadd.f32 0.0, %v2496
        %2498 = vmatmul.f32.gmra.mxu0 %v2387
        %v2499 = vpop.f32.mrf.mxu0
        %v2500 = vadd.f32 0.0, %v2499
        %2501 = vdwg.mxu0
        %2502 = vmatpush.msra.mxu0 %v2290
        %2503 = vmatpush.msra.mxu0 %v2287
        %2504 = vmatpush.msra.mxu0 %v2284
        %2505 = vmatpush.msra.mxu0 %v2281
        %2506 = vmatpush.msra.mxu0 %v2278
        %2507 = vmatpush.msra.mxu0 %v2275
        %2508 = vmatpush.msra.mxu0 %v2272
        %2509 = vmatpush.msra.mxu0 %v2269
        %2510 = vmatpush.msra.mxu0 %v2266
        %2511 = vmatpush.msra.mxu0 %v2263
        %2512 = vmatpush.msra.mxu0 %v2260
        %2513 = vmatpush.msra.mxu0 %v2257
        %2514 = vmatpush.msra.mxu0 %v2254
        %2515 = vmatpush.msra.mxu0 %v2251
        %2516 = vmatpush.msra.mxu0 %v2248
        %2517 = vmatpush.msra.mxu0 %v2245
        %2518 = vmatmul.f32.gmra.mxu0 %v363
        %v2519 = vpop.f32.mrf.mxu0
        %v2520 = vadd.f32 %v2407, %v2519
        %2521 = vmatmul.f32.gmra.mxu0 %v364
        %v2522 = vpop.f32.mrf.mxu0
        %v2523 = vadd.f32 %v2410, %v2522
        %2524 = vmatmul.f32.gmra.mxu0 %v365
        %v2525 = vpop.f32.mrf.mxu0
        %v2526 = vadd.f32 %v2413, %v2525
        %2527 = vmatmul.f32.gmra.mxu0 %v366
        %v2528 = vpop.f32.mrf.mxu0
        %v2529 = vadd.f32 %v2416, %v2528
        %2530 = vmatmul.f32.gmra.mxu0 %v367
        %v2531 = vpop.f32.mrf.mxu0
        %v2532 = vadd.f32 %v2419, %v2531
        %2533 = vmatmul.f32.gmra.mxu0 %v368
        %v2534 = vpop.f32.mrf.mxu0
        %v2535 = vadd.f32 %v2422, %v2534
        %2536 = vmatmul.f32.gmra.mxu0 %v369
        %v2537 = vpop.f32.mrf.mxu0
        %v2538 = vadd.f32 %v2425, %v2537
        %2539 = vmatmul.f32.gmra.mxu0 %v370
        %v2540 = vpop.f32.mrf.mxu0
        %v2541 = vadd.f32 %v2428, %v2540
        %2542 = vmatmul.f32.gmra.mxu0 %v371
        %v2543 = vpop.f32.mrf.mxu0
        %v2544 = vadd.f32 %v2431, %v2543
        %2545 = vmatmul.f32.gmra.mxu0 %v372
        %v2546 = vpop.f32.mrf.mxu0
        %v2547 = vadd.f32 %v2434, %v2546
        %2548 = vmatmul.f32.gmra.mxu0 %v373
        %v2549 = vpop.f32.mrf.mxu0
        %v2550 = vadd.f32 %v2437, %v2549
        %2551 = vmatmul.f32.gmra.mxu0 %v374
        %v2552 = vpop.f32.mrf.mxu0
        %v2553 = vadd.f32 %v2440, %v2552
        %2554 = vmatmul.f32.gmra.mxu0 %v375
        %v2555 = vpop.f32.mrf.mxu0
        %v2556 = vadd.f32 %v2443, %v2555
        %2557 = vmatmul.f32.gmra.mxu0 %v376
        %v2558 = vpop.f32.mrf.mxu0
        %v2559 = vadd.f32 %v2446, %v2558
        %2560 = vmatmul.f32.gmra.mxu0 %v377
        %v2561 = vpop.f32.mrf.mxu0
        %v2562 = vadd.f32 %v2449, %v2561
        %2563 = vmatmul.f32.gmra.mxu0 %v378
        %v2564 = vpop.f32.mrf.mxu0
        %v2565 = vadd.f32 %v2452, %v2564
        %2566 = vmatmul.f32.gmra.mxu0 %v379
        %v2567 = vpop.f32.mrf.mxu0
        %v2568 = vadd.f32 %v2455, %v2567
        %2569 = vmatmul.f32.gmra.mxu0 %v380
        %v2570 = vpop.f32.mrf.mxu0
        %v2571 = vadd.f32 %v2458, %v2570
        %2572 = vmatmul.f32.gmra.mxu0 %v381
        %v2573 = vpop.f32.mrf.mxu0
        %v2574 = vadd.f32 %v2461, %v2573
        %2575 = vmatmul.f32.gmra.mxu0 %v382
        %v2576 = vpop.f32.mrf.mxu0
        %v2577 = vadd.f32 %v2464, %v2576
        %2578 = vmatmul.f32.gmra.mxu0 %v383
        %v2579 = vpop.f32.mrf.mxu0
        %v2580 = vadd.f32 %v2467, %v2579
        %2581 = vmatmul.f32.gmra.mxu0 %v384
        %v2582 = vpop.f32.mrf.mxu0
        %v2583 = vadd.f32 %v2470, %v2582
        %2584 = vmatmul.f32.gmra.mxu0 %v385
        %v2585 = vpop.f32.mrf.mxu0
        %v2586 = vadd.f32 %v2473, %v2585
        %2587 = vmatmul.f32.gmra.mxu0 %v386
        %v2588 = vpop.f32.mrf.mxu0
        %v2589 = vadd.f32 %v2476, %v2588
        %2590 = vmatmul.f32.gmra.mxu0 %v387
        %v2591 = vpop.f32.mrf.mxu0
        %v2592 = vadd.f32 %v2479, %v2591
        %2593 = vmatmul.f32.gmra.mxu0 %v388
        %v2594 = vpop.f32.mrf.mxu0
        %v2595 = vadd.f32 %v2482, %v2594
        %2596 = vmatmul.f32.gmra.mxu0 %v389
        %v2597 = vpop.f32.mrf.mxu0
        %v2598 = vadd.f32 %v2485, %v2597
        %2599 = vmatmul.f32.gmra.mxu0 %v390
        %v2600 = vpop.f32.mrf.mxu0
        %v2601 = vadd.f32 %v2488, %v2600
        %2602 = vmatmul.f32.gmra.mxu0 %v391
        %v2603 = vpop.f32.mrf.mxu0
        %v2604 = vadd.f32 %v2491, %v2603
        %2605 = vmatmul.f32.gmra.mxu0 %v392
        %v2606 = vpop.f32.mrf.mxu0
        %v2607 = vadd.f32 %v2494, %v2606
        %2608 = vmatmul.f32.gmra.mxu0 %v393
        %v2609 = vpop.f32.mrf.mxu0
        %v2610 = vadd.f32 %v2497, %v2609
        %2611 = vmatmul.f32.gmra.mxu0 %v394
        %v2612 = vpop.f32.mrf.mxu0
        %v2613 = vadd.f32 %v2500, %v2612
        %2614 = vdwg.mxu0
        %v2615 = vld [vmem:[%s4 + $0x80] sm:$0x1]
        %v2616 = vperm.slane %v2615, 0
        %v2617 = vadd.f32 %v2520, %v2616
        %v2618 = vadd.f32 %v2523, %v2616
        %v2619 = vadd.f32 %v2526, %v2616
        %v2620 = vadd.f32 %v2529, %v2616
        %v2621 = vadd.f32 %v2532, %v2616
        %v2622 = vadd.f32 %v2535, %v2616
        %v2623 = vadd.f32 %v2538, %v2616
        %v2624 = vadd.f32 %v2541, %v2616
        %v2625 = vadd.f32 %v2544, %v2616
        %v2626 = vadd.f32 %v2547, %v2616
        %v2627 = vadd.f32 %v2550, %v2616
        %v2628 = vadd.f32 %v2553, %v2616
        %v2629 = vadd.f32 %v2556, %v2616
        %v2630 = vadd.f32 %v2559, %v2616
        %v2631 = vadd.f32 %v2562, %v2616
        %v2632 = vadd.f32 %v2565, %v2616
        %v2633 = vadd.f32 %v2568, %v2616
        %v2634 = vadd.f32 %v2571, %v2616
        %v2635 = vadd.f32 %v2574, %v2616
        %v2636 = vadd.f32 %v2577, %v2616
        %v2637 = vadd.f32 %v2580, %v2616
        %v2638 = vadd.f32 %v2583, %v2616
        %v2639 = vadd.f32 %v2586, %v2616
        %v2640 = vadd.f32 %v2589, %v2616
        %v2641 = vadd.f32 %v2592, %v2616
        %v2642 = vadd.f32 %v2595, %v2616
        %v2643 = vadd.f32 %v2598, %v2616
        %v2644 = vadd.f32 %v2601, %v2616
        %v2645 = vadd.f32 %v2604, %v2616
        %v2646 = vadd.f32 %v2607, %v2616
        %v2647 = vadd.f32 %v2610, %v2616
        %v2648 = vadd.f32 %v2613, %v2616
        %v2649 = vmax.f32 %v2617, 0.0
        %v2650 = vmax.f32 %v2618, 0.0
        %v2651 = vmax.f32 %v2619, 0.0
        %v2652 = vmax.f32 %v2620, 0.0
        %v2653 = vmax.f32 %v2621, 0.0
        %v2654 = vmax.f32 %v2622, 0.0
        %v2655 = vmax.f32 %v2623, 0.0
        %v2656 = vmax.f32 %v2624, 0.0
        %v2657 = vmax.f32 %v2625, 0.0
        %v2658 = vmax.f32 %v2626, 0.0
        %v2659 = vmax.f32 %v2627, 0.0
        %v2660 = vmax.f32 %v2628, 0.0
        %v2661 = vmax.f32 %v2629, 0.0
        %v2662 = vmax.f32 %v2630, 0.0
        %v2663 = vmax.f32 %v2631, 0.0
        %v2664 = vmax.f32 %v2632, 0.0
        %v2665 = vmax.f32 %v2633, 0.0
        %v2666 = vmax.f32 %v2634, 0.0
        %v2667 = vmax.f32 %v2635, 0.0
        %v2668 = vmax.f32 %v2636, 0.0
        %v2669 = vmax.f32 %v2637, 0.0
        %v2670 = vmax.f32 %v2638, 0.0
        %v2671 = vmax.f32 %v2639, 0.0
        %v2672 = vmax.f32 %v2640, 0.0
        %v2673 = vmax.f32 %v2641, 0.0
        %v2674 = vmax.f32 %v2642, 0.0
        %v2675 = vmax.f32 %v2643, 0.0
        %v2676 = vmax.f32 %v2644, 0.0
        %v2677 = vmax.f32 %v2645, 0.0
        %v2678 = vmax.f32 %v2646, 0.0
        %v2679 = vmax.f32 %v2647, 0.0
        %v2680 = vmax.f32 %v2648, 0.0
        %2681 = vmatpush.msra.mxu0 %v2664
        %2682 = vmatpush.msra.mxu0 %v2663
        %2683 = vmatpush.msra.mxu0 %v2662
        %2684 = vmatpush.msra.mxu0 %v2661
        %2685 = vmatpush.msra.mxu0 %v2660
        %2686 = vmatpush.msra.mxu0 %v2659
        %2687 = vmatpush.msra.mxu0 %v2658
        %2688 = vmatpush.msra.mxu0 %v2657
        %2689 = vmatpush.msra.mxu0 %v2656
        %2690 = vmatpush.msra.mxu0 %v2655
        %2691 = vmatpush.msra.mxu0 %v2654
        %2692 = vmatpush.msra.mxu0 %v2653
        %2693 = vmatpush.msra.mxu0 %v2652
        %2694 = vmatpush.msra.mxu0 %v2651
        %2695 = vmatpush.msra.mxu0 %v2650
        %2696 = vmatpush.msra.mxu0 %v2649
        %2697 = vmatmul.f32.gmra.mxu0 %v459
        %v2698 = vpop.f32.mrf.mxu0
        %v2699 = vadd.f32 0.0, %v2698
        %2700 = vmatmul.f32.gmra.mxu0 %v461
        %v2701 = vpop.f32.mrf.mxu0
        %v2702 = vadd.f32 0.0, %v2701
        %2703 = vmatmul.f32.gmra.mxu0 %v463
        %v2704 = vpop.f32.mrf.mxu0
        %v2705 = vadd.f32 0.0, %v2704
        %2706 = vmatmul.f32.gmra.mxu0 %v465
        %v2707 = vpop.f32.mrf.mxu0
        %v2708 = vadd.f32 0.0, %v2707
        %2709 = vmatmul.f32.gmra.mxu0 %v467
        %v2710 = vpop.f32.mrf.mxu0
        %v2711 = vadd.f32 0.0, %v2710
        %2712 = vmatmul.f32.gmra.mxu0 %v469
        %v2713 = vpop.f32.mrf.mxu0
        %v2714 = vadd.f32 0.0, %v2713
        %2715 = vmatmul.f32.gmra.mxu0 %v471
        %v2716 = vpop.f32.mrf.mxu0
        %v2717 = vadd.f32 0.0, %v2716
        %2718 = vmatmul.f32.gmra.mxu0 %v473
        %v2719 = vpop.f32.mrf.mxu0
        %v2720 = vadd.f32 0.0, %v2719
        %2721 = vmatmul.f32.gmra.mxu0 %v475
        %v2722 = vpop.f32.mrf.mxu0
        %v2723 = vadd.f32 0.0, %v2722
        %2724 = vmatmul.f32.gmra.mxu0 %v477
        %v2725 = vpop.f32.mrf.mxu0
        %v2726 = vadd.f32 0.0, %v2725
        %2727 = vmatmul.f32.gmra.mxu0 %v479
        %v2728 = vpop.f32.mrf.mxu0
        %v2729 = vadd.f32 0.0, %v2728
        %2730 = vmatmul.f32.gmra.mxu0 %v481
        %v2731 = vpop.f32.mrf.mxu0
        %v2732 = vadd.f32 0.0, %v2731
        %2733 = vmatmul.f32.gmra.mxu0 %v483
        %v2734 = vpop.f32.mrf.mxu0
        %v2735 = vadd.f32 0.0, %v2734
        %2736 = vmatmul.f32.gmra.mxu0 %v485
        %v2737 = vpop.f32.mrf.mxu0
        %v2738 = vadd.f32 0.0, %v2737
        %2739 = vmatmul.f32.gmra.mxu0 %v487
        %v2740 = vpop.f32.mrf.mxu0
        %v2741 = vadd.f32 0.0, %v2740
        %2742 = vmatmul.f32.gmra.mxu0 %v489
        %v2743 = vpop.f32.mrf.mxu0
        %v2744 = vadd.f32 0.0, %v2743
        %2745 = vdwg.mxu0
        %2746 = vmatpush.msra.mxu0 %v2680
        %2747 = vmatpush.msra.mxu0 %v2679
        %2748 = vmatpush.msra.mxu0 %v2678
        %2749 = vmatpush.msra.mxu0 %v2677
        %2750 = vmatpush.msra.mxu0 %v2676
        %2751 = vmatpush.msra.mxu0 %v2675
        %2752 = vmatpush.msra.mxu0 %v2674
        %2753 = vmatpush.msra.mxu0 %v2673
        %2754 = vmatpush.msra.mxu0 %v2672
        %2755 = vmatpush.msra.mxu0 %v2671
        %2756 = vmatpush.msra.mxu0 %v2670
        %2757 = vmatpush.msra.mxu0 %v2669
        %2758 = vmatpush.msra.mxu0 %v2668
        %2759 = vmatpush.msra.mxu0 %v2667
        %2760 = vmatpush.msra.mxu0 %v2666
        %2761 = vmatpush.msra.mxu0 %v2665
        %2762 = vmatmul.f32.gmra.mxu0 %v460
        %v2763 = vpop.f32.mrf.mxu0
        %v2764 = vadd.f32 %v2699, %v2763
        %2765 = vmatmul.f32.gmra.mxu0 %v462
        %v2766 = vpop.f32.mrf.mxu0
        %v2767 = vadd.f32 %v2702, %v2766
        %2768 = vmatmul.f32.gmra.mxu0 %v464
        %v2769 = vpop.f32.mrf.mxu0
        %v2770 = vadd.f32 %v2705, %v2769
        %2771 = vmatmul.f32.gmra.mxu0 %v466
        %v2772 = vpop.f32.mrf.mxu0
        %v2773 = vadd.f32 %v2708, %v2772
        %2774 = vmatmul.f32.gmra.mxu0 %v468
        %v2775 = vpop.f32.mrf.mxu0
        %v2776 = vadd.f32 %v2711, %v2775
        %2777 = vmatmul.f32.gmra.mxu0 %v470
        %v2778 = vpop.f32.mrf.mxu0
        %v2779 = vadd.f32 %v2714, %v2778
        %2780 = vmatmul.f32.gmra.mxu0 %v472
        %v2781 = vpop.f32.mrf.mxu0
        %v2782 = vadd.f32 %v2717, %v2781
        %2783 = vmatmul.f32.gmra.mxu0 %v474
        %v2784 = vpop.f32.mrf.mxu0
        %v2785 = vadd.f32 %v2720, %v2784
        %2786 = vmatmul.f32.gmra.mxu0 %v476
        %v2787 = vpop.f32.mrf.mxu0
        %v2788 = vadd.f32 %v2723, %v2787
        %2789 = vmatmul.f32.gmra.mxu0 %v478
        %v2790 = vpop.f32.mrf.mxu0
        %v2791 = vadd.f32 %v2726, %v2790
        %2792 = vmatmul.f32.gmra.mxu0 %v480
        %v2793 = vpop.f32.mrf.mxu0
        %v2794 = vadd.f32 %v2729, %v2793
        %2795 = vmatmul.f32.gmra.mxu0 %v482
        %v2796 = vpop.f32.mrf.mxu0
        %v2797 = vadd.f32 %v2732, %v2796
        %2798 = vmatmul.f32.gmra.mxu0 %v484
        %v2799 = vpop.f32.mrf.mxu0
        %v2800 = vadd.f32 %v2735, %v2799
        %2801 = vmatmul.f32.gmra.mxu0 %v486
        %v2802 = vpop.f32.mrf.mxu0
        %v2803 = vadd.f32 %v2738, %v2802
        %2804 = vmatmul.f32.gmra.mxu0 %v488
        %v2805 = vpop.f32.mrf.mxu0
        %v2806 = vadd.f32 %v2741, %v2805
        %2807 = vmatmul.f32.gmra.mxu0 %v490
        %v2808 = vpop.f32.mrf.mxu0
        %v2809 = vadd.f32 %v2744, %v2808
        %2810 = vdwg.mxu0
        %v2811 = vld [vmem:[%s4 + $0x88] sm:$0xff]
        %v2812 = vld [vmem:[%s4 + $0x90] sm:$0xff]
        %v2813 = vld [vmem:[%s4 + $0x98] sm:$0xff]
        %v2814 = vld [vmem:[%s4 + $0xa0] sm:$0xff]
        %2815 = vmatpush.msra.mxu0 0.0
        %2816 = vmatpush.msra.mxu0 0.0
        %2817 = vmatpush.msra.mxu0 0.0
        %2818 = vmatpush.msra.mxu0 0.0
        %2819 = vmatpush.msra.mxu0 0.0
        %2820 = vmatpush.msra.mxu0 0.0
        %2821 = vmatpush.msra.mxu0 0.0
        %2822 = vmatpush.msra.mxu0 0.0
        %2823 = vmatpush.msra.mxu0 0.0
        %2824 = vmatpush.msra.mxu0 0.0
        %2825 = vmatpush.msra.mxu0 0.0
        %2826 = vmatpush.msra.mxu0 0.0
        %2827 = vmatpush.msra.mxu0 0.0
        %2828 = vmatpush.msra.mxu0 0.0
        %2829 = vmatpush.msra.mxu0 %v2814
        %2830 = vmatpush.msra.mxu0 %v2813
        %2831 = vmatmul.f32.gmra.mxu0 %v1605
        %v2832 = vpop.f32.mrf.mxu0
        %v2833 = vadd.f32 0.0, %v2832
        %2834 = vmatmul.f32.gmra.mxu0 %v1608
        %v2835 = vpop.f32.mrf.mxu0
        %v2836 = vadd.f32 0.0, %v2835
        %2837 = vmatmul.f32.gmra.mxu0 %v1611
        %v2838 = vpop.f32.mrf.mxu0
        %v2839 = vadd.f32 0.0, %v2838
        %2840 = vmatmul.f32.gmra.mxu0 %v1614
        %v2841 = vpop.f32.mrf.mxu0
        %v2842 = vadd.f32 0.0, %v2841
        %2843 = vmatmul.f32.gmra.mxu0 %v1617
        %v2844 = vpop.f32.mrf.mxu0
        %v2845 = vadd.f32 0.0, %v2844
        %2846 = vmatmul.f32.gmra.mxu0 %v1620
        %v2847 = vpop.f32.mrf.mxu0
        %v2848 = vadd.f32 0.0, %v2847
        %2849 = vmatmul.f32.gmra.mxu0 %v1623
        %v2850 = vpop.f32.mrf.mxu0
        %v2851 = vadd.f32 0.0, %v2850
        %2852 = vmatmul.f32.gmra.mxu0 %v1626
        %v2853 = vpop.f32.mrf.mxu0
        %v2854 = vadd.f32 0.0, %v2853
        %2855 = vmatmul.f32.gmra.mxu0 %v1629
        %v2856 = vpop.f32.mrf.mxu0
        %v2857 = vadd.f32 0.0, %v2856
        %2858 = vmatmul.f32.gmra.mxu0 %v1632
        %v2859 = vpop.f32.mrf.mxu0
        %v2860 = vadd.f32 0.0, %v2859
        %2861 = vmatmul.f32.gmra.mxu0 %v1635
        %v2862 = vpop.f32.mrf.mxu0
        %v2863 = vadd.f32 0.0, %v2862
        %2864 = vmatmul.f32.gmra.mxu0 %v1638
        %v2865 = vpop.f32.mrf.mxu0
        %v2866 = vadd.f32 0.0, %v2865
        %2867 = vmatmul.f32.gmra.mxu0 %v1641
        %v2868 = vpop.f32.mrf.mxu0
        %v2869 = vadd.f32 0.0, %v2868
        %2870 = vmatmul.f32.gmra.mxu0 %v1644
        %v2871 = vpop.f32.mrf.mxu0
        %v2872 = vadd.f32 0.0, %v2871
        %2873 = vmatmul.f32.gmra.mxu0 %v1647
        %v2874 = vpop.f32.mrf.mxu0
        %v2875 = vadd.f32 0.0, %v2874
        %2876 = vmatmul.f32.gmra.mxu0 %v1650
        %v2877 = vpop.f32.mrf.mxu0
        %v2878 = vadd.f32 0.0, %v2877
        %2879 = vdwg.mxu0
        %v2881 = vsel %vm1198, %v2764, 0
        %v2884 = vsel %vm1198, %v2767, 0
        %v2887 = vsel %vm1198, %v2770, 0
        %v2890 = vsel %vm1198, %v2773, 0
        %v2893 = vsel %vm1198, %v2776, 0
        %v2896 = vsel %vm1198, %v2779, 0
        %v2899 = vsel %vm1198, %v2782, 0
        %v2902 = vsel %vm1198, %v2785, 0
        %v2905 = vsel %vm1198, %v2788, 0
        %v2908 = vsel %vm1198, %v2791, 0
        %v2911 = vsel %vm1198, %v2794, 0
        %v2914 = vsel %vm1198, %v2797, 0
        %v2917 = vsel %vm1198, %v2800, 0
        %v2920 = vsel %vm1198, %v2803, 0
        %v2923 = vsel %vm1198, %v2806, 0
        %v2926 = vsel %vm1198, %v2809, 0
        %2928 = vmatpush.msra.mxu0 0.0
        %2929 = vmatpush.msra.mxu0 0.0
        %2930 = vmatpush.msra.mxu0 0.0
        %2931 = vmatpush.msra.mxu0 0.0
        %2932 = vmatpush.msra.mxu0 0.0
        %2933 = vmatpush.msra.mxu0 0.0
        %2934 = vmatpush.msra.mxu0 0.0
        %2935 = vmatpush.msra.mxu0 0.0
        %2936 = vmatpush.msra.mxu0 0.0
        %2937 = vmatpush.msra.mxu0 0.0
        %2938 = vmatpush.msra.mxu0 0.0
        %2939 = vmatpush.msra.mxu0 0.0
        %2940 = vmatpush.msra.mxu0 0.0
        %2941 = vmatpush.msra.mxu0 0.0
        %2942 = vmatpush.msra.mxu0 %v2812
        %2943 = vmatpush.msra.mxu0 %v2811
        %2944 = vmatmul.f32.gmra.mxu0 %v2881
        %v2945 = vpop.f32.mrf.mxu0
        %v2946 = vadd.f32 %v2833, %v2945
        %2947 = vmatmul.f32.gmra.mxu0 %v2884
        %v2948 = vpop.f32.mrf.mxu0
        %v2949 = vadd.f32 %v2836, %v2948
        %2950 = vmatmul.f32.gmra.mxu0 %v2887
        %v2951 = vpop.f32.mrf.mxu0
        %v2952 = vadd.f32 %v2839, %v2951
        %2953 = vmatmul.f32.gmra.mxu0 %v2890
        %v2954 = vpop.f32.mrf.mxu0
        %v2955 = vadd.f32 %v2842, %v2954
        %2956 = vmatmul.f32.gmra.mxu0 %v2893
        %v2957 = vpop.f32.mrf.mxu0
        %v2958 = vadd.f32 %v2845, %v2957
        %2959 = vmatmul.f32.gmra.mxu0 %v2896
        %v2960 = vpop.f32.mrf.mxu0
        %v2961 = vadd.f32 %v2848, %v2960
        %2962 = vmatmul.f32.gmra.mxu0 %v2899
        %v2963 = vpop.f32.mrf.mxu0
        %v2964 = vadd.f32 %v2851, %v2963
        %2965 = vmatmul.f32.gmra.mxu0 %v2902
        %v2966 = vpop.f32.mrf.mxu0
        %v2967 = vadd.f32 %v2854, %v2966
        %2968 = vmatmul.f32.gmra.mxu0 %v2905
        %v2969 = vpop.f32.mrf.mxu0
        %v2970 = vadd.f32 %v2857, %v2969
        %2971 = vmatmul.f32.gmra.mxu0 %v2908
        %v2972 = vpop.f32.mrf.mxu0
        %v2973 = vadd.f32 %v2860, %v2972
        %2974 = vmatmul.f32.gmra.mxu0 %v2911
        %v2975 = vpop.f32.mrf.mxu0
        %v2976 = vadd.f32 %v2863, %v2975
        %2977 = vmatmul.f32.gmra.mxu0 %v2914
        %v2978 = vpop.f32.mrf.mxu0
        %v2979 = vadd.f32 %v2866, %v2978
        %2980 = vmatmul.f32.gmra.mxu0 %v2917
        %v2981 = vpop.f32.mrf.mxu0
        %v2982 = vadd.f32 %v2869, %v2981
        %2983 = vmatmul.f32.gmra.mxu0 %v2920
        %v2984 = vpop.f32.mrf.mxu0
        %v2985 = vadd.f32 %v2872, %v2984
        %2986 = vmatmul.f32.gmra.mxu0 %v2923
        %v2987 = vpop.f32.mrf.mxu0
        %v2988 = vadd.f32 %v2875, %v2987
        %2989 = vmatmul.f32.gmra.mxu0 %v2926
        %v2990 = vpop.f32.mrf.mxu0
        %v2991 = vadd.f32 %v2878, %v2990
        %2992 = vdwg.mxu0
        %v2993 = vld [vmem:[%s4 + $0xa8] sm:$0x1]
        %v2994 = vperm.slane %v2993, 0
        %v2995 = vadd.f32 %v2946, %v2994
        %v2996 = vadd.f32 %v2949, %v2994
        %v2997 = vadd.f32 %v2952, %v2994
        %v2998 = vadd.f32 %v2955, %v2994
        %v2999 = vadd.f32 %v2958, %v2994
        %v3000 = vadd.f32 %v2961, %v2994
        %v3001 = vadd.f32 %v2964, %v2994
        %v3002 = vadd.f32 %v2967, %v2994
        %v3003 = vadd.f32 %v2970, %v2994
        %v3004 = vadd.f32 %v2973, %v2994
        %v3005 = vadd.f32 %v2976, %v2994
        %v3006 = vadd.f32 %v2979, %v2994
        %v3007 = vadd.f32 %v2982, %v2994
        %v3008 = vadd.f32 %v2985, %v2994
        %v3009 = vadd.f32 %v2988, %v2994
        %v3010 = vadd.f32 %v2991, %v2994
        %v3011 = vmax.f32 %v2995, 0.0
        %v3012 = vmax.f32 %v2996, 0.0
        %v3013 = vmax.f32 %v2997, 0.0
        %v3014 = vmax.f32 %v2998, 0.0
        %v3015 = vmax.f32 %v2999, 0.0
        %v3016 = vmax.f32 %v3000, 0.0
        %v3017 = vmax.f32 %v3001, 0.0
        %v3018 = vmax.f32 %v3002, 0.0
        %v3019 = vmax.f32 %v3003, 0.0
        %v3020 = vmax.f32 %v3004, 0.0
        %v3021 = vmax.f32 %v3005, 0.0
        %v3022 = vmax.f32 %v3006, 0.0
        %v3023 = vmax.f32 %v3007, 0.0
        %v3024 = vmax.f32 %v3008, 0.0
        %v3025 = vmax.f32 %v3009, 0.0
        %v3026 = vmax.f32 %v3010, 0.0
        %v3027 = vmul.f32 %v3011, %v3011
        %v3028 = vmul.f32 %v3012, %v3012
        %v3029 = vmul.f32 %v3013, %v3013
        %v3030 = vmul.f32 %v3014, %v3014
        %v3031 = vmul.f32 %v3015, %v3015
        %v3032 = vmul.f32 %v3016, %v3016
        %v3033 = vmul.f32 %v3017, %v3017
        %v3034 = vmul.f32 %v3018, %v3018
        %v3035 = vmul.f32 %v3019, %v3019
        %v3036 = vmul.f32 %v3020, %v3020
        %v3037 = vmul.f32 %v3021, %v3021
        %v3038 = vmul.f32 %v3022, %v3022
        %v3039 = vmul.f32 %v3023, %v3023
        %v3040 = vmul.f32 %v3024, %v3024
        %v3041 = vmul.f32 %v3025, %v3025
        %v3042 = vmul.f32 %v3026, %v3026
        %v3043 = vsel %vm1198, %v3027, 0.0
        %3044 = vadd.xlane.f32.xlu0 %v3043
        %v3045 = vpop.xlane.xlu0 %3044
        %v3046 = vsel %vm1198, %v3028, 0.0
        %3047 = vadd.xlane.f32.xlu0 %v3046
        %v3048 = vpop.xlane.xlu0 %3047
        %v3049 = vsel %vm1198, %v3029, 0.0
        %3050 = vadd.xlane.f32.xlu0 %v3049
        %v3051 = vpop.xlane.xlu0 %3050
        %v3052 = vsel %vm1198, %v3030, 0.0
        %3053 = vadd.xlane.f32.xlu0 %v3052
        %v3054 = vpop.xlane.xlu0 %3053
        %v3055 = vsel %vm1198, %v3031, 0.0
        %3056 = vadd.xlane.f32.xlu0 %v3055
        %v3057 = vpop.xlane.xlu0 %3056
        %v3058 = vsel %vm1198, %v3032, 0.0
        %3059 = vadd.xlane.f32.xlu0 %v3058
        %v3060 = vpop.xlane.xlu0 %3059
        %v3061 = vsel %vm1198, %v3033, 0.0
        %3062 = vadd.xlane.f32.xlu0 %v3061
        %v3063 = vpop.xlane.xlu0 %3062
        %v3064 = vsel %vm1198, %v3034, 0.0
        %3065 = vadd.xlane.f32.xlu0 %v3064
        %v3066 = vpop.xlane.xlu0 %3065
        %v3067 = vsel %vm1198, %v3035, 0.0
        %3068 = vadd.xlane.f32.xlu0 %v3067
        %v3069 = vpop.xlane.xlu0 %3068
        %v3070 = vsel %vm1198, %v3036, 0.0
        %3071 = vadd.xlane.f32.xlu0 %v3070
        %v3072 = vpop.xlane.xlu0 %3071
        %v3073 = vsel %vm1198, %v3037, 0.0
        %3074 = vadd.xlane.f32.xlu0 %v3073
        %v3075 = vpop.xlane.xlu0 %3074
        %v3076 = vsel %vm1198, %v3038, 0.0
        %3077 = vadd.xlane.f32.xlu0 %v3076
        %v3078 = vpop.xlane.xlu0 %3077
        %v3079 = vsel %vm1198, %v3039, 0.0
        %3080 = vadd.xlane.f32.xlu0 %v3079
        %v3081 = vpop.xlane.xlu0 %3080
        %v3082 = vsel %vm1198, %v3040, 0.0
        %3083 = vadd.xlane.f32.xlu0 %v3082
        %v3084 = vpop.xlane.xlu0 %3083
        %v3085 = vsel %vm1198, %v3041, 0.0
        %3086 = vadd.xlane.f32.xlu0 %v3085
        %v3087 = vpop.xlane.xlu0 %3086
        %v3088 = vsel %vm1198, %v3042, 0.0
        %3089 = vadd.xlane.f32.xlu0 %v3088
        %v3090 = vpop.xlane.xlu0 %3089
        %v3091 = vmax.f32 %v3045, 1e-24
        %v3092 = vmax.f32 %v3048, 1e-24
        %v3093 = vmax.f32 %v3051, 1e-24
        %v3094 = vmax.f32 %v3054, 1e-24
        %v3095 = vmax.f32 %v3057, 1e-24
        %v3096 = vmax.f32 %v3060, 1e-24
        %v3097 = vmax.f32 %v3063, 1e-24
        %v3098 = vmax.f32 %v3066, 1e-24
        %v3099 = vmax.f32 %v3069, 1e-24
        %v3100 = vmax.f32 %v3072, 1e-24
        %v3101 = vmax.f32 %v3075, 1e-24
        %v3102 = vmax.f32 %v3078, 1e-24
        %v3103 = vmax.f32 %v3081, 1e-24
        %v3104 = vmax.f32 %v3084, 1e-24
        %v3105 = vmax.f32 %v3087, 1e-24
        %v3106 = vmax.f32 %v3090, 1e-24
        %v3107 = vrsqrt.pop %v3091
        %v3108 = vmul.f32 %v3107, %v3091
        %v3109 = vmul.f32 %v3108, %v3107
        %v3110 = vmul.f32 0.5, %v3109
        %v3111 = vsub.f32 1.5, %v3110
        %v3112 = vmul.f32 %v3107, %v3111
        %vm3113 = vweird.f32 %v3091
        %vm3114 = vweird.f32 %v3107
        %vm3115 = vmor %vm3113, %vm3114
        %v3116 = vsel %vm3115, %v3107, %v3112
        %v3117 = vrsqrt.pop %v3092
        %v3118 = vmul.f32 %v3117, %v3092
        %v3119 = vmul.f32 %v3118, %v3117
        %v3120 = vmul.f32 0.5, %v3119
        %v3121 = vsub.f32 1.5, %v3120
        %v3122 = vmul.f32 %v3117, %v3121
        %vm3123 = vweird.f32 %v3092
        %vm3124 = vweird.f32 %v3117
        %vm3125 = vmor %vm3123, %vm3124
        %v3126 = vsel %vm3125, %v3117, %v3122
        %v3127 = vrsqrt.pop %v3093
        %v3128 = vmul.f32 %v3127, %v3093
        %v3129 = vmul.f32 %v3128, %v3127
        %v3130 = vmul.f32 0.5, %v3129
        %v3131 = vsub.f32 1.5, %v3130
        %v3132 = vmul.f32 %v3127, %v3131
        %vm3133 = vweird.f32 %v3093
        %vm3134 = vweird.f32 %v3127
        %vm3135 = vmor %vm3133, %vm3134
        %v3136 = vsel %vm3135, %v3127, %v3132
        %v3137 = vrsqrt.pop %v3094
        %v3138 = vmul.f32 %v3137, %v3094
        %v3139 = vmul.f32 %v3138, %v3137
        %v3140 = vmul.f32 0.5, %v3139
        %v3141 = vsub.f32 1.5, %v3140
        %v3142 = vmul.f32 %v3137, %v3141
        %vm3143 = vweird.f32 %v3094
        %vm3144 = vweird.f32 %v3137
        %vm3145 = vmor %vm3143, %vm3144
        %v3146 = vsel %vm3145, %v3137, %v3142
        %v3147 = vrsqrt.pop %v3095
        %v3148 = vmul.f32 %v3147, %v3095
        %v3149 = vmul.f32 %v3148, %v3147
        %v3150 = vmul.f32 0.5, %v3149
        %v3151 = vsub.f32 1.5, %v3150
        %v3152 = vmul.f32 %v3147, %v3151
        %vm3153 = vweird.f32 %v3095
        %vm3154 = vweird.f32 %v3147
        %vm3155 = vmor %vm3153, %vm3154
        %v3156 = vsel %vm3155, %v3147, %v3152
        %v3157 = vrsqrt.pop %v3096
        %v3158 = vmul.f32 %v3157, %v3096
        %v3159 = vmul.f32 %v3158, %v3157
        %v3160 = vmul.f32 0.5, %v3159
        %v3161 = vsub.f32 1.5, %v3160
        %v3162 = vmul.f32 %v3157, %v3161
        %vm3163 = vweird.f32 %v3096
        %vm3164 = vweird.f32 %v3157
        %vm3165 = vmor %vm3163, %vm3164
        %v3166 = vsel %vm3165, %v3157, %v3162
        %v3167 = vrsqrt.pop %v3097
        %v3168 = vmul.f32 %v3167, %v3097
        %v3169 = vmul.f32 %v3168, %v3167
        %v3170 = vmul.f32 0.5, %v3169
        %v3171 = vsub.f32 1.5, %v3170
        %v3172 = vmul.f32 %v3167, %v3171
        %vm3173 = vweird.f32 %v3097
        %vm3174 = vweird.f32 %v3167
        %vm3175 = vmor %vm3173, %vm3174
        %v3176 = vsel %vm3175, %v3167, %v3172
        %v3177 = vrsqrt.pop %v3098
        %v3178 = vmul.f32 %v3177, %v3098
        %v3179 = vmul.f32 %v3178, %v3177
        %v3180 = vmul.f32 0.5, %v3179
        %v3181 = vsub.f32 1.5, %v3180
        %v3182 = vmul.f32 %v3177, %v3181
        %vm3183 = vweird.f32 %v3098
        %vm3184 = vweird.f32 %v3177
        %vm3185 = vmor %vm3183, %vm3184
        %v3186 = vsel %vm3185, %v3177, %v3182
        %v3187 = vrsqrt.pop %v3099
        %v3188 = vmul.f32 %v3187, %v3099
        %v3189 = vmul.f32 %v3188, %v3187
        %v3190 = vmul.f32 0.5, %v3189
        %v3191 = vsub.f32 1.5, %v3190
        %v3192 = vmul.f32 %v3187, %v3191
        %vm3193 = vweird.f32 %v3099
        %vm3194 = vweird.f32 %v3187
        %vm3195 = vmor %vm3193, %vm3194
        %v3196 = vsel %vm3195, %v3187, %v3192
        %v3197 = vrsqrt.pop %v3100
        %v3198 = vmul.f32 %v3197, %v3100
        %v3199 = vmul.f32 %v3198, %v3197
        %v3200 = vmul.f32 0.5, %v3199
        %v3201 = vsub.f32 1.5, %v3200
        %v3202 = vmul.f32 %v3197, %v3201
        %vm3203 = vweird.f32 %v3100
        %vm3204 = vweird.f32 %v3197
        %vm3205 = vmor %vm3203, %vm3204
        %v3206 = vsel %vm3205, %v3197, %v3202
        %v3207 = vrsqrt.pop %v3101
        %v3208 = vmul.f32 %v3207, %v3101
        %v3209 = vmul.f32 %v3208, %v3207
        %v3210 = vmul.f32 0.5, %v3209
        %v3211 = vsub.f32 1.5, %v3210
        %v3212 = vmul.f32 %v3207, %v3211
        %vm3213 = vweird.f32 %v3101
        %vm3214 = vweird.f32 %v3207
        %vm3215 = vmor %vm3213, %vm3214
        %v3216 = vsel %vm3215, %v3207, %v3212
        %v3217 = vrsqrt.pop %v3102
        %v3218 = vmul.f32 %v3217, %v3102
        %v3219 = vmul.f32 %v3218, %v3217
        %v3220 = vmul.f32 0.5, %v3219
        %v3221 = vsub.f32 1.5, %v3220
        %v3222 = vmul.f32 %v3217, %v3221
        %vm3223 = vweird.f32 %v3102
        %vm3224 = vweird.f32 %v3217
        %vm3225 = vmor %vm3223, %vm3224
        %v3226 = vsel %vm3225, %v3217, %v3222
        %v3227 = vrsqrt.pop %v3103
        %v3228 = vmul.f32 %v3227, %v3103
        %v3229 = vmul.f32 %v3228, %v3227
        %v3230 = vmul.f32 0.5, %v3229
        %v3231 = vsub.f32 1.5, %v3230
        %v3232 = vmul.f32 %v3227, %v3231
        %vm3233 = vweird.f32 %v3103
        %vm3234 = vweird.f32 %v3227
        %vm3235 = vmor %vm3233, %vm3234
        %v3236 = vsel %vm3235, %v3227, %v3232
        %v3237 = vrsqrt.pop %v3104
        %v3238 = vmul.f32 %v3237, %v3104
        %v3239 = vmul.f32 %v3238, %v3237
        %v3240 = vmul.f32 0.5, %v3239
        %v3241 = vsub.f32 1.5, %v3240
        %v3242 = vmul.f32 %v3237, %v3241
        %vm3243 = vweird.f32 %v3104
        %vm3244 = vweird.f32 %v3237
        %vm3245 = vmor %vm3243, %vm3244
        %v3246 = vsel %vm3245, %v3237, %v3242
        %v3247 = vrsqrt.pop %v3105
        %v3248 = vmul.f32 %v3247, %v3105
        %v3249 = vmul.f32 %v3248, %v3247
        %v3250 = vmul.f32 0.5, %v3249
        %v3251 = vsub.f32 1.5, %v3250
        %v3252 = vmul.f32 %v3247, %v3251
        %vm3253 = vweird.f32 %v3105
        %vm3254 = vweird.f32 %v3247
        %vm3255 = vmor %vm3253, %vm3254
        %v3256 = vsel %vm3255, %v3247, %v3252
        %v3257 = vrsqrt.pop %v3106
        %v3258 = vmul.f32 %v3257, %v3106
        %v3259 = vmul.f32 %v3258, %v3257
        %v3260 = vmul.f32 0.5, %v3259
        %v3261 = vsub.f32 1.5, %v3260
        %v3262 = vmul.f32 %v3257, %v3261
        %vm3263 = vweird.f32 %v3106
        %vm3264 = vweird.f32 %v3257
        %vm3265 = vmor %vm3263, %vm3264
        %v3266 = vsel %vm3265, %v3257, %v3262
        %v3267 = vmul.f32 %v3011, %v3116
        %v3268 = vmul.f32 %v3012, %v3126
        %v3269 = vmul.f32 %v3013, %v3136
        %v3270 = vmul.f32 %v3014, %v3146
        %v3271 = vmul.f32 %v3015, %v3156
        %v3272 = vmul.f32 %v3016, %v3166
        %v3273 = vmul.f32 %v3017, %v3176
        %v3274 = vmul.f32 %v3018, %v3186
        %v3275 = vmul.f32 %v3019, %v3196
        %v3276 = vmul.f32 %v3020, %v3206
        %v3277 = vmul.f32 %v3021, %v3216
        %v3278 = vmul.f32 %v3022, %v3226
        %v3279 = vmul.f32 %v3023, %v3236
        %v3280 = vmul.f32 %v3024, %v3246
        %v3281 = vmul.f32 %v3025, %v3256
        %v3282 = vmul.f32 %v3026, %v3266
        %v3283 = vld [vmem:[%s4 + $0xb0] sm:$0xff]
        %v3284 = vld [vmem:[%s4 + $0xb8] sm:$0xff]
        %v3285 = vld [vmem:[%s4 + $0xc0] sm:$0x1]
        %v3286 = vperm.slane %v3285, 0
        %v3288 = vsel %vm1198, %v3267, 0
        %v3291 = vsel %vm1198, %v3268, 0
        %v3294 = vsel %vm1198, %v3269, 0
        %v3297 = vsel %vm1198, %v3270, 0
        %v3300 = vsel %vm1198, %v3271, 0
        %v3303 = vsel %vm1198, %v3272, 0
        %v3306 = vsel %vm1198, %v3273, 0
        %v3309 = vsel %vm1198, %v3274, 0
        %v3312 = vsel %vm1198, %v3275, 0
        %v3315 = vsel %vm1198, %v3276, 0
        %v3318 = vsel %vm1198, %v3277, 0
        %v3321 = vsel %vm1198, %v3278, 0
        %v3324 = vsel %vm1198, %v3279, 0
        %v3327 = vsel %vm1198, %v3280, 0
        %v3330 = vsel %vm1198, %v3281, 0
        %v3333 = vsel %vm1198, %v3282, 0
        %3335 = vmatpush.msra.mxu0 0.0
        %3336 = vmatpush.msra.mxu0 0.0
        %3337 = vmatpush.msra.mxu0 0.0
        %3338 = vmatpush.msra.mxu0 0.0
        %3339 = vmatpush.msra.mxu0 0.0
        %3340 = vmatpush.msra.mxu0 0.0
        %3341 = vmatpush.msra.mxu0 0.0
        %3342 = vmatpush.msra.mxu0 0.0
        %3343 = vmatpush.msra.mxu0 0.0
        %3344 = vmatpush.msra.mxu0 0.0
        %3345 = vmatpush.msra.mxu0 0.0
        %3346 = vmatpush.msra.mxu0 0.0
        %3347 = vmatpush.msra.mxu0 0.0
        %3348 = vmatpush.msra.mxu0 0.0
        %3349 = vmatpush.msra.mxu0 %v3284
        %3350 = vmatpush.msra.mxu0 %v3283
        %3351 = vmatmul.f32.gmra.mxu0 %v3288
        %v3352 = vpop.f32.mrf.mxu0
        %v3353 = vadd.f32 %v3286, %v3352
        %3354 = vmatmul.f32.gmra.mxu0 %v3291
        %v3355 = vpop.f32.mrf.mxu0
        %v3356 = vadd.f32 %v3286, %v3355
        %3357 = vmatmul.f32.gmra.mxu0 %v3294
        %v3358 = vpop.f32.mrf.mxu0
        %v3359 = vadd.f32 %v3286, %v3358
        %3360 = vmatmul.f32.gmra.mxu0 %v3297
        %v3361 = vpop.f32.mrf.mxu0
        %v3362 = vadd.f32 %v3286, %v3361
        %3363 = vmatmul.f32.gmra.mxu0 %v3300
        %v3364 = vpop.f32.mrf.mxu0
        %v3365 = vadd.f32 %v3286, %v3364
        %3366 = vmatmul.f32.gmra.mxu0 %v3303
        %v3367 = vpop.f32.mrf.mxu0
        %v3368 = vadd.f32 %v3286, %v3367
        %3369 = vmatmul.f32.gmra.mxu0 %v3306
        %v3370 = vpop.f32.mrf.mxu0
        %v3371 = vadd.f32 %v3286, %v3370
        %3372 = vmatmul.f32.gmra.mxu0 %v3309
        %v3373 = vpop.f32.mrf.mxu0
        %v3374 = vadd.f32 %v3286, %v3373
        %3375 = vmatmul.f32.gmra.mxu0 %v3312
        %v3376 = vpop.f32.mrf.mxu0
        %v3377 = vadd.f32 %v3286, %v3376
        %3378 = vmatmul.f32.gmra.mxu0 %v3315
        %v3379 = vpop.f32.mrf.mxu0
        %v3380 = vadd.f32 %v3286, %v3379
        %3381 = vmatmul.f32.gmra.mxu0 %v3318
        %v3382 = vpop.f32.mrf.mxu0
        %v3383 = vadd.f32 %v3286, %v3382
        %3384 = vmatmul.f32.gmra.mxu0 %v3321
        %v3385 = vpop.f32.mrf.mxu0
        %v3386 = vadd.f32 %v3286, %v3385
        %3387 = vmatmul.f32.gmra.mxu0 %v3324
        %v3388 = vpop.f32.mrf.mxu0
        %v3389 = vadd.f32 %v3286, %v3388
        %3390 = vmatmul.f32.gmra.mxu0 %v3327
        %v3391 = vpop.f32.mrf.mxu0
        %v3392 = vadd.f32 %v3286, %v3391
        %3393 = vmatmul.f32.gmra.mxu0 %v3330
        %v3394 = vpop.f32.mrf.mxu0
        %v3395 = vadd.f32 %v3286, %v3394
        %3396 = vmatmul.f32.gmra.mxu0 %v3333
        %v3397 = vpop.f32.mrf.mxu0
        %v3398 = vadd.f32 %v3286, %v3397
        %3399 = vdwg.mxu0
        %v3400 = vmax.f32 %v3353, 0.0
        %v3401 = vmax.f32 %v3356, 0.0
        %v3402 = vmax.f32 %v3359, 0.0
        %v3403 = vmax.f32 %v3362, 0.0
        %v3404 = vmax.f32 %v3365, 0.0
        %v3405 = vmax.f32 %v3368, 0.0
        %v3406 = vmax.f32 %v3371, 0.0
        %v3407 = vmax.f32 %v3374, 0.0
        %v3408 = vmax.f32 %v3377, 0.0
        %v3409 = vmax.f32 %v3380, 0.0
        %v3410 = vmax.f32 %v3383, 0.0
        %v3411 = vmax.f32 %v3386, 0.0
        %v3412 = vmax.f32 %v3389, 0.0
        %v3413 = vmax.f32 %v3392, 0.0
        %v3414 = vmax.f32 %v3395, 0.0
        %v3415 = vmax.f32 %v3398, 0.0
        %v3416 = vld [vmem:[%s4 + $0xc8] sm:$0xff]
        %v3417 = vld [vmem:[%s4 + $0xd0] sm:$0xff]
        %v3418 = vld [vmem:[%s4 + $0xd8] sm:$0xff]
        %v3419 = vld [vmem:[%s4 + $0xe0] sm:$0xff]
        %v3420 = vld [vmem:[%s4 + $0xe8] sm:$0x1]
        %v3421 = vperm.slane %v3420, 0
        %vm3422 = vcmask 261120
        %v3424 = vsel %vm3422, %v3400, 0
        %v3427 = vsel %vm3422, %v3401, 0
        %v3430 = vsel %vm3422, %v3402, 0
        %v3433 = vsel %vm3422, %v3403, 0
        %v3436 = vsel %vm3422, %v3404, 0
        %v3439 = vsel %vm3422, %v3405, 0
        %v3442 = vsel %vm3422, %v3406, 0
        %v3445 = vsel %vm3422, %v3407, 0
        %v3448 = vsel %vm3422, %v3408, 0
        %v3451 = vsel %vm3422, %v3409, 0
        %v3454 = vsel %vm3422, %v3410, 0
        %v3457 = vsel %vm3422, %v3411, 0
        %v3460 = vsel %vm3422, %v3412, 0
        %v3463 = vsel %vm3422, %v3413, 0
        %v3466 = vsel %vm3422, %v3414, 0
        %v3469 = vsel %vm3422, %v3415, 0
        %3471 = vmatpush.msra.mxu0 0.0
        %3472 = vmatpush.msra.mxu0 0.0
        %3473 = vmatpush.msra.mxu0 0.0
        %3474 = vmatpush.msra.mxu0 0.0
        %3475 = vmatpush.msra.mxu0 0.0
        %3476 = vmatpush.msra.mxu0 0.0
        %3477 = vmatpush.msra.mxu0 0.0
        %3478 = vmatpush.msra.mxu0 0.0
        %3479 = vmatpush.msra.mxu0 0.0
        %3480 = vmatpush.msra.mxu0 0.0
        %3481 = vmatpush.msra.mxu0 0.0
        %3482 = vmatpush.msra.mxu0 0.0
        %3483 = vmatpush.msra.mxu0 %v3419
        %3484 = vmatpush.msra.mxu0 %v3418
        %3485 = vmatpush.msra.mxu0 %v3417
        %3486 = vmatpush.msra.mxu0 %v3416
        %3487 = vmatmul.f32.gmra.mxu0 %v3424
        %v3488 = vpop.f32.mrf.mxu0
        %v3489 = vadd.f32 %v3421, %v3488
        %3490 = vmatmul.f32.gmra.mxu0 %v3427
        %v3491 = vpop.f32.mrf.mxu0
        %v3492 = vadd.f32 %v3421, %v3491
        %3493 = vmatmul.f32.gmra.mxu0 %v3430
        %v3494 = vpop.f32.mrf.mxu0
        %v3495 = vadd.f32 %v3421, %v3494
        %3496 = vmatmul.f32.gmra.mxu0 %v3433
        %v3497 = vpop.f32.mrf.mxu0
        %v3498 = vadd.f32 %v3421, %v3497
        %3499 = vmatmul.f32.gmra.mxu0 %v3436
        %v3500 = vpop.f32.mrf.mxu0
        %v3501 = vadd.f32 %v3421, %v3500
        %3502 = vmatmul.f32.gmra.mxu0 %v3439
        %v3503 = vpop.f32.mrf.mxu0
        %v3504 = vadd.f32 %v3421, %v3503
        %3505 = vmatmul.f32.gmra.mxu0 %v3442
        %v3506 = vpop.f32.mrf.mxu0
        %v3507 = vadd.f32 %v3421, %v3506
        %3508 = vmatmul.f32.gmra.mxu0 %v3445
        %v3509 = vpop.f32.mrf.mxu0
        %v3510 = vadd.f32 %v3421, %v3509
        %3511 = vmatmul.f32.gmra.mxu0 %v3448
        %v3512 = vpop.f32.mrf.mxu0
        %v3513 = vadd.f32 %v3421, %v3512
        %3514 = vmatmul.f32.gmra.mxu0 %v3451
        %v3515 = vpop.f32.mrf.mxu0
        %v3516 = vadd.f32 %v3421, %v3515
        %3517 = vmatmul.f32.gmra.mxu0 %v3454
        %v3518 = vpop.f32.mrf.mxu0
        %v3519 = vadd.f32 %v3421, %v3518
        %3520 = vmatmul.f32.gmra.mxu0 %v3457
        %v3521 = vpop.f32.mrf.mxu0
        %v3522 = vadd.f32 %v3421, %v3521
        %3523 = vmatmul.f32.gmra.mxu0 %v3460
        %v3524 = vpop.f32.mrf.mxu0
        %v3525 = vadd.f32 %v3421, %v3524
        %3526 = vmatmul.f32.gmra.mxu0 %v3463
        %v3527 = vpop.f32.mrf.mxu0
        %v3528 = vadd.f32 %v3421, %v3527
        %3529 = vmatmul.f32.gmra.mxu0 %v3466
        %v3530 = vpop.f32.mrf.mxu0
        %v3531 = vadd.f32 %v3421, %v3530
        %3532 = vmatmul.f32.gmra.mxu0 %v3469
        %v3533 = vpop.f32.mrf.mxu0
        %v3534 = vadd.f32 %v3421, %v3533
        %3535 = vdwg.mxu0
        %3536 = vst [vmem:[%s262] sm:$0xff] %v3489
        %3537 = vst [vmem:[%s262 + $0x8] sm:$0xff] %v3492
        %3538 = vst [vmem:[%s262 + $0x10] sm:$0xff] %v3495
        %3539 = vst [vmem:[%s262 + $0x18] sm:$0xff] %v3498
        %3540 = vst [vmem:[%s262 + $0x20] sm:$0xff] %v3501
        %3541 = vst [vmem:[%s262 + $0x28] sm:$0xff] %v3504
        %3542 = vst [vmem:[%s262 + $0x30] sm:$0xff] %v3507
        %3543 = vst [vmem:[%s262 + $0x38] sm:$0xff] %v3510
        %3544 = vst [vmem:[%s262 + $0x40] sm:$0xff] %v3513
        %3545 = vst [vmem:[%s262 + $0x48] sm:$0xff] %v3516
        %3546 = vst [vmem:[%s262 + $0x50] sm:$0xff] %v3519
        %3547 = vst [vmem:[%s262 + $0x58] sm:$0xff] %v3522
        %3548 = vst [vmem:[%s262 + $0x60] sm:$0xff] %v3525
        %3549 = vst [vmem:[%s262 + $0x68] sm:$0xff] %v3528
        %3550 = vst [vmem:[%s262 + $0x70] sm:$0xff] %v3531
        %3551 = vst [vmem:[%s262 + $0x78] sm:$0xff] %v3534
        %s3552 = sand.u32 %s152, 1
        %s3553 = scalar_lea.sflag [#allocation3], %s3552
        %s3554 = sand.u32 %s152, 1
        %s3555 = smul.addr %s3554, 128
        %s3556 = scalar_lea.vmem [#allocation2], %s3555
        // Predicated region
        $region41: #{gnnstack_forward.1} parent=39 // pred_check
          %p3557 = pneg %p162
        $region42: #{gnnstack_forward.1} parent=39 // pred_check_branch
          %3559 = sbr.rel (%p3557) target = $region44
        $region43: #{gnnstack_forward.1} parent=39 // pred_region
          %3561 = vsyncadd %s3553, 0
          %s3562 = smul.addr %s19, 16
          %s3563 = smul.addr %s3562, 8
          %s3564 = scalar_lea.hbm %s5, %s3563
          %s3565 = sshll.u32 %s3556, 4
          %s3566 = int_to_ptr.vmem [resolvable:$true] %s3565
          %s3567 = sshll.u32 %s3564, 4
          %s3568 = int_to_ptr.hbm [resolvable:$true] %s3567
          %3573 = dma.vmem_to_hbm [thread:$0]  %s3566, 2048, %s3568, %s3553, 128, 128, 8
        $region44: #{gnnstack_forward.1} parent=39 // pred_fallthru
          _
      $region40: #{gnnstack_forward.1} parent=5 // pred_fallthru
        _
      %p3574 = scmp.le.s32.totalorder 2, %s14
      // Predicated region
      $region45: #{gnnstack_forward.1} parent=5 // pred_check
        %p3575 = pneg %p3574
      $region46: #{gnnstack_forward.1} parent=5 // pred_check_branch
        %3577 = sbr.rel (%p3575) target = $region48
      $region47: #{gnnstack_forward.1} parent=5 // pred_region
        %s3578 = ssub.s32 %s14, 2
        // Predicated region
        $region49: #{gnnstack_forward.1} parent=47 // pred_check
          %p3579 = pneg %p168
        $region50: #{gnnstack_forward.1} parent=47 // pred_check_branch
          %3581 = sbr.rel (%p3579) target = $region52
        $region51: #{gnnstack_forward.1} parent=47 // pred_region
          %s3582 = sand.u32 %s153, 1
          %s3583 = scalar_lea.sflag [#allocation3], %s3582
          %s3584 = sand.u32 %s153, 1
          %s3585 = smul.addr %s3584, 128
          %s3586 = scalar_lea.vmem [#allocation2], %s3585
          %3588 = dma.done %s3583, 2048
        $region52: #{gnnstack_forward.1} parent=47 // pred_fallthru
          _
      $region48: #{gnnstack_forward.1} parent=5 // pred_fallthru
        _
    $region6: #{gnnstack_forward.1} parent=1 // loop_footer
      %s18 = sadd.s32 1, %s14
    $region7: #{gnnstack_forward.1} parent=1 // loop_footer_branch
      %13 = sbr.rel target = $region3
    $region8: #{gnnstack_forward.1} parent=1 // loop_exit
      _
    %3589 = vsyncpa [#allocation3], 1
    %s3590 = scalar_lea.sflag [#allocation3], 1
    %3591 = vsyncpa %s3590, 1

</llo_original>
